<compile_context>
chip_gen: v7x
topology: tpu7x:2x2x1
jax: 0.10.0
libtpu: 0.0.40
codegen_flags: <defaults>
</compile_context>

<pallas_src>
import functools

import jax
import jax.numpy as jnp
from jax.experimental import pallas as pl
from jax.experimental.pallas import tpu as pltpu

LEAKY_SLOPE = 0.2
BN_EPS = 1e-5
LANE = 128
VMEM_LIMIT_BYTES = 32 * 1024 * 1024  # safe scoped-VMEM budget on v5e/v6e/v7x

# (stride, use_batchnorm, use_leakyrelu) for the 5 conv layers of the module.
LAYER_CFG = [
    (2, False, True),
    (2, True, True),
    (2, True, True),
    (1, True, True),
    (1, False, False),
]


def _round_up(x, m):
    return (x + m - 1) // m * m


# ----------------------------- Pallas kernels ------------------------------


def _conv_bias_act_kernel(p_ref, w_ref, b_ref, y_ref, *, use_act):
    """One M-tile: (TM,Kp)bf16 @ (Kp,Cp)bf16 -> f32, + bias (+ LeakyReLU)."""
    y = jnp.dot(p_ref[...], w_ref[...], preferred_element_type=jnp.float32)
    y = y + b_ref[...]
    if use_act:
        y = jnp.where(y >= 0, y, LEAKY_SLOPE * y)
    y_ref[...] = y.astype(y_ref.dtype)


def _conv_stats_kernel(p_ref, w_ref, y_ref, s_ref, q_ref):
    """Phase 1 of a BatchNorm layer: matmul (bias elided — it cancels in BN),
    plus per-channel sum and sum-of-squares accumulated across the
    (arbitrary) M-tile grid axis. Zero-padded rows/cols contribute exactly 0,
    so no masking is needed."""
    i = pl.program_id(0)
    y = jnp.dot(p_ref[...], w_ref[...], preferred_element_type=jnp.float32)
    y_ref[...] = y

    @pl.when(i == 0)
    def _():
        s_ref[...] = jnp.zeros_like(s_ref)
        q_ref[...] = jnp.zeros_like(q_ref)

    s_ref[...] += jnp.sum(y, axis=0, keepdims=True)
    q_ref[...] += jnp.sum(y * y, axis=0, keepdims=True)


def _affine_act_kernel(y_ref, scale_ref, shift_ref, o_ref, *, use_act):
    """Phase 2 of a BatchNorm layer: y*scale + shift (+ LeakyReLU)."""
    y = y_ref[...] * scale_ref[...] + shift_ref[...]
    if use_act:
        y = jnp.where(y >= 0, y, LEAKY_SLOPE * y)
    o_ref[...] = y.astype(o_ref.dtype)


# ----------------------------- kernel wrappers ------------------------------


def conv_bias_act(patches, w2, bias, use_act, tm, out_dtype):
    m_pad, kp = patches.shape
    cp = w2.shape[1]
    kernel = functools.partial(_conv_bias_act_kernel, use_act=use_act)
    return pl.pallas_call(
        kernel,
        grid=(m_pad // tm,),
        in_specs=[
            pl.BlockSpec((tm, kp), lambda i: (i, 0)),
            pl.BlockSpec((kp, cp), lambda i: (0, 0)),   # weights stay resident
            pl.BlockSpec((1, cp), lambda i: (0, 0)),
        ],
        out_specs=pl.BlockSpec((tm, cp), lambda i: (i, 0)),
        out_shape=jax.ShapeDtypeStruct((m_pad, cp), out_dtype),
        compiler_params=pltpu.CompilerParams(
            dimension_semantics=("parallel",),
            vmem_limit_bytes=VMEM_LIMIT_BYTES),
    )(patches, w2, bias)


def conv_stats(patches, w2, tm):
    m_pad, kp = patches.shape
    cp = w2.shape[1]
    return pl.pallas_call(
        _conv_stats_kernel,
        grid=(m_pad // tm,),
        in_specs=[
            pl.BlockSpec((tm, kp), lambda i: (i, 0)),
            pl.BlockSpec((kp, cp), lambda i: (0, 0)),
        ],
        out_specs=[
            pl.BlockSpec((tm, cp), lambda i: (i, 0)),
            pl.BlockSpec((1, cp), lambda i: (0, 0)),    # accumulator outputs
            pl.BlockSpec((1, cp), lambda i: (0, 0)),
        ],
        out_shape=(
            jax.ShapeDtypeStruct((m_pad, cp), jnp.float32),
            jax.ShapeDtypeStruct((1, cp), jnp.float32),
            jax.ShapeDtypeStruct((1, cp), jnp.float32),
        ),
        compiler_params=pltpu.CompilerParams(
            dimension_semantics=("arbitrary",),          # stats accumulate over M
            vmem_limit_bytes=VMEM_LIMIT_BYTES),
    )(patches, w2)


def affine_act(y, scale, shift, use_act, tm):
    m_pad, cp = y.shape
    kernel = functools.partial(_affine_act_kernel, use_act=use_act)
    return pl.pallas_call(
        kernel,
        grid=(m_pad // tm,),
        in_specs=[
            pl.BlockSpec((tm, cp), lambda i: (i, 0)),
            pl.BlockSpec((1, cp), lambda i: (0, 0)),
            pl.BlockSpec((1, cp), lambda i: (0, 0)),
        ],
        out_specs=pl.BlockSpec((tm, cp), lambda i: (i, 0)),
        out_shape=jax.ShapeDtypeStruct((m_pad, cp), jnp.bfloat16),
        compiler_params=pltpu.CompilerParams(
            dimension_semantics=("parallel",),
            vmem_limit_bytes=VMEM_LIMIT_BYTES),
    )(y, scale, shift)


# ------------------------------- JAX glue -----------------------------------


def im2col(x_nhwc, k, stride, pad):
    """x: (N,H,W,C) -> patches (N*OH*OW, k*k*C), ordered (kh, kw, cin)."""
    N, H, W, C = x_nhwc.shape
    xp = jnp.pad(x_nhwc, ((0, 0), (pad, pad), (pad, pad), (0, 0)))
    OH = (H + 2 * pad - k) // stride + 1
    OW = (W + 2 * pad - k) // stride + 1
    cols = []
    for di in range(k):
        for dj in range(k):
            cols.append(xp[:, di:di + stride * (OH - 1) + 1:stride,
                           dj:dj + stride * (OW - 1) + 1:stride, :])
    p = jnp.stack(cols, axis=3)              # (N, OH, OW, k*k, C)
    return p.reshape(N * OH * OW, k * k * C), OH, OW


def patchgan_forward(x_nchw, params):
    x = jnp.transpose(x_nchw, (0, 2, 3, 1)).astype(jnp.float32)  # NHWC
    N = x.shape[0]
    n_layers = len(params)
    for li, ((w, b, gamma, beta), (stride, use_bn, use_act)) in enumerate(
            zip(params, LAYER_CFG)):
        is_last = li == n_layers - 1
        cout = w.shape[0]
        k = w.shape[-1]
        # bf16 matmul operands (f32 accumulation inside the kernel).
        patches, OH, OW = im2col(x.astype(jnp.bfloat16), k, stride, pad=1)
        M, K = patches.shape
        Kp = _round_up(K, LANE)
        Cp = _round_up(cout, LANE)
        TM = min(512, _round_up(M, 8))
        M_pad = _round_up(M, TM)
        patches = jnp.pad(patches, ((0, M_pad - M), (0, Kp - K)))
        # PyTorch weight (Cout, Cin, KH, KW) -> (KH*KW*Cin, Cout), padded, bf16.
        w2 = jnp.transpose(w, (2, 3, 1, 0)).reshape(K, cout)
        w2 = jnp.pad(w2, ((0, Kp - K), (0, Cp - cout))).astype(jnp.bfloat16)

        if use_bn:
            # Conv bias cancels exactly inside BatchNorm -> elide it.
            y, ssum, ssq = conv_stats(patches, w2, TM)
            mean = ssum / M
            var = jnp.maximum(ssq / M - mean * mean, 0.0)   # clamp: no rsqrt(<0)
            g_p = jnp.pad(gamma.reshape(1, -1), ((0, 0), (0, Cp - cout)))
            bt_p = jnp.pad(beta.reshape(1, -1), ((0, 0), (0, Cp - cout)))
            scale = g_p * jax.lax.rsqrt(var + BN_EPS)
            shift = bt_p - mean * scale
            out = affine_act(y, scale, shift, use_act, TM)   # bf16 out
        else:
            b_p = jnp.pad(b.reshape(1, -1), ((0, 0), (0, Cp - cout)))
            out_dtype = jnp.float32 if is_last else jnp.bfloat16
            out = conv_bias_act(patches, w2, b_p, use_act, TM, out_dtype)

        x = out[:M, :cout].reshape(N, OH, OW, cout)
    return jnp.transpose(x, (0, 3, 1, 2)).astype(jnp.float32)  # back to NCHW


def init_params(key, input_channels=3, ndf=8):
    chans = [(input_channels, ndf), (ndf, ndf * 2), (ndf * 2, ndf * 4),
             (ndf * 4, ndf * 8), (ndf * 8, 1)]
    params = []
    for (ci, co) in chans:
        key, k1, k2 = jax.random.split(key, 3)
        w = jax.random.normal(k1, (co, ci, 4, 4), jnp.float32) * 0.05
        b = jax.random.normal(k2, (co,), jnp.float32) * 0.05
        gamma = jnp.ones((co,), jnp.float32)   # BatchNorm affine defaults
        beta = jnp.zeros((co,), jnp.float32)
        params.append((w, b, gamma, beta))
    return params


def reference_forward(x, params):
    """Pure-JAX reference (XLA conv, bf16 operands / f32 accumulation to match
    the kernel's matmul precision; BN / LeakyReLU in f32)."""
    for (w, b, g, bt), (s, use_bn, use_act) in zip(params, LAYER_CFG):
        x = jax.lax.conv_general_dilated(
            x.astype(jnp.bfloat16), w.astype(jnp.bfloat16), (s, s),
            [(1, 1), (1, 1)],
            dimension_numbers=("NCHW", "OIHW", "NCHW"),
            preferred_element_type=jnp.float32)
        x = x + b[None, :, None, None]
        if use_bn:
            mean = jnp.mean(x, axis=(0, 2, 3), keepdims=True)
            var = jnp.var(x, axis=(0, 2, 3), keepdims=True)
            x = (x - mean) * jax.lax.rsqrt(var + BN_EPS)
            x = x * g[None, :, None, None] + bt[None, :, None, None]
        if use_act:
            x = jnp.where(x >= 0, x, LEAKY_SLOPE * x)
    return x


if __name__ == "__main__":
    key = jax.random.PRNGKey(0)
    kx, kp = jax.random.split(key)
    # Small shapes: batch=2, input_channels=3, 32x32 spatial, ndf=8.
    x = jax.random.normal(kx, (2, 3, 32, 32), jnp.float32)
    params = init_params(kp, input_channels=3, ndf=8)

    fwd = jax.jit(lambda inp: patchgan_forward(inp, params))
    out = jax.block_until_ready(fwd(x))

    # Expected PatchGAN output spatial map: 32 -> 16 -> 8 -> 4 -> 3 -> 2
    assert out.shape == (2, 1, 2, 2), out.shape

    ref = reference_forward(x, params)
    assert jnp.allclose(out, ref, atol=2e-2, rtol=2e-2), \
        float(jnp.max(jnp.abs(out - ref)))

    print("KERNEL_OK")
</pallas_src>

<mosaic_0001>
module attributes {stable_mosaic.version = 11 : i64} {
  func.func @_conv_bias_act_kernel(%arg0: i32, %arg1: memref<512x128xbf16, #tpu.memory_space<vmem>>, %arg2: memref<128x128xbf16, #tpu.memory_space<vmem>>, %arg3: memref<1x128xf32, #tpu.memory_space<vmem>>, %arg4: memref<512x128xbf16, #tpu.memory_space<vmem>>) attributes {dimension_semantics = [#tpu.dimension_semantics<parallel>], iteration_bounds = array<i64: 1>, scalar_prefetch = 0 : i64, scratch_operands = 0 : i64, tpu.core_type = #tpu.core_type<tc>, window_params = [{transform_indices = @transform_0, window_bounds = array<i64: 512, 128>}, {pipeline_mode = #tpu.pipeline_mode<synchronous>, transform_indices = @transform_1, window_bounds = array<i64: 128, 128>}, {pipeline_mode = #tpu.pipeline_mode<synchronous>, transform_indices = @transform_2, window_bounds = array<i64: 1, 128>}, {transform_indices = @transform_3, window_bounds = array<i64: 512, 128>}]} {
    %c0 = arith.constant 0 : index
    %c0_0 = arith.constant 0 : index
    %0 = vector.load %arg1[%c0, %c0_0] : memref<512x128xbf16, #tpu.memory_space<vmem>>, vector<512x128xbf16>
    %c0_1 = arith.constant 0 : index
    %c0_2 = arith.constant 0 : index
    %1 = vector.load %arg2[%c0_1, %c0_2] : memref<128x128xbf16, #tpu.memory_space<vmem>>, vector<128x128xbf16>
    %cst = arith.constant dense<0.000000e+00> : vector<512x128xf32>
    %2 = tpu.matmul %0, %1, %cst {dimension_numbers = #tpu.dot_dimension_numbers<[1], [0], [0], [1], [0, 0, 1, 1], [], []>} : vector<512x128xbf16>, vector<128x128xbf16>, vector<512x128xf32> -> vector<512x128xf32>
    %c0_3 = arith.constant 0 : index
    %c0_4 = arith.constant 0 : index
    %3 = vector.load %arg3[%c0_3, %c0_4] : memref<1x128xf32, #tpu.memory_space<vmem>>, vector<1x128xf32>
    %4 = vector.broadcast %3 : vector<1x128xf32> to vector<512x128xf32>
    %5 = arith.addf %2, %4 : vector<512x128xf32>
    %cst_5 = arith.constant 0.000000e+00 : f32
    %6 = vector.broadcast %cst_5 : f32 to vector<512x128xf32>
    %7 = arith.cmpf oge, %5, %6 : vector<512x128xf32>
    %cst_6 = arith.constant 2.000000e-01 : f32
    %8 = vector.broadcast %cst_6 : f32 to vector<512x128xf32>
    %9 = arith.mulf %8, %5 : vector<512x128xf32>
    %10 = arith.select %7, %5, %9 : vector<512x128xi1>, vector<512x128xf32>
    %11 = arith.truncf %10 : vector<512x128xf32> to vector<512x128xbf16>
    %c0_7 = arith.constant 0 : index
    %c0_8 = arith.constant 0 : index
    %12 = vector.load %arg4[%c0_7, %c0_8] : memref<512x128xbf16, #tpu.memory_space<vmem>>, vector<512x128xbf16>
    tpu.vector_store %arg4[%c0_7, %c0_8], %11 {strides = array<i32>} : memref<512x128xbf16, #tpu.memory_space<vmem>>, vector<512x128xbf16>,
    return
  }
  func.func @transform_0(%arg0: i32) -> (i32, i32) {
    %c0_i32 = arith.constant 0 : i32
    %c0_i32_0 = arith.constant 0 : i32
    return %arg0, %c0_i32 : i32, i32
  }
  func.func @transform_1(%arg0: i32) -> (i32, i32) {
    %c0_i32 = arith.constant 0 : i32
    %c0_i32_0 = arith.constant 0 : i32
    %c0_i32_1 = arith.constant 0 : i32
    return %c0_i32, %c0_i32_0 : i32, i32
  }
  func.func @transform_2(%arg0: i32) -> (i32, i32) {
    %c0_i32 = arith.constant 0 : i32
    %c0_i32_0 = arith.constant 0 : i32
    %c0_i32_1 = arith.constant 0 : i32
    return %c0_i32, %c0_i32_0 : i32, i32
  }
  func.func @transform_3(%arg0: i32) -> (i32, i32) {
    %c0_i32 = arith.constant 0 : i32
    %c0_i32_0 = arith.constant 0 : i32
    return %arg0, %c0_i32 : i32, i32
  }
}

module attributes {stable_mosaic.version = 11 : i64} {
  func.func @_conv_stats_kernel(%arg0: i32, %arg1: memref<128x128xbf16, #tpu.memory_space<vmem>>, %arg2: memref<128x128xbf16, #tpu.memory_space<vmem>>, %arg3: memref<128x128xf32, #tpu.memory_space<vmem>>, %arg4: memref<1x128xf32, #tpu.memory_space<vmem>>, %arg5: memref<1x128xf32, #tpu.memory_space<vmem>>) attributes {dimension_semantics = [#tpu.dimension_semantics<arbitrary>], iteration_bounds = array<i64: 1>, scalar_prefetch = 0 : i64, scratch_operands = 0 : i64, tpu.core_type = #tpu.core_type<tc>, window_params = [{transform_indices = @transform_0, window_bounds = array<i64: 128, 128>}, {pipeline_mode = #tpu.pipeline_mode<synchronous>, transform_indices = @transform_1, window_bounds = array<i64: 128, 128>}, {transform_indices = @transform_2, window_bounds = array<i64: 128, 128>}, {pipeline_mode = #tpu.pipeline_mode<synchronous>, transform_indices = @transform_3, window_bounds = array<i64: 1, 128>}, {pipeline_mode = #tpu.pipeline_mode<synchronous>, transform_indices = @transform_4, window_bounds = array<i64: 1, 128>}]} {
    %c0 = arith.constant 0 : index
    %c0_0 = arith.constant 0 : index
    %0 = vector.load %arg1[%c0, %c0_0] : memref<128x128xbf16, #tpu.memory_space<vmem>>, vector<128x128xbf16>
    %c0_1 = arith.constant 0 : index
    %c0_2 = arith.constant 0 : index
    %1 = vector.load %arg2[%c0_1, %c0_2] : memref<128x128xbf16, #tpu.memory_space<vmem>>, vector<128x128xbf16>
    %cst = arith.constant dense<0.000000e+00> : vector<128x128xf32>
    %2 = tpu.matmul %0, %1, %cst {dimension_numbers = #tpu.dot_dimension_numbers<[1], [0], [0], [1], [0, 0, 1, 1], [], []>} : vector<128x128xbf16>, vector<128x128xbf16>, vector<128x128xf32> -> vector<128x128xf32>
    %c0_3 = arith.constant 0 : index
    %c0_4 = arith.constant 0 : index
    %3 = vector.load %arg3[%c0_3, %c0_4] : memref<128x128xf32, #tpu.memory_space<vmem>>, vector<128x128xf32>
    tpu.vector_store %arg3[%c0_3, %c0_4], %2 {strides = array<i32>} : memref<128x128xf32, #tpu.memory_space<vmem>>, vector<128x128xf32>,
    %c0_i32 = arith.constant 0 : i32
    %4 = arith.cmpi eq, %arg0, %c0_i32 : i32
    %5 = arith.extui %4 : i1 to i32
    %c0_i32_5 = arith.constant 0 : i32
    %6 = arith.cmpi ne, %5, %c0_i32_5 : i32
    scf.if %6 {
      %cst_16 = arith.constant 0.000000e+00 : f32
      %18 = vector.broadcast %cst_16 : f32 to vector<1x128xf32>
      %c0_17 = arith.constant 0 : index
      %c0_18 = arith.constant 0 : index
      %19 = vector.load %arg4[%c0_17, %c0_18] : memref<1x128xf32, #tpu.memory_space<vmem>>, vector<1x128xf32>
      tpu.vector_store %arg4[%c0_17, %c0_18], %18 {strides = array<i32>} : memref<1x128xf32, #tpu.memory_space<vmem>>, vector<1x128xf32>,
      %cst_19 = arith.constant 0.000000e+00 : f32
      %20 = vector.broadcast %cst_19 : f32 to vector<1x128xf32>
      %c0_20 = arith.constant 0 : index
      %c0_21 = arith.constant 0 : index
      %21 = vector.load %arg5[%c0_20, %c0_21] : memref<1x128xf32, #tpu.memory_space<vmem>>, vector<1x128xf32>
      tpu.vector_store %arg5[%c0_20, %c0_21], %20 {strides = array<i32>} : memref<1x128xf32, #tpu.memory_space<vmem>>, vector<1x128xf32>,
    } else {
    }
    %c0_6 = arith.constant 0 : index
    %c0_7 = arith.constant 0 : index
    %7 = vector.load %arg4[%c0_6, %c0_7] : memref<1x128xf32, #tpu.memory_space<vmem>>, vector<1x128xf32>
    %cst_8 = arith.constant dense<0.000000e+00> : vector<128xf32>
    %8 = vector.multi_reduction <add>, %2, %cst_8 [0] : vector<128x128xf32> to vector<128xf32>
    %9 = vector.shape_cast %8 : vector<128xf32> to vector<1x128xf32>
    %10 = arith.addf %7, %9 : vector<1x128xf32>
    %c0_9 = arith.constant 0 : index
    %c0_10 = arith.constant 0 : index
    %11 = vector.load %arg4[%c0_9, %c0_10] : memref<1x128xf32, #tpu.memory_space<vmem>>, vector<1x128xf32>
    tpu.vector_store %arg4[%c0_9, %c0_10], %10 {strides = array<i32>} : memref<1x128xf32, #tpu.memory_space<vmem>>, vector<1x128xf32>,
    %c0_11 = arith.constant 0 : index
    %c0_12 = arith.constant 0 : index
    %12 = vector.load %arg5[%c0_11, %c0_12] : memref<1x128xf32, #tpu.memory_space<vmem>>, vector<1x128xf32>
    %13 = arith.mulf %2, %2 : vector<128x128xf32>
    %cst_13 = arith.constant dense<0.000000e+00> : vector<128xf32>
    %14 = vector.multi_reduction <add>, %13, %cst_13 [0] : vector<128x128xf32> to vector<128xf32>
    %15 = vector.shape_cast %14 : vector<128xf32> to vector<1x128xf32>
    %16 = arith.addf %12, %15 : vector<1x128xf32>
    %c0_14 = arith.constant 0 : index
    %c0_15 = arith.constant 0 : index
    %17 = vector.load %arg5[%c0_14, %c0_15] : memref<1x128xf32, #tpu.memory_space<vmem>>, vector<1x128xf32>
    tpu.vector_store %arg5[%c0_14, %c0_15], %16 {strides = array<i32>} : memref<1x128xf32, #tpu.memory_space<vmem>>, vector<1x128xf32>,
    return
  }
  func.func @transform_0(%arg0: i32) -> (i32, i32) {
    %c0_i32 = arith.constant 0 : i32
    %c0_i32_0 = arith.constant 0 : i32
    return %arg0, %c0_i32 : i32, i32
  }
  func.func @transform_1(%arg0: i32) -> (i32, i32) {
    %c0_i32 = arith.constant 0 : i32
    %c0_i32_0 = arith.constant 0 : i32
    %c0_i32_1 = arith.constant 0 : i32
    return %c0_i32, %c0_i32_0 : i32, i32
  }
  func.func @transform_2(%arg0: i32) -> (i32, i32) {
    %c0_i32 = arith.constant 0 : i32
    %c0_i32_0 = arith.constant 0 : i32
    return %arg0, %c0_i32 : i32, i32
  }
  func.func @transform_3(%arg0: i32) -> (i32, i32) {
    %c0_i32 = arith.constant 0 : i32
    %c0_i32_0 = arith.constant 0 : i32
    %c0_i32_1 = arith.constant 0 : i32
    return %c0_i32, %c0_i32_0 : i32, i32
  }
  func.func @transform_4(%arg0: i32) -> (i32, i32) {
    %c0_i32 = arith.constant 0 : i32
    %c0_i32_0 = arith.constant 0 : i32
    %c0_i32_1 = arith.constant 0 : i32
    return %c0_i32, %c0_i32_0 : i32, i32
  }
}

module attributes {stable_mosaic.version = 11 : i64} {
  func.func @_affine_act_kernel(%arg0: i32, %arg1: memref<128x128xf32, #tpu.memory_space<vmem>>, %arg2: memref<1x128xf32, #tpu.memory_space<vmem>>, %arg3: memref<1x128xf32, #tpu.memory_space<vmem>>, %arg4: memref<128x128xbf16, #tpu.memory_space<vmem>>) attributes {dimension_semantics = [#tpu.dimension_semantics<parallel>], iteration_bounds = array<i64: 1>, scalar_prefetch = 0 : i64, scratch_operands = 0 : i64, tpu.core_type = #tpu.core_type<tc>, window_params = [{transform_indices = @transform_0, window_bounds = array<i64: 128, 128>}, {pipeline_mode = #tpu.pipeline_mode<synchronous>, transform_indices = @transform_1, window_bounds = array<i64: 1, 128>}, {pipeline_mode = #tpu.pipeline_mode<synchronous>, transform_indices = @transform_2, window_bounds = array<i64: 1, 128>}, {transform_indices = @transform_3, window_bounds = array<i64: 128, 128>}]} {
    %c0 = arith.constant 0 : index
    %c0_0 = arith.constant 0 : index
    %0 = vector.load %arg1[%c0, %c0_0] : memref<128x128xf32, #tpu.memory_space<vmem>>, vector<128x128xf32>
    %c0_1 = arith.constant 0 : index
    %c0_2 = arith.constant 0 : index
    %1 = vector.load %arg2[%c0_1, %c0_2] : memref<1x128xf32, #tpu.memory_space<vmem>>, vector<1x128xf32>
    %2 = vector.broadcast %1 : vector<1x128xf32> to vector<128x128xf32>
    %3 = arith.mulf %0, %2 : vector<128x128xf32>
    %c0_3 = arith.constant 0 : index
    %c0_4 = arith.constant 0 : index
    %4 = vector.load %arg3[%c0_3, %c0_4] : memref<1x128xf32, #tpu.memory_space<vmem>>, vector<1x128xf32>
    %5 = vector.broadcast %4 : vector<1x128xf32> to vector<128x128xf32>
    %6 = arith.addf %3, %5 : vector<128x128xf32>
    %cst = arith.constant 0.000000e+00 : f32
    %7 = vector.broadcast %cst : f32 to vector<128x128xf32>
    %8 = arith.cmpf oge, %6, %7 : vector<128x128xf32>
    %cst_5 = arith.constant 2.000000e-01 : f32
    %9 = vector.broadcast %cst_5 : f32 to vector<128x128xf32>
    %10 = arith.mulf %9, %6 : vector<128x128xf32>
    %11 = arith.select %8, %6, %10 : vector<128x128xi1>, vector<128x128xf32>
    %12 = arith.truncf %11 : vector<128x128xf32> to vector<128x128xbf16>
    %c0_6 = arith.constant 0 : index
    %c0_7 = arith.constant 0 : index
    %13 = vector.load %arg4[%c0_6, %c0_7] : memref<128x128xbf16, #tpu.memory_space<vmem>>, vector<128x128xbf16>
    tpu.vector_store %arg4[%c0_6, %c0_7], %12 {strides = array<i32>} : memref<128x128xbf16, #tpu.memory_space<vmem>>, vector<128x128xbf16>,
    return
  }
  func.func @transform_0(%arg0: i32) -> (i32, i32) {
    %c0_i32 = arith.constant 0 : i32
    %c0_i32_0 = arith.constant 0 : i32
    return %arg0, %c0_i32 : i32, i32
  }
  func.func @transform_1(%arg0: i32) -> (i32, i32) {
    %c0_i32 = arith.constant 0 : i32
    %c0_i32_0 = arith.constant 0 : i32
    %c0_i32_1 = arith.constant 0 : i32
    return %c0_i32, %c0_i32_0 : i32, i32
  }
  func.func @transform_2(%arg0: i32) -> (i32, i32) {
    %c0_i32 = arith.constant 0 : i32
    %c0_i32_0 = arith.constant 0 : i32
    %c0_i32_1 = arith.constant 0 : i32
    return %c0_i32, %c0_i32_0 : i32, i32
  }
  func.func @transform_3(%arg0: i32) -> (i32, i32) {
    %c0_i32 = arith.constant 0 : i32
    %c0_i32_0 = arith.constant 0 : i32
    return %arg0, %c0_i32 : i32, i32
  }
}

module attributes {stable_mosaic.version = 11 : i64} {
  func.func @_conv_stats_kernel(%arg0: i32, %arg1: memref<32x256xbf16, #tpu.memory_space<vmem>>, %arg2: memref<256x128xbf16, #tpu.memory_space<vmem>>, %arg3: memref<32x128xf32, #tpu.memory_space<vmem>>, %arg4: memref<1x128xf32, #tpu.memory_space<vmem>>, %arg5: memref<1x128xf32, #tpu.memory_space<vmem>>) attributes {dimension_semantics = [#tpu.dimension_semantics<arbitrary>], iteration_bounds = array<i64: 1>, scalar_prefetch = 0 : i64, scratch_operands = 0 : i64, tpu.core_type = #tpu.core_type<tc>, window_params = [{transform_indices = @transform_0, window_bounds = array<i64: 32, 256>}, {pipeline_mode = #tpu.pipeline_mode<synchronous>, transform_indices = @transform_1, window_bounds = array<i64: 256, 128>}, {transform_indices = @transform_2, window_bounds = array<i64: 32, 128>}, {pipeline_mode = #tpu.pipeline_mode<synchronous>, transform_indices = @transform_3, window_bounds = array<i64: 1, 128>}, {pipeline_mode = #tpu.pipeline_mode<synchronous>, transform_indices = @transform_4, window_bounds = array<i64: 1, 128>}]} {
    %c0 = arith.constant 0 : index
    %c0_0 = arith.constant 0 : index
    %0 = vector.load %arg1[%c0, %c0_0] : memref<32x256xbf16, #tpu.memory_space<vmem>>, vector<32x256xbf16>
    %c0_1 = arith.constant 0 : index
    %c0_2 = arith.constant 0 : index
    %1 = vector.load %arg2[%c0_1, %c0_2] : memref<256x128xbf16, #tpu.memory_space<vmem>>, vector<256x128xbf16>
    %cst = arith.constant dense<0.000000e+00> : vector<32x128xf32>
    %2 = tpu.matmul %0, %1, %cst {dimension_numbers = #tpu.dot_dimension_numbers<[1], [0], [0], [1], [0, 0, 1, 1], [], []>} : vector<32x256xbf16>, vector<256x128xbf16>, vector<32x128xf32> -> vector<32x128xf32>
    %c0_3 = arith.constant 0 : index
    %c0_4 = arith.constant 0 : index
    %3 = vector.load %arg3[%c0_3, %c0_4] : memref<32x128xf32, #tpu.memory_space<vmem>>, vector<32x128xf32>
    tpu.vector_store %arg3[%c0_3, %c0_4], %2 {strides = array<i32>} : memref<32x128xf32, #tpu.memory_space<vmem>>, vector<32x128xf32>,
    %c0_i32 = arith.constant 0 : i32
    %4 = arith.cmpi eq, %arg0, %c0_i32 : i32
    %5 = arith.extui %4 : i1 to i32
    %c0_i32_5 = arith.constant 0 : i32
    %6 = arith.cmpi ne, %5, %c0_i32_5 : i32
    scf.if %6 {
      %cst_16 = arith.constant 0.000000e+00 : f32
      %18 = vector.broadcast %cst_16 : f32 to vector<1x128xf32>
      %c0_17 = arith.constant 0 : index
      %c0_18 = arith.constant 0 : index
      %19 = vector.load %arg4[%c0_17, %c0_18] : memref<1x128xf32, #tpu.memory_space<vmem>>, vector<1x128xf32>
      tpu.vector_store %arg4[%c0_17, %c0_18], %18 {strides = array<i32>} : memref<1x128xf32, #tpu.memory_space<vmem>>, vector<1x128xf32>,
      %cst_19 = arith.constant 0.000000e+00 : f32
      %20 = vector.broadcast %cst_19 : f32 to vector<1x128xf32>
      %c0_20 = arith.constant 0 : index
      %c0_21 = arith.constant 0 : index
      %21 = vector.load %arg5[%c0_20, %c0_21] : memref<1x128xf32, #tpu.memory_space<vmem>>, vector<1x128xf32>
      tpu.vector_store %arg5[%c0_20, %c0_21], %20 {strides = array<i32>} : memref<1x128xf32, #tpu.memory_space<vmem>>, vector<1x128xf32>,
    } else {
    }
    %c0_6 = arith.constant 0 : index
    %c0_7 = arith.constant 0 : index
    %7 = vector.load %arg4[%c0_6, %c0_7] : memref<1x128xf32, #tpu.memory_space<vmem>>, vector<1x128xf32>
    %cst_8 = arith.constant dense<0.000000e+00> : vector<128xf32>
    %8 = vector.multi_reduction <add>, %2, %cst_8 [0] : vector<32x128xf32> to vector<128xf32>
    %9 = vector.shape_cast %8 : vector<128xf32> to vector<1x128xf32>
    %10 = arith.addf %7, %9 : vector<1x128xf32>
    %c0_9 = arith.constant 0 : index
    %c0_10 = arith.constant 0 : index
    %11 = vector.load %arg4[%c0_9, %c0_10] : memref<1x128xf32, #tpu.memory_space<vmem>>, vector<1x128xf32>
    tpu.vector_store %arg4[%c0_9, %c0_10], %10 {strides = array<i32>} : memref<1x128xf32, #tpu.memory_space<vmem>>, vector<1x128xf32>,
    %c0_11 = arith.constant 0 : index
    %c0_12 = arith.constant 0 : index
    %12 = vector.load %arg5[%c0_11, %c0_12] : memref<1x128xf32, #tpu.memory_space<vmem>>, vector<1x128xf32>
    %13 = arith.mulf %2, %2 : vector<32x128xf32>
    %cst_13 = arith.constant dense<0.000000e+00> : vector<128xf32>
    %14 = vector.multi_reduction <add>, %13, %cst_13 [0] : vector<32x128xf32> to vector<128xf32>
    %15 = vector.shape_cast %14 : vector<128xf32> to vector<1x128xf32>
    %16 = arith.addf %12, %15 : vector<1x128xf32>
    %c0_14 = arith.constant 0 : index
    %c0_15 = arith.constant 0 : index
    %17 = vector.load %arg5[%c0_14, %c0_15] : memref<1x128xf32, #tpu.memory_space<vmem>>, vector<1x128xf32>
    tpu.vector_store %arg5[%c0_14, %c0_15], %16 {strides = array<i32>} : memref<1x128xf32, #tpu.memory_space<vmem>>, vector<1x128xf32>,
    return
  }
  func.func @transform_0(%arg0: i32) -> (i32, i32) {
    %c0_i32 = arith.constant 0 : i32
    %c0_i32_0 = arith.constant 0 : i32
    return %arg0, %c0_i32 : i32, i32
  }
  func.func @transform_1(%arg0: i32) -> (i32, i32) {
    %c0_i32 = arith.constant 0 : i32
    %c0_i32_0 = arith.constant 0 : i32
    %c0_i32_1 = arith.constant 0 : i32
    return %c0_i32, %c0_i32_0 : i32, i32
  }
  func.func @transform_2(%arg0: i32) -> (i32, i32) {
    %c0_i32 = arith.constant 0 : i32
    %c0_i32_0 = arith.constant 0 : i32
    return %arg0, %c0_i32 : i32, i32
  }
  func.func @transform_3(%arg0: i32) -> (i32, i32) {
    %c0_i32 = arith.constant 0 : i32
    %c0_i32_0 = arith.constant 0 : i32
    %c0_i32_1 = arith.constant 0 : i32
    return %c0_i32, %c0_i32_0 : i32, i32
  }
  func.func @transform_4(%arg0: i32) -> (i32, i32) {
    %c0_i32 = arith.constant 0 : i32
    %c0_i32_0 = arith.constant 0 : i32
    %c0_i32_1 = arith.constant 0 : i32
    return %c0_i32, %c0_i32_0 : i32, i32
  }
}

module attributes {stable_mosaic.version = 11 : i64} {
  func.func @_affine_act_kernel(%arg0: i32, %arg1: memref<32x128xf32, #tpu.memory_space<vmem>>, %arg2: memref<1x128xf32, #tpu.memory_space<vmem>>, %arg3: memref<1x128xf32, #tpu.memory_space<vmem>>, %arg4: memref<32x128xbf16, #tpu.memory_space<vmem>>) attributes {dimension_semantics = [#tpu.dimension_semantics<parallel>], iteration_bounds = array<i64: 1>, scalar_prefetch = 0 : i64, scratch_operands = 0 : i64, tpu.core_type = #tpu.core_type<tc>, window_params = [{transform_indices = @transform_0, window_bounds = array<i64: 32, 128>}, {pipeline_mode = #tpu.pipeline_mode<synchronous>, transform_indices = @transform_1, window_bounds = array<i64: 1, 128>}, {pipeline_mode = #tpu.pipeline_mode<synchronous>, transform_indices = @transform_2, window_bounds = array<i64: 1, 128>}, {transform_indices = @transform_3, window_bounds = array<i64: 32, 128>}]} {
    %c0 = arith.constant 0 : index
    %c0_0 = arith.constant 0 : index
    %0 = vector.load %arg1[%c0, %c0_0] : memref<32x128xf32, #tpu.memory_space<vmem>>, vector<32x128xf32>
    %c0_1 = arith.constant 0 : index
    %c0_2 = arith.constant 0 : index
    %1 = vector.load %arg2[%c0_1, %c0_2] : memref<1x128xf32, #tpu.memory_space<vmem>>, vector<1x128xf32>
    %2 = vector.broadcast %1 : vector<1x128xf32> to vector<32x128xf32>
    %3 = arith.mulf %0, %2 : vector<32x128xf32>
    %c0_3 = arith.constant 0 : index
    %c0_4 = arith.constant 0 : index
    %4 = vector.load %arg3[%c0_3, %c0_4] : memref<1x128xf32, #tpu.memory_space<vmem>>, vector<1x128xf32>
    %5 = vector.broadcast %4 : vector<1x128xf32> to vector<32x128xf32>
    %6 = arith.addf %3, %5 : vector<32x128xf32>
    %cst = arith.constant 0.000000e+00 : f32
    %7 = vector.broadcast %cst : f32 to vector<32x128xf32>
    %8 = arith.cmpf oge, %6, %7 : vector<32x128xf32>
    %cst_5 = arith.constant 2.000000e-01 : f32
    %9 = vector.broadcast %cst_5 : f32 to vector<32x128xf32>
    %10 = arith.mulf %9, %6 : vector<32x128xf32>
    %11 = arith.select %8, %6, %10 : vector<32x128xi1>, vector<32x128xf32>
    %12 = arith.truncf %11 : vector<32x128xf32> to vector<32x128xbf16>
    %c0_6 = arith.constant 0 : index
    %c0_7 = arith.constant 0 : index
    %13 = vector.load %arg4[%c0_6, %c0_7] : memref<32x128xbf16, #tpu.memory_space<vmem>>, vector<32x128xbf16>
    tpu.vector_store %arg4[%c0_6, %c0_7], %12 {strides = array<i32>} : memref<32x128xbf16, #tpu.memory_space<vmem>>, vector<32x128xbf16>,
    return
  }
  func.func @transform_0(%arg0: i32) -> (i32, i32) {
    %c0_i32 = arith.constant 0 : i32
    %c0_i32_0 = arith.constant 0 : i32
    return %arg0, %c0_i32 : i32, i32
  }
  func.func @transform_1(%arg0: i32) -> (i32, i32) {
    %c0_i32 = arith.constant 0 : i32
    %c0_i32_0 = arith.constant 0 : i32
    %c0_i32_1 = arith.constant 0 : i32
    return %c0_i32, %c0_i32_0 : i32, i32
  }
  func.func @transform_2(%arg0: i32) -> (i32, i32) {
    %c0_i32 = arith.constant 0 : i32
    %c0_i32_0 = arith.constant 0 : i32
    %c0_i32_1 = arith.constant 0 : i32
    return %c0_i32, %c0_i32_0 : i32, i32
  }
  func.func @transform_3(%arg0: i32) -> (i32, i32) {
    %c0_i32 = arith.constant 0 : i32
    %c0_i32_0 = arith.constant 0 : i32
    return %arg0, %c0_i32 : i32, i32
  }
}

module attributes {stable_mosaic.version = 11 : i64} {
  func.func @_conv_stats_kernel(%arg0: i32, %arg1: memref<24x512xbf16, #tpu.memory_space<vmem>>, %arg2: memref<512x128xbf16, #tpu.memory_space<vmem>>, %arg3: memref<24x128xf32, #tpu.memory_space<vmem>>, %arg4: memref<1x128xf32, #tpu.memory_space<vmem>>, %arg5: memref<1x128xf32, #tpu.memory_space<vmem>>) attributes {dimension_semantics = [#tpu.dimension_semantics<arbitrary>], iteration_bounds = array<i64: 1>, scalar_prefetch = 0 : i64, scratch_operands = 0 : i64, tpu.core_type = #tpu.core_type<tc>, window_params = [{transform_indices = @transform_0, window_bounds = array<i64: 24, 512>}, {pipeline_mode = #tpu.pipeline_mode<synchronous>, transform_indices = @transform_1, window_bounds = array<i64: 512, 128>}, {transform_indices = @transform_2, window_bounds = array<i64: 24, 128>}, {pipeline_mode = #tpu.pipeline_mode<synchronous>, transform_indices = @transform_3, window_bounds = array<i64: 1, 128>}, {pipeline_mode = #tpu.pipeline_mode<synchronous>, transform_indices = @transform_4, window_bounds = array<i64: 1, 128>}]} {
    %c0 = arith.constant 0 : index
    %c0_0 = arith.constant 0 : index
    %0 = vector.load %arg1[%c0, %c0_0] : memref<24x512xbf16, #tpu.memory_space<vmem>>, vector<24x512xbf16>
    %c0_1 = arith.constant 0 : index
    %c0_2 = arith.constant 0 : index
    %1 = vector.load %arg2[%c0_1, %c0_2] : memref<512x128xbf16, #tpu.memory_space<vmem>>, vector<512x128xbf16>
    %cst = arith.constant dense<0.000000e+00> : vector<24x128xf32>
    %2 = tpu.matmul %0, %1, %cst {dimension_numbers = #tpu.dot_dimension_numbers<[1], [0], [0], [1], [0, 0, 1, 1], [], []>} : vector<24x512xbf16>, vector<512x128xbf16>, vector<24x128xf32> -> vector<24x128xf32>
    %c0_3 = arith.constant 0 : index
    %c0_4 = arith.constant 0 : index
    %3 = vector.load %arg3[%c0_3, %c0_4] : memref<24x128xf32, #tpu.memory_space<vmem>>, vector<24x128xf32>
    tpu.vector_store %arg3[%c0_3, %c0_4], %2 {strides = array<i32>} : memref<24x128xf32, #tpu.memory_space<vmem>>, vector<24x128xf32>,
    %c0_i32 = arith.constant 0 : i32
    %4 = arith.cmpi eq, %arg0, %c0_i32 : i32
    %5 = arith.extui %4 : i1 to i32
    %c0_i32_5 = arith.constant 0 : i32
    %6 = arith.cmpi ne, %5, %c0_i32_5 : i32
    scf.if %6 {
      %cst_16 = arith.constant 0.000000e+00 : f32
      %18 = vector.broadcast %cst_16 : f32 to vector<1x128xf32>
      %c0_17 = arith.constant 0 : index
      %c0_18 = arith.constant 0 : index
      %19 = vector.load %arg4[%c0_17, %c0_18] : memref<1x128xf32, #tpu.memory_space<vmem>>, vector<1x128xf32>
      tpu.vector_store %arg4[%c0_17, %c0_18], %18 {strides = array<i32>} : memref<1x128xf32, #tpu.memory_space<vmem>>, vector<1x128xf32>,
      %cst_19 = arith.constant 0.000000e+00 : f32
      %20 = vector.broadcast %cst_19 : f32 to vector<1x128xf32>
      %c0_20 = arith.constant 0 : index
      %c0_21 = arith.constant 0 : index
      %21 = vector.load %arg5[%c0_20, %c0_21] : memref<1x128xf32, #tpu.memory_space<vmem>>, vector<1x128xf32>
      tpu.vector_store %arg5[%c0_20, %c0_21], %20 {strides = array<i32>} : memref<1x128xf32, #tpu.memory_space<vmem>>, vector<1x128xf32>,
    } else {
    }
    %c0_6 = arith.constant 0 : index
    %c0_7 = arith.constant 0 : index
    %7 = vector.load %arg4[%c0_6, %c0_7] : memref<1x128xf32, #tpu.memory_space<vmem>>, vector<1x128xf32>
    %cst_8 = arith.constant dense<0.000000e+00> : vector<128xf32>
    %8 = vector.multi_reduction <add>, %2, %cst_8 [0] : vector<24x128xf32> to vector<128xf32>
    %9 = vector.shape_cast %8 : vector<128xf32> to vector<1x128xf32>
    %10 = arith.addf %7, %9 : vector<1x128xf32>
    %c0_9 = arith.constant 0 : index
    %c0_10 = arith.constant 0 : index
    %11 = vector.load %arg4[%c0_9, %c0_10] : memref<1x128xf32, #tpu.memory_space<vmem>>, vector<1x128xf32>
    tpu.vector_store %arg4[%c0_9, %c0_10], %10 {strides = array<i32>} : memref<1x128xf32, #tpu.memory_space<vmem>>, vector<1x128xf32>,
    %c0_11 = arith.constant 0 : index
    %c0_12 = arith.constant 0 : index
    %12 = vector.load %arg5[%c0_11, %c0_12] : memref<1x128xf32, #tpu.memory_space<vmem>>, vector<1x128xf32>
    %13 = arith.mulf %2, %2 : vector<24x128xf32>
    %cst_13 = arith.constant dense<0.000000e+00> : vector<128xf32>
    %14 = vector.multi_reduction <add>, %13, %cst_13 [0] : vector<24x128xf32> to vector<128xf32>
    %15 = vector.shape_cast %14 : vector<128xf32> to vector<1x128xf32>
    %16 = arith.addf %12, %15 : vector<1x128xf32>
    %c0_14 = arith.constant 0 : index
    %c0_15 = arith.constant 0 : index
    %17 = vector.load %arg5[%c0_14, %c0_15] : memref<1x128xf32, #tpu.memory_space<vmem>>, vector<1x128xf32>
    tpu.vector_store %arg5[%c0_14, %c0_15], %16 {strides = array<i32>} : memref<1x128xf32, #tpu.memory_space<vmem>>, vector<1x128xf32>,
    return
  }
  func.func @transform_0(%arg0: i32) -> (i32, i32) {
    %c0_i32 = arith.constant 0 : i32
    %c0_i32_0 = arith.constant 0 : i32
    return %arg0, %c0_i32 : i32, i32
  }
  func.func @transform_1(%arg0: i32) -> (i32, i32) {
    %c0_i32 = arith.constant 0 : i32
    %c0_i32_0 = arith.constant 0 : i32
    %c0_i32_1 = arith.constant 0 : i32
    return %c0_i32, %c0_i32_0 : i32, i32
  }
  func.func @transform_2(%arg0: i32) -> (i32, i32) {
    %c0_i32 = arith.constant 0 : i32
    %c0_i32_0 = arith.constant 0 : i32
    return %arg0, %c0_i32 : i32, i32
  }
  func.func @transform_3(%arg0: i32) -> (i32, i32) {
    %c0_i32 = arith.constant 0 : i32
    %c0_i32_0 = arith.constant 0 : i32
    %c0_i32_1 = arith.constant 0 : i32
    return %c0_i32, %c0_i32_0 : i32, i32
  }
  func.func @transform_4(%arg0: i32) -> (i32, i32) {
    %c0_i32 = arith.constant 0 : i32
    %c0_i32_0 = arith.constant 0 : i32
    %c0_i32_1 = arith.constant 0 : i32
    return %c0_i32, %c0_i32_0 : i32, i32
  }
}

module attributes {stable_mosaic.version = 11 : i64} {
  func.func @_affine_act_kernel(%arg0: i32, %arg1: memref<24x128xf32, #tpu.memory_space<vmem>>, %arg2: memref<1x128xf32, #tpu.memory_space<vmem>>, %arg3: memref<1x128xf32, #tpu.memory_space<vmem>>, %arg4: memref<24x128xbf16, #tpu.memory_space<vmem>>) attributes {dimension_semantics = [#tpu.dimension_semantics<parallel>], iteration_bounds = array<i64: 1>, scalar_prefetch = 0 : i64, scratch_operands = 0 : i64, tpu.core_type = #tpu.core_type<tc>, window_params = [{transform_indices = @transform_0, window_bounds = array<i64: 24, 128>}, {pipeline_mode = #tpu.pipeline_mode<synchronous>, transform_indices = @transform_1, window_bounds = array<i64: 1, 128>}, {pipeline_mode = #tpu.pipeline_mode<synchronous>, transform_indices = @transform_2, window_bounds = array<i64: 1, 128>}, {transform_indices = @transform_3, window_bounds = array<i64: 24, 128>}]} {
    %c0 = arith.constant 0 : index
    %c0_0 = arith.constant 0 : index
    %0 = vector.load %arg1[%c0, %c0_0] : memref<24x128xf32, #tpu.memory_space<vmem>>, vector<24x128xf32>
    %c0_1 = arith.constant 0 : index
    %c0_2 = arith.constant 0 : index
    %1 = vector.load %arg2[%c0_1, %c0_2] : memref<1x128xf32, #tpu.memory_space<vmem>>, vector<1x128xf32>
    %2 = vector.broadcast %1 : vector<1x128xf32> to vector<24x128xf32>
    %3 = arith.mulf %0, %2 : vector<24x128xf32>
    %c0_3 = arith.constant 0 : index
    %c0_4 = arith.constant 0 : index
    %4 = vector.load %arg3[%c0_3, %c0_4] : memref<1x128xf32, #tpu.memory_space<vmem>>, vector<1x128xf32>
    %5 = vector.broadcast %4 : vector<1x128xf32> to vector<24x128xf32>
    %6 = arith.addf %3, %5 : vector<24x128xf32>
    %cst = arith.constant 0.000000e+00 : f32
    %7 = vector.broadcast %cst : f32 to vector<24x128xf32>
    %8 = arith.cmpf oge, %6, %7 : vector<24x128xf32>
    %cst_5 = arith.constant 2.000000e-01 : f32
    %9 = vector.broadcast %cst_5 : f32 to vector<24x128xf32>
    %10 = arith.mulf %9, %6 : vector<24x128xf32>
    %11 = arith.select %8, %6, %10 : vector<24x128xi1>, vector<24x128xf32>
    %12 = arith.truncf %11 : vector<24x128xf32> to vector<24x128xbf16>
    %c0_6 = arith.constant 0 : index
    %c0_7 = arith.constant 0 : index
    %13 = vector.load %arg4[%c0_6, %c0_7] : memref<24x128xbf16, #tpu.memory_space<vmem>>, vector<24x128xbf16>
    tpu.vector_store %arg4[%c0_6, %c0_7], %12 {strides = array<i32>} : memref<24x128xbf16, #tpu.memory_space<vmem>>, vector<24x128xbf16>,
    return
  }
  func.func @transform_0(%arg0: i32) -> (i32, i32) {
    %c0_i32 = arith.constant 0 : i32
    %c0_i32_0 = arith.constant 0 : i32
    return %arg0, %c0_i32 : i32, i32
  }
  func.func @transform_1(%arg0: i32) -> (i32, i32) {
    %c0_i32 = arith.constant 0 : i32
    %c0_i32_0 = arith.constant 0 : i32
    %c0_i32_1 = arith.constant 0 : i32
    return %c0_i32, %c0_i32_0 : i32, i32
  }
  func.func @transform_2(%arg0: i32) -> (i32, i32) {
    %c0_i32 = arith.constant 0 : i32
    %c0_i32_0 = arith.constant 0 : i32
    %c0_i32_1 = arith.constant 0 : i32
    return %c0_i32, %c0_i32_0 : i32, i32
  }
  func.func @transform_3(%arg0: i32) -> (i32, i32) {
    %c0_i32 = arith.constant 0 : i32
    %c0_i32_0 = arith.constant 0 : i32
    return %arg0, %c0_i32 : i32, i32
  }
}

module attributes {stable_mosaic.version = 11 : i64} {
  func.func @_conv_bias_act_kernel(%arg0: i32, %arg1: memref<8x1024xbf16, #tpu.memory_space<vmem>>, %arg2: memref<1024x128xbf16, #tpu.memory_space<vmem>>, %arg3: memref<1x128xf32, #tpu.memory_space<vmem>>, %arg4: memref<8x128xf32, #tpu.memory_space<vmem>>) attributes {dimension_semantics = [#tpu.dimension_semantics<parallel>], iteration_bounds = array<i64: 1>, scalar_prefetch = 0 : i64, scratch_operands = 0 : i64, tpu.core_type = #tpu.core_type<tc>, window_params = [{transform_indices = @transform_0, window_bounds = array<i64: 8, 1024>}, {pipeline_mode = #tpu.pipeline_mode<synchronous>, transform_indices = @transform_1, window_bounds = array<i64: 1024, 128>}, {pipeline_mode = #tpu.pipeline_mode<synchronous>, transform_indices = @transform_2, window_bounds = array<i64: 1, 128>}, {transform_indices = @transform_3, window_bounds = array<i64: 8, 128>}]} {
    %c0 = arith.constant 0 : index
    %c0_0 = arith.constant 0 : index
    %0 = vector.load %arg1[%c0, %c0_0] : memref<8x1024xbf16, #tpu.memory_space<vmem>>, vector<8x1024xbf16>
    %c0_1 = arith.constant 0 : index
    %c0_2 = arith.constant 0 : index
    %1 = vector.load %arg2[%c0_1, %c0_2] : memref<1024x128xbf16, #tpu.memory_space<vmem>>, vector<1024x128xbf16>
    %cst = arith.constant dense<0.000000e+00> : vector<8x128xf32>
    %2 = tpu.matmul %0, %1, %cst {dimension_numbers = #tpu.dot_dimension_numbers<[1], [0], [0], [1], [0, 0, 1, 1], [], []>} : vector<8x1024xbf16>, vector<1024x128xbf16>, vector<8x128xf32> -> vector<8x128xf32>
    %c0_3 = arith.constant 0 : index
    %c0_4 = arith.constant 0 : index
    %3 = vector.load %arg3[%c0_3, %c0_4] : memref<1x128xf32, #tpu.memory_space<vmem>>, vector<1x128xf32>
    %4 = vector.broadcast %3 : vector<1x128xf32> to vector<8x128xf32>
    %5 = arith.addf %2, %4 : vector<8x128xf32>
    %c0_5 = arith.constant 0 : index
    %c0_6 = arith.constant 0 : index
    %6 = vector.load %arg4[%c0_5, %c0_6] : memref<8x128xf32, #tpu.memory_space<vmem>>, vector<8x128xf32>
    tpu.vector_store %arg4[%c0_5, %c0_6], %5 {strides = array<i32>} : memref<8x128xf32, #tpu.memory_space<vmem>>, vector<8x128xf32>,
    return
  }
  func.func @transform_0(%arg0: i32) -> (i32, i32) {
    %c0_i32 = arith.constant 0 : i32
    %c0_i32_0 = arith.constant 0 : i32
    return %arg0, %c0_i32 : i32, i32
  }
  func.func @transform_1(%arg0: i32) -> (i32, i32) {
    %c0_i32 = arith.constant 0 : i32
    %c0_i32_0 = arith.constant 0 : i32
    %c0_i32_1 = arith.constant 0 : i32
    return %c0_i32, %c0_i32_0 : i32, i32
  }
  func.func @transform_2(%arg0: i32) -> (i32, i32) {
    %c0_i32 = arith.constant 0 : i32
    %c0_i32_0 = arith.constant 0 : i32
    %c0_i32_1 = arith.constant 0 : i32
    return %c0_i32, %c0_i32_0 : i32, i32
  }
  func.func @transform_3(%arg0: i32) -> (i32, i32) {
    %c0_i32 = arith.constant 0 : i32
    %c0_i32_0 = arith.constant 0 : i32
    return %arg0, %c0_i32 : i32, i32
  }
}

</mosaic_0001>

<llo_original>
// kernel: _lambda_.8
$region0: #{_lambda_.8}
  #allocation0 [shape = 'u32[]', space=smem, size = 0x4, offset = 0x4, fixed_abs, tag = 'smem constant byte address 0x4 - core index']
  #allocation1 [shape = 'u32[144,128]{1,0:T(1,128)}', space=vmem, size = 0x12000, scoped, tag = 'internal scratch']
  %s0 = inlined_call_operand.vmem [shape: bf16[512,128], index: 0, kind: input, shape index: {}]
  %s1 = inlined_call_operand.vmem [shape: bf16[128,128], index: 1, kind: input, shape index: {}]
  %s2 = inlined_call_operand.vmem [shape: f32[1,128], index: 2, kind: input, shape index: {}]
  %s3 = inlined_call_operand.vmem [shape: bf16[512,128], index: 3, kind: output, shape index: {}]
  %s4 = sld [smem:[#allocation0]]
  $region22: #{_lambda_.8} parent=0
    _
  %s6 = ssub.s32 1, %s4
  %s7 = scalar_select 0, %s6, %s4
  // Predicated region
  $region2: #{_lambda_.8} parent=0 // pred_check
    _
  $region3: #{_lambda_.8} parent=0 // pred_check_branch
    %9 = sbr.rel (0) target = $region5
  $region4: #{_lambda_.8} parent=0 // pred_region
    _
  $region5: #{_lambda_.8} parent=0 // pred_fallthru
    _
  // Predicated region
  $region6: #{_lambda_.8} parent=0 // pred_check
    _
  $region7: #{_lambda_.8} parent=0 // pred_check_branch
    %11 = sbr.rel (0) target = $region9
  $region8: #{_lambda_.8} parent=0 // pred_region
    _
  $region9: #{_lambda_.8} parent=0 // pred_fallthru
    _
  // Predicated region
  $region10: #{_lambda_.8} parent=0 // pred_check
    _
  $region11: #{_lambda_.8} parent=0 // pred_check_branch
    %13 = sbr.rel (0) target = $region13
  $region12: #{_lambda_.8} parent=0 // pred_region
    _
  $region13: #{_lambda_.8} parent=0 // pred_fallthru
    _
  %v15 = vld [vmem:[%s0] sm:$0xf]
  %v16 = vld [vmem:[%s0 + $0x4] sm:$0xf]
  %v17 = vld [vmem:[%s0 + $0x8] sm:$0xf]
  %v18 = vld [vmem:[%s0 + $0xc] sm:$0xf]
  %v19 = vld [vmem:[%s0 + $0x10] sm:$0xf]
  %v20 = vld [vmem:[%s0 + $0x14] sm:$0xf]
  %v21 = vld [vmem:[%s0 + $0x18] sm:$0xf]
  %v22 = vld [vmem:[%s0 + $0x1c] sm:$0xf]
  %v23 = vld [vmem:[%s0 + $0x20] sm:$0xf]
  %v24 = vld [vmem:[%s0 + $0x24] sm:$0xf]
  %v25 = vld [vmem:[%s0 + $0x28] sm:$0xf]
  %v26 = vld [vmem:[%s0 + $0x2c] sm:$0xf]
  %v27 = vld [vmem:[%s0 + $0x30] sm:$0xf]
  %v28 = vld [vmem:[%s0 + $0x34] sm:$0xf]
  %v29 = vld [vmem:[%s0 + $0x38] sm:$0xf]
  %v30 = vld [vmem:[%s0 + $0x3c] sm:$0xf]
  %v31 = vld [vmem:[%s0 + $0x40] sm:$0xf]
  %v32 = vld [vmem:[%s0 + $0x44] sm:$0xf]
  %v33 = vld [vmem:[%s0 + $0x48] sm:$0xf]
  %v34 = vld [vmem:[%s0 + $0x4c] sm:$0xf]
  %v35 = vld [vmem:[%s0 + $0x50] sm:$0xf]
  %v36 = vld [vmem:[%s0 + $0x54] sm:$0xf]
  %v37 = vld [vmem:[%s0 + $0x58] sm:$0xf]
  %v38 = vld [vmem:[%s0 + $0x5c] sm:$0xf]
  %v39 = vld [vmem:[%s0 + $0x60] sm:$0xf]
  %v40 = vld [vmem:[%s0 + $0x64] sm:$0xf]
  %v41 = vld [vmem:[%s0 + $0x68] sm:$0xf]
  %v42 = vld [vmem:[%s0 + $0x6c] sm:$0xf]
  %v43 = vld [vmem:[%s0 + $0x70] sm:$0xf]
  %v44 = vld [vmem:[%s0 + $0x74] sm:$0xf]
  %v45 = vld [vmem:[%s0 + $0x78] sm:$0xf]
  %v46 = vld [vmem:[%s0 + $0x7c] sm:$0xf]
  %v47 = vld [vmem:[%s0 + $0x80] sm:$0xf]
  %v48 = vld [vmem:[%s0 + $0x84] sm:$0xf]
  %v49 = vld [vmem:[%s0 + $0x88] sm:$0xf]
  %v50 = vld [vmem:[%s0 + $0x8c] sm:$0xf]
  %v51 = vld [vmem:[%s0 + $0x90] sm:$0xf]
  %v52 = vld [vmem:[%s0 + $0x94] sm:$0xf]
  %v53 = vld [vmem:[%s0 + $0x98] sm:$0xf]
  %v54 = vld [vmem:[%s0 + $0x9c] sm:$0xf]
  %v55 = vld [vmem:[%s0 + $0xa0] sm:$0xf]
  %v56 = vld [vmem:[%s0 + $0xa4] sm:$0xf]
  %v57 = vld [vmem:[%s0 + $0xa8] sm:$0xf]
  %v58 = vld [vmem:[%s0 + $0xac] sm:$0xf]
  %v59 = vld [vmem:[%s0 + $0xb0] sm:$0xf]
  %v60 = vld [vmem:[%s0 + $0xb4] sm:$0xf]
  %v61 = vld [vmem:[%s0 + $0xb8] sm:$0xf]
  %v62 = vld [vmem:[%s0 + $0xbc] sm:$0xf]
  %v63 = vld [vmem:[%s0 + $0xc0] sm:$0xf]
  %v64 = vld [vmem:[%s0 + $0xc4] sm:$0xf]
  %v65 = vld [vmem:[%s0 + $0xc8] sm:$0xf]
  %v66 = vld [vmem:[%s0 + $0xcc] sm:$0xf]
  %v67 = vld [vmem:[%s0 + $0xd0] sm:$0xf]
  %v68 = vld [vmem:[%s0 + $0xd4] sm:$0xf]
  %v69 = vld [vmem:[%s0 + $0xd8] sm:$0xf]
  %v70 = vld [vmem:[%s0 + $0xdc] sm:$0xf]
  %v71 = vld [vmem:[%s0 + $0xe0] sm:$0xf]
  %v72 = vld [vmem:[%s0 + $0xe4] sm:$0xf]
  %v73 = vld [vmem:[%s0 + $0xe8] sm:$0xf]
  %v74 = vld [vmem:[%s0 + $0xec] sm:$0xf]
  %v75 = vld [vmem:[%s0 + $0xf0] sm:$0xf]
  %v76 = vld [vmem:[%s0 + $0xf4] sm:$0xf]
  %v77 = vld [vmem:[%s0 + $0xf8] sm:$0xf]
  %v78 = vld [vmem:[%s0 + $0xfc] sm:$0xf]
  %v79 = vld [vmem:[%s1] sm:$0xf]
  %v80 = vld [vmem:[%s1 + $0x4] sm:$0xf]
  %v81 = vld [vmem:[%s1 + $0x8] sm:$0xf]
  %v82 = vld [vmem:[%s1 + $0xc] sm:$0xf]
  %v83 = vld [vmem:[%s1 + $0x10] sm:$0xf]
  %v84 = vld [vmem:[%s1 + $0x14] sm:$0xf]
  %v85 = vld [vmem:[%s1 + $0x18] sm:$0xf]
  %v86 = vld [vmem:[%s1 + $0x1c] sm:$0xf]
  %v87 = vld [vmem:[%s1 + $0x20] sm:$0xf]
  %v88 = vld [vmem:[%s1 + $0x24] sm:$0xf]
  %v89 = vld [vmem:[%s1 + $0x28] sm:$0xf]
  %v90 = vld [vmem:[%s1 + $0x2c] sm:$0xf]
  %v91 = vld [vmem:[%s1 + $0x30] sm:$0xf]
  %v92 = vld [vmem:[%s1 + $0x34] sm:$0xf]
  %v93 = vld [vmem:[%s1 + $0x38] sm:$0xf]
  %v94 = vld [vmem:[%s1 + $0x3c] sm:$0xf]
  %v95 = vld [vmem:[%s2] sm:$0x1]
  %v97 = vlaneseq
  %v98 = vshrl.u32 %v97, 7
  %v99 = vsub.s32 0, %v98
  %v100 = vrot.slane %v95, %v99
  %v166 = vunpack.c.l.b16 %v15
  %v167 = vunpack.c.l.b16 %v16
  %v168 = vunpack.c.l.b16 %v17
  %v169 = vunpack.c.l.b16 %v18
  %v170 = vunpack.c.l.b16 %v19
  %v171 = vunpack.c.l.b16 %v20
  %v172 = vunpack.c.l.b16 %v21
  %v173 = vunpack.c.l.b16 %v22
  %v174 = vunpack.c.l.b16 %v23
  %v175 = vunpack.c.l.b16 %v24
  %v176 = vunpack.c.l.b16 %v25
  %v177 = vunpack.c.l.b16 %v26
  %v178 = vunpack.c.l.b16 %v27
  %v179 = vunpack.c.l.b16 %v28
  %v180 = vunpack.c.l.b16 %v29
  %v181 = vunpack.c.l.b16 %v30
  %v182 = vunpack.c.l.b16 %v31
  %v183 = vunpack.c.l.b16 %v32
  %v184 = vunpack.c.l.b16 %v33
  %v185 = vunpack.c.l.b16 %v34
  %v186 = vunpack.c.l.b16 %v35
  %v187 = vunpack.c.l.b16 %v36
  %v188 = vunpack.c.l.b16 %v37
  %v189 = vunpack.c.l.b16 %v38
  %v190 = vunpack.c.l.b16 %v39
  %v191 = vunpack.c.l.b16 %v40
  %v192 = vunpack.c.l.b16 %v41
  %v193 = vunpack.c.l.b16 %v42
  %v194 = vunpack.c.l.b16 %v43
  %v195 = vunpack.c.l.b16 %v44
  %v196 = vunpack.c.l.b16 %v45
  %v197 = vunpack.c.l.b16 %v46
  %v198 = vunpack.c.l.b16 %v47
  %v199 = vunpack.c.l.b16 %v48
  %v200 = vunpack.c.l.b16 %v49
  %v201 = vunpack.c.l.b16 %v50
  %v202 = vunpack.c.l.b16 %v51
  %v203 = vunpack.c.l.b16 %v52
  %v204 = vunpack.c.l.b16 %v53
  %v205 = vunpack.c.l.b16 %v54
  %v206 = vunpack.c.l.b16 %v55
  %v207 = vunpack.c.l.b16 %v56
  %v208 = vunpack.c.l.b16 %v57
  %v209 = vunpack.c.l.b16 %v58
  %v210 = vunpack.c.l.b16 %v59
  %v211 = vunpack.c.l.b16 %v60
  %v212 = vunpack.c.l.b16 %v61
  %v213 = vunpack.c.l.b16 %v62
  %v214 = vunpack.c.l.b16 %v63
  %v215 = vunpack.c.l.b16 %v64
  %v216 = vunpack.c.l.b16 %v65
  %v217 = vunpack.c.l.b16 %v66
  %v218 = vunpack.c.l.b16 %v67
  %v219 = vunpack.c.l.b16 %v68
  %v220 = vunpack.c.l.b16 %v69
  %v221 = vunpack.c.l.b16 %v70
  %v222 = vunpack.c.l.b16 %v71
  %v223 = vunpack.c.l.b16 %v72
  %v224 = vunpack.c.l.b16 %v73
  %v225 = vunpack.c.l.b16 %v74
  %v226 = vunpack.c.l.b16 %v75
  %v227 = vunpack.c.l.b16 %v76
  %v228 = vunpack.c.l.b16 %v77
  %v229 = vunpack.c.l.b16 %v78
  %v230 = vpack.c.b16 %v167, %v166
  %v231 = vpack.c.b16 %v169, %v168
  %v232 = vpack.c.b16 %v171, %v170
  %v233 = vpack.c.b16 %v173, %v172
  %v234 = vpack.c.b16 %v175, %v174
  %v235 = vpack.c.b16 %v177, %v176
  %v236 = vpack.c.b16 %v179, %v178
  %v237 = vpack.c.b16 %v181, %v180
  %v238 = vpack.c.b16 %v183, %v182
  %v239 = vpack.c.b16 %v185, %v184
  %v240 = vpack.c.b16 %v187, %v186
  %v241 = vpack.c.b16 %v189, %v188
  %v242 = vpack.c.b16 %v191, %v190
  %v243 = vpack.c.b16 %v193, %v192
  %v244 = vpack.c.b16 %v195, %v194
  %v245 = vpack.c.b16 %v197, %v196
  %v246 = vpack.c.b16 %v199, %v198
  %v247 = vpack.c.b16 %v201, %v200
  %v248 = vpack.c.b16 %v203, %v202
  %v249 = vpack.c.b16 %v205, %v204
  %v250 = vpack.c.b16 %v207, %v206
  %v251 = vpack.c.b16 %v209, %v208
  %v252 = vpack.c.b16 %v211, %v210
  %v253 = vpack.c.b16 %v213, %v212
  %v254 = vpack.c.b16 %v215, %v214
  %v255 = vpack.c.b16 %v217, %v216
  %v256 = vpack.c.b16 %v219, %v218
  %v257 = vpack.c.b16 %v221, %v220
  %v258 = vpack.c.b16 %v223, %v222
  %v259 = vpack.c.b16 %v225, %v224
  %v260 = vpack.c.b16 %v227, %v226
  %v261 = vpack.c.b16 %v229, %v228
  %v310 = vunpack.c.l.b16 %v79
  %v311 = vunpack.c.l.b16 %v80
  %v312 = vunpack.c.l.b16 %v81
  %v313 = vunpack.c.l.b16 %v82
  %v314 = vunpack.c.l.b16 %v83
  %v315 = vunpack.c.l.b16 %v84
  %v316 = vunpack.c.l.b16 %v85
  %v317 = vunpack.c.l.b16 %v86
  %v318 = vunpack.c.l.b16 %v87
  %v319 = vunpack.c.l.b16 %v88
  %v320 = vunpack.c.l.b16 %v89
  %v321 = vunpack.c.l.b16 %v90
  %v322 = vunpack.c.l.b16 %v91
  %v323 = vunpack.c.l.b16 %v92
  %v324 = vunpack.c.l.b16 %v93
  %v325 = vunpack.c.l.b16 %v94
  %v326 = vpack.c.b16 %v311, %v310
  %v327 = vpack.c.b16 %v313, %v312
  %v328 = vpack.c.b16 %v315, %v314
  %v329 = vpack.c.b16 %v317, %v316
  %v330 = vpack.c.b16 %v319, %v318
  %v331 = vpack.c.b16 %v321, %v320
  %v332 = vpack.c.b16 %v323, %v322
  %v333 = vpack.c.b16 %v325, %v324
  %342 = vmatprep.subr.bf16.mxu0 0
  %343 = vmatpush1.bf16.msra.mxu0 %v326
  %344 = vmatprep.subr.bf16.mxu0 0
  %345 = vmatpush1.bf16.msra.mxu0 %v327
  %346 = vmatprep.subr.bf16.mxu0 0
  %347 = vmatpush1.bf16.msra.mxu0 %v328
  %348 = vmatprep.subr.bf16.mxu0 0
  %349 = vmatpush1.bf16.msra.mxu0 %v329
  %350 = vmatprep.subr.bf16.mxu0 0
  %351 = vmatpush1.bf16.msra.mxu0 %v330
  %352 = vmatprep.subr.bf16.mxu0 0
  %353 = vmatpush1.bf16.msra.mxu0 %v331
  %354 = vmatprep.subr.bf16.mxu0 0
  %355 = vmatpush1.bf16.msra.mxu0 %v332
  %356 = vmatprep.subr.bf16.mxu0 0
  %357 = vmatpush1.bf16.msra.mxu0 %v333
  %358 = vmatprep.subr.bf16.mxu0 0
  %359 = vmatpush1.bf16.msra.mxu0 0
  %360 = vmatprep.subr.bf16.mxu0 0
  %361 = vmatpush1.bf16.msra.mxu0 0
  %362 = vmatprep.subr.bf16.mxu0 0
  %363 = vmatpush1.bf16.msra.mxu0 0
  %364 = vmatprep.subr.bf16.mxu0 0
  %365 = vmatpush1.bf16.msra.mxu0 0
  %366 = vmatprep.subr.bf16.mxu0 0
  %367 = vmatpush1.bf16.msra.mxu0 0
  %368 = vmatprep.subr.bf16.mxu0 0
  %369 = vmatpush1.bf16.msra.mxu0 0
  %370 = vmatprep.subr.bf16.mxu0 0
  %371 = vmatpush1.bf16.msra.mxu0 0
  %372 = vmatprep.subr.bf16.mxu0 0
  %373 = vmatpush1.bf16.msra.mxu0 0
  %374 = vmatprep.mubr.bf16.mxu0 0
  %375 = vmatmul.mubr.bf16.gmra.mrb[0].mxu0 %v230
  %v376 = vpop.f32.mrb[0].mxu0
  %v377 = vadd.f32 %v100, %v376
  %v378 = vpop.f32.mrb[0].mxu0
  %v379 = vpop.f32.mrb[0].mxu0
  %v380 = vadd.f32 %v100, %v379
  %v381 = vpop.f32.mrb[0].mxu0
  %382 = vmatprep.mubr.bf16.mxu0 0
  %383 = vmatmul.mubr.bf16.gmra.mrb[0].mxu0 %v231
  %v384 = vpop.f32.mrb[0].mxu0
  %v385 = vadd.f32 %v100, %v384
  %v386 = vpop.f32.mrb[0].mxu0
  %v387 = vpop.f32.mrb[0].mxu0
  %v388 = vadd.f32 %v100, %v387
  %v389 = vpop.f32.mrb[0].mxu0
  %390 = vmatprep.mubr.bf16.mxu0 0
  %391 = vmatmul.mubr.bf16.gmra.mrb[0].mxu0 %v232
  %v392 = vpop.f32.mrb[0].mxu0
  %v393 = vadd.f32 %v100, %v392
  %v394 = vpop.f32.mrb[0].mxu0
  %v395 = vpop.f32.mrb[0].mxu0
  %v396 = vadd.f32 %v100, %v395
  %v397 = vpop.f32.mrb[0].mxu0
  %398 = vmatprep.mubr.bf16.mxu0 0
  %399 = vmatmul.mubr.bf16.gmra.mrb[0].mxu0 %v233
  %v400 = vpop.f32.mrb[0].mxu0
  %v401 = vadd.f32 %v100, %v400
  %v402 = vpop.f32.mrb[0].mxu0
  %v403 = vpop.f32.mrb[0].mxu0
  %v404 = vadd.f32 %v100, %v403
  %v405 = vpop.f32.mrb[0].mxu0
  %406 = vmatprep.mubr.bf16.mxu0 0
  %407 = vmatmul.mubr.bf16.gmra.mrb[0].mxu0 %v234
  %v408 = vpop.f32.mrb[0].mxu0
  %v409 = vadd.f32 %v100, %v408
  %v410 = vpop.f32.mrb[0].mxu0
  %v411 = vpop.f32.mrb[0].mxu0
  %v412 = vadd.f32 %v100, %v411
  %v413 = vpop.f32.mrb[0].mxu0
  %414 = vmatprep.mubr.bf16.mxu0 0
  %415 = vmatmul.mubr.bf16.gmra.mrb[0].mxu0 %v235
  %v416 = vpop.f32.mrb[0].mxu0
  %v417 = vadd.f32 %v100, %v416
  %v418 = vpop.f32.mrb[0].mxu0
  %v419 = vpop.f32.mrb[0].mxu0
  %v420 = vadd.f32 %v100, %v419
  %v421 = vpop.f32.mrb[0].mxu0
  %422 = vmatprep.mubr.bf16.mxu0 0
  %423 = vmatmul.mubr.bf16.gmra.mrb[0].mxu0 %v236
  %v424 = vpop.f32.mrb[0].mxu0
  %v425 = vadd.f32 %v100, %v424
  %v426 = vpop.f32.mrb[0].mxu0
  %v427 = vpop.f32.mrb[0].mxu0
  %v428 = vadd.f32 %v100, %v427
  %v429 = vpop.f32.mrb[0].mxu0
  %430 = vmatprep.mubr.bf16.mxu0 0
  %431 = vmatmul.mubr.bf16.gmra.mrb[0].mxu0 %v237
  %v432 = vpop.f32.mrb[0].mxu0
  %v433 = vadd.f32 %v100, %v432
  %v434 = vpop.f32.mrb[0].mxu0
  %v435 = vpop.f32.mrb[0].mxu0
  %v436 = vadd.f32 %v100, %v435
  %v437 = vpop.f32.mrb[0].mxu0
  %438 = vmatprep.mubr.bf16.mxu0 0
  %439 = vmatmul.mubr.bf16.gmra.mrb[0].mxu0 %v238
  %v440 = vpop.f32.mrb[0].mxu0
  %v441 = vadd.f32 %v100, %v440
  %v442 = vpop.f32.mrb[0].mxu0
  %v443 = vpop.f32.mrb[0].mxu0
  %v444 = vadd.f32 %v100, %v443
  %v445 = vpop.f32.mrb[0].mxu0
  %446 = vmatprep.mubr.bf16.mxu0 0
  %447 = vmatmul.mubr.bf16.gmra.mrb[0].mxu0 %v239
  %v448 = vpop.f32.mrb[0].mxu0
  %v449 = vadd.f32 %v100, %v448
  %v450 = vpop.f32.mrb[0].mxu0
  %v451 = vpop.f32.mrb[0].mxu0
  %v452 = vadd.f32 %v100, %v451
  %v453 = vpop.f32.mrb[0].mxu0
  %454 = vmatprep.mubr.bf16.mxu0 0
  %455 = vmatmul.mubr.bf16.gmra.mrb[0].mxu0 %v240
  %v456 = vpop.f32.mrb[0].mxu0
  %v457 = vadd.f32 %v100, %v456
  %v458 = vpop.f32.mrb[0].mxu0
  %v459 = vpop.f32.mrb[0].mxu0
  %v460 = vadd.f32 %v100, %v459
  %v461 = vpop.f32.mrb[0].mxu0
  %462 = vmatprep.mubr.bf16.mxu0 0
  %463 = vmatmul.mubr.bf16.gmra.mrb[0].mxu0 %v241
  %v464 = vpop.f32.mrb[0].mxu0
  %v465 = vadd.f32 %v100, %v464
  %v466 = vpop.f32.mrb[0].mxu0
  %v467 = vpop.f32.mrb[0].mxu0
  %v468 = vadd.f32 %v100, %v467
  %v469 = vpop.f32.mrb[0].mxu0
  %470 = vmatprep.mubr.bf16.mxu0 0
  %471 = vmatmul.mubr.bf16.gmra.mrb[0].mxu0 %v242
  %v472 = vpop.f32.mrb[0].mxu0
  %v473 = vadd.f32 %v100, %v472
  %v474 = vpop.f32.mrb[0].mxu0
  %v475 = vpop.f32.mrb[0].mxu0
  %v476 = vadd.f32 %v100, %v475
  %v477 = vpop.f32.mrb[0].mxu0
  %478 = vmatprep.mubr.bf16.mxu0 0
  %479 = vmatmul.mubr.bf16.gmra.mrb[0].mxu0 %v243
  %v480 = vpop.f32.mrb[0].mxu0
  %v481 = vadd.f32 %v100, %v480
  %v482 = vpop.f32.mrb[0].mxu0
  %v483 = vpop.f32.mrb[0].mxu0
  %v484 = vadd.f32 %v100, %v483
  %v485 = vpop.f32.mrb[0].mxu0
  %486 = vmatprep.mubr.bf16.mxu0 0
  %487 = vmatmul.mubr.bf16.gmra.mrb[0].mxu0 %v244
  %v488 = vpop.f32.mrb[0].mxu0
  %v489 = vadd.f32 %v100, %v488
  %v490 = vpop.f32.mrb[0].mxu0
  %v491 = vpop.f32.mrb[0].mxu0
  %v492 = vadd.f32 %v100, %v491
  %v493 = vpop.f32.mrb[0].mxu0
  %494 = vmatprep.mubr.bf16.mxu0 0
  %495 = vmatmul.mubr.bf16.gmra.mrb[0].mxu0 %v245
  %v496 = vpop.f32.mrb[0].mxu0
  %v497 = vadd.f32 %v100, %v496
  %v498 = vpop.f32.mrb[0].mxu0
  %v499 = vpop.f32.mrb[0].mxu0
  %v500 = vadd.f32 %v100, %v499
  %v501 = vpop.f32.mrb[0].mxu0
  %502 = vmatprep.mubr.bf16.mxu0 0
  %503 = vmatmul.mubr.bf16.gmra.mrb[0].mxu0 %v246
  %v504 = vpop.f32.mrb[0].mxu0
  %v505 = vadd.f32 %v100, %v504
  %v506 = vpop.f32.mrb[0].mxu0
  %v507 = vpop.f32.mrb[0].mxu0
  %v508 = vadd.f32 %v100, %v507
  %v509 = vpop.f32.mrb[0].mxu0
  %510 = vmatprep.mubr.bf16.mxu0 0
  %511 = vmatmul.mubr.bf16.gmra.mrb[0].mxu0 %v247
  %v512 = vpop.f32.mrb[0].mxu0
  %v513 = vadd.f32 %v100, %v512
  %v514 = vpop.f32.mrb[0].mxu0
  %v515 = vpop.f32.mrb[0].mxu0
  %v516 = vadd.f32 %v100, %v515
  %v517 = vpop.f32.mrb[0].mxu0
  %518 = vmatprep.mubr.bf16.mxu0 0
  %519 = vmatmul.mubr.bf16.gmra.mrb[0].mxu0 %v248
  %v520 = vpop.f32.mrb[0].mxu0
  %v521 = vadd.f32 %v100, %v520
  %v522 = vpop.f32.mrb[0].mxu0
  %v523 = vpop.f32.mrb[0].mxu0
  %v524 = vadd.f32 %v100, %v523
  %v525 = vpop.f32.mrb[0].mxu0
  %526 = vmatprep.mubr.bf16.mxu0 0
  %527 = vmatmul.mubr.bf16.gmra.mrb[0].mxu0 %v249
  %v528 = vpop.f32.mrb[0].mxu0
  %v529 = vadd.f32 %v100, %v528
  %v530 = vpop.f32.mrb[0].mxu0
  %v531 = vpop.f32.mrb[0].mxu0
  %v532 = vadd.f32 %v100, %v531
  %v533 = vpop.f32.mrb[0].mxu0
  %534 = vmatprep.mubr.bf16.mxu0 0
  %535 = vmatmul.mubr.bf16.gmra.mrb[0].mxu0 %v250
  %v536 = vpop.f32.mrb[0].mxu0
  %v537 = vadd.f32 %v100, %v536
  %v538 = vpop.f32.mrb[0].mxu0
  %v539 = vpop.f32.mrb[0].mxu0
  %v540 = vadd.f32 %v100, %v539
  %v541 = vpop.f32.mrb[0].mxu0
  %542 = vmatprep.mubr.bf16.mxu0 0
  %543 = vmatmul.mubr.bf16.gmra.mrb[0].mxu0 %v251
  %v544 = vpop.f32.mrb[0].mxu0
  %v545 = vadd.f32 %v100, %v544
  %v546 = vpop.f32.mrb[0].mxu0
  %v547 = vpop.f32.mrb[0].mxu0
  %v548 = vadd.f32 %v100, %v547
  %v549 = vpop.f32.mrb[0].mxu0
  %550 = vmatprep.mubr.bf16.mxu0 0
  %551 = vmatmul.mubr.bf16.gmra.mrb[0].mxu0 %v252
  %v552 = vpop.f32.mrb[0].mxu0
  %v553 = vadd.f32 %v100, %v552
  %v554 = vpop.f32.mrb[0].mxu0
  %v555 = vpop.f32.mrb[0].mxu0
  %v556 = vadd.f32 %v100, %v555
  %v557 = vpop.f32.mrb[0].mxu0
  %558 = vmatprep.mubr.bf16.mxu0 0
  %559 = vmatmul.mubr.bf16.gmra.mrb[0].mxu0 %v253
  %v560 = vpop.f32.mrb[0].mxu0
  %v561 = vadd.f32 %v100, %v560
  %v562 = vpop.f32.mrb[0].mxu0
  %v563 = vpop.f32.mrb[0].mxu0
  %v564 = vadd.f32 %v100, %v563
  %v565 = vpop.f32.mrb[0].mxu0
  %566 = vmatprep.mubr.bf16.mxu0 0
  %567 = vmatmul.mubr.bf16.gmra.mrb[0].mxu0 %v254
  %v568 = vpop.f32.mrb[0].mxu0
  %v569 = vadd.f32 %v100, %v568
  %v570 = vpop.f32.mrb[0].mxu0
  %v571 = vpop.f32.mrb[0].mxu0
  %v572 = vadd.f32 %v100, %v571
  %v573 = vpop.f32.mrb[0].mxu0
  %574 = vmatprep.mubr.bf16.mxu0 0
  %575 = vmatmul.mubr.bf16.gmra.mrb[0].mxu0 %v255
  %v576 = vpop.f32.mrb[0].mxu0
  %v577 = vadd.f32 %v100, %v576
  %v578 = vpop.f32.mrb[0].mxu0
  %v579 = vpop.f32.mrb[0].mxu0
  %v580 = vadd.f32 %v100, %v579
  %v581 = vpop.f32.mrb[0].mxu0
  %582 = vmatprep.mubr.bf16.mxu0 0
  %583 = vmatmul.mubr.bf16.gmra.mrb[0].mxu0 %v256
  %v584 = vpop.f32.mrb[0].mxu0
  %v585 = vadd.f32 %v100, %v584
  %v586 = vpop.f32.mrb[0].mxu0
  %v587 = vpop.f32.mrb[0].mxu0
  %v588 = vadd.f32 %v100, %v587
  %v589 = vpop.f32.mrb[0].mxu0
  %590 = vmatprep.mubr.bf16.mxu0 0
  %591 = vmatmul.mubr.bf16.gmra.mrb[0].mxu0 %v257
  %v592 = vpop.f32.mrb[0].mxu0
  %v593 = vadd.f32 %v100, %v592
  %v594 = vpop.f32.mrb[0].mxu0
  %v595 = vpop.f32.mrb[0].mxu0
  %v596 = vadd.f32 %v100, %v595
  %v597 = vpop.f32.mrb[0].mxu0
  %598 = vmatprep.mubr.bf16.mxu0 0
  %599 = vmatmul.mubr.bf16.gmra.mrb[0].mxu0 %v258
  %v600 = vpop.f32.mrb[0].mxu0
  %v601 = vadd.f32 %v100, %v600
  %v602 = vpop.f32.mrb[0].mxu0
  %v603 = vpop.f32.mrb[0].mxu0
  %v604 = vadd.f32 %v100, %v603
  %v605 = vpop.f32.mrb[0].mxu0
  %606 = vmatprep.mubr.bf16.mxu0 0
  %607 = vmatmul.mubr.bf16.gmra.mrb[0].mxu0 %v259
  %v608 = vpop.f32.mrb[0].mxu0
  %v609 = vadd.f32 %v100, %v608
  %v610 = vpop.f32.mrb[0].mxu0
  %v611 = vpop.f32.mrb[0].mxu0
  %v612 = vadd.f32 %v100, %v611
  %v613 = vpop.f32.mrb[0].mxu0
  %614 = vmatprep.mubr.bf16.mxu0 0
  %615 = vmatmul.mubr.bf16.gmra.mrb[0].mxu0 %v260
  %v616 = vpop.f32.mrb[0].mxu0
  %v617 = vadd.f32 %v100, %v616
  %v618 = vpop.f32.mrb[0].mxu0
  %v619 = vpop.f32.mrb[0].mxu0
  %v620 = vadd.f32 %v100, %v619
  %v621 = vpop.f32.mrb[0].mxu0
  %622 = vmatprep.mubr.bf16.mxu0 0
  %623 = vmatmul.mubr.bf16.gmra.mrb[0].mxu0 %v261
  %v624 = vpop.f32.mrb[0].mxu0
  %v625 = vadd.f32 %v100, %v624
  %v626 = vpop.f32.mrb[0].mxu0
  %v627 = vpop.f32.mrb[0].mxu0
  %v628 = vadd.f32 %v100, %v627
  %v629 = vpop.f32.mrb[0].mxu0
  %630 = vdwg.mxu0
  %vm631 = vcmp.ge.f32.partialorder %v377, 0.0
  %vm632 = vcmp.ge.f32.partialorder %v380, 0.0
  %vm633 = vcmp.ge.f32.partialorder %v385, 0.0
  %vm634 = vcmp.ge.f32.partialorder %v388, 0.0
  %vm635 = vcmp.ge.f32.partialorder %v393, 0.0
  %vm636 = vcmp.ge.f32.partialorder %v396, 0.0
  %vm637 = vcmp.ge.f32.partialorder %v401, 0.0
  %vm638 = vcmp.ge.f32.partialorder %v404, 0.0
  %vm639 = vcmp.ge.f32.partialorder %v409, 0.0
  %vm640 = vcmp.ge.f32.partialorder %v412, 0.0
  %vm641 = vcmp.ge.f32.partialorder %v417, 0.0
  %vm642 = vcmp.ge.f32.partialorder %v420, 0.0
  %vm643 = vcmp.ge.f32.partialorder %v425, 0.0
  %vm644 = vcmp.ge.f32.partialorder %v428, 0.0
  %vm645 = vcmp.ge.f32.partialorder %v433, 0.0
  %vm646 = vcmp.ge.f32.partialorder %v436, 0.0
  %vm647 = vcmp.ge.f32.partialorder %v441, 0.0
  %vm648 = vcmp.ge.f32.partialorder %v444, 0.0
  %vm649 = vcmp.ge.f32.partialorder %v449, 0.0
  %vm650 = vcmp.ge.f32.partialorder %v452, 0.0
  %vm651 = vcmp.ge.f32.partialorder %v457, 0.0
  %vm652 = vcmp.ge.f32.partialorder %v460, 0.0
  %vm653 = vcmp.ge.f32.partialorder %v465, 0.0
  %vm654 = vcmp.ge.f32.partialorder %v468, 0.0
  %vm655 = vcmp.ge.f32.partialorder %v473, 0.0
  %vm656 = vcmp.ge.f32.partialorder %v476, 0.0
  %vm657 = vcmp.ge.f32.partialorder %v481, 0.0
  %vm658 = vcmp.ge.f32.partialorder %v484, 0.0
  %vm659 = vcmp.ge.f32.partialorder %v489, 0.0
  %vm660 = vcmp.ge.f32.partialorder %v492, 0.0
  %vm661 = vcmp.ge.f32.partialorder %v497, 0.0
  %vm662 = vcmp.ge.f32.partialorder %v500, 0.0
  %vm663 = vcmp.ge.f32.partialorder %v505, 0.0
  %vm664 = vcmp.ge.f32.partialorder %v508, 0.0
  %vm665 = vcmp.ge.f32.partialorder %v513, 0.0
  %vm666 = vcmp.ge.f32.partialorder %v516, 0.0
  %vm667 = vcmp.ge.f32.partialorder %v521, 0.0
  %vm668 = vcmp.ge.f32.partialorder %v524, 0.0
  %vm669 = vcmp.ge.f32.partialorder %v529, 0.0
  %vm670 = vcmp.ge.f32.partialorder %v532, 0.0
  %vm671 = vcmp.ge.f32.partialorder %v537, 0.0
  %vm672 = vcmp.ge.f32.partialorder %v540, 0.0
  %vm673 = vcmp.ge.f32.partialorder %v545, 0.0
  %vm674 = vcmp.ge.f32.partialorder %v548, 0.0
  %vm675 = vcmp.ge.f32.partialorder %v553, 0.0
  %vm676 = vcmp.ge.f32.partialorder %v556, 0.0
  %vm677 = vcmp.ge.f32.partialorder %v561, 0.0
  %vm678 = vcmp.ge.f32.partialorder %v564, 0.0
  %vm679 = vcmp.ge.f32.partialorder %v569, 0.0
  %vm680 = vcmp.ge.f32.partialorder %v572, 0.0
  %vm681 = vcmp.ge.f32.partialorder %v577, 0.0
  %vm682 = vcmp.ge.f32.partialorder %v580, 0.0
  %vm683 = vcmp.ge.f32.partialorder %v585, 0.0
  %vm684 = vcmp.ge.f32.partialorder %v588, 0.0
  %vm685 = vcmp.ge.f32.partialorder %v593, 0.0
  %vm686 = vcmp.ge.f32.partialorder %v596, 0.0
  %vm687 = vcmp.ge.f32.partialorder %v601, 0.0
  %vm688 = vcmp.ge.f32.partialorder %v604, 0.0
  %vm689 = vcmp.ge.f32.partialorder %v609, 0.0
  %vm690 = vcmp.ge.f32.partialorder %v612, 0.0
  %vm691 = vcmp.ge.f32.partialorder %v617, 0.0
  %vm692 = vcmp.ge.f32.partialorder %v620, 0.0
  %vm693 = vcmp.ge.f32.partialorder %v625, 0.0
  %vm694 = vcmp.ge.f32.partialorder %v628, 0.0
  %v695 = vmul.f32 %v377, 0.2
  %v696 = vmul.f32 %v380, 0.2
  %v697 = vmul.f32 %v385, 0.2
  %v698 = vmul.f32 %v388, 0.2
  %v699 = vmul.f32 %v393, 0.2
  %v700 = vmul.f32 %v396, 0.2
  %v701 = vmul.f32 %v401, 0.2
  %v702 = vmul.f32 %v404, 0.2
  %v703 = vmul.f32 %v409, 0.2
  %v704 = vmul.f32 %v412, 0.2
  %v705 = vmul.f32 %v417, 0.2
  %v706 = vmul.f32 %v420, 0.2
  %v707 = vmul.f32 %v425, 0.2
  %v708 = vmul.f32 %v428, 0.2
  %v709 = vmul.f32 %v433, 0.2
  %v710 = vmul.f32 %v436, 0.2
  %v711 = vmul.f32 %v441, 0.2
  %v712 = vmul.f32 %v444, 0.2
  %v713 = vmul.f32 %v449, 0.2
  %v714 = vmul.f32 %v452, 0.2
  %v715 = vmul.f32 %v457, 0.2
  %v716 = vmul.f32 %v460, 0.2
  %v717 = vmul.f32 %v465, 0.2
  %v718 = vmul.f32 %v468, 0.2
  %v719 = vmul.f32 %v473, 0.2
  %v720 = vmul.f32 %v476, 0.2
  %v721 = vmul.f32 %v481, 0.2
  %v722 = vmul.f32 %v484, 0.2
  %v723 = vmul.f32 %v489, 0.2
  %v724 = vmul.f32 %v492, 0.2
  %v725 = vmul.f32 %v497, 0.2
  %v726 = vmul.f32 %v500, 0.2
  %v727 = vmul.f32 %v505, 0.2
  %v728 = vmul.f32 %v508, 0.2
  %v729 = vmul.f32 %v513, 0.2
  %v730 = vmul.f32 %v516, 0.2
  %v731 = vmul.f32 %v521, 0.2
  %v732 = vmul.f32 %v524, 0.2
  %v733 = vmul.f32 %v529, 0.2
  %v734 = vmul.f32 %v532, 0.2
  %v735 = vmul.f32 %v537, 0.2
  %v736 = vmul.f32 %v540, 0.2
  %v737 = vmul.f32 %v545, 0.2
  %v738 = vmul.f32 %v548, 0.2
  %v739 = vmul.f32 %v553, 0.2
  %v740 = vmul.f32 %v556, 0.2
  %v741 = vmul.f32 %v561, 0.2
  %v742 = vmul.f32 %v564, 0.2
  %v743 = vmul.f32 %v569, 0.2
  %v744 = vmul.f32 %v572, 0.2
  %v745 = vmul.f32 %v577, 0.2
  %v746 = vmul.f32 %v580, 0.2
  %v747 = vmul.f32 %v585, 0.2
  %v748 = vmul.f32 %v588, 0.2
  %v749 = vmul.f32 %v593, 0.2
  %v750 = vmul.f32 %v596, 0.2
  %v751 = vmul.f32 %v601, 0.2
  %v752 = vmul.f32 %v604, 0.2
  %v753 = vmul.f32 %v609, 0.2
  %v754 = vmul.f32 %v612, 0.2
  %v755 = vmul.f32 %v617, 0.2
  %v756 = vmul.f32 %v620, 0.2
  %v757 = vmul.f32 %v625, 0.2
  %v758 = vmul.f32 %v628, 0.2
  %v759 = vsel %vm631, %v377, %v695
  %v760 = vsel %vm632, %v380, %v696
  %v761 = vsel %vm633, %v385, %v697
  %v762 = vsel %vm634, %v388, %v698
  %v763 = vsel %vm635, %v393, %v699
  %v764 = vsel %vm636, %v396, %v700
  %v765 = vsel %vm637, %v401, %v701
  %v766 = vsel %vm638, %v404, %v702
  %v767 = vsel %vm639, %v409, %v703
  %v768 = vsel %vm640, %v412, %v704
  %v769 = vsel %vm641, %v417, %v705
  %v770 = vsel %vm642, %v420, %v706
  %v771 = vsel %vm643, %v425, %v707
  %v772 = vsel %vm644, %v428, %v708
  %v773 = vsel %vm645, %v433, %v709
  %v774 = vsel %vm646, %v436, %v710
  %v775 = vsel %vm647, %v441, %v711
  %v776 = vsel %vm648, %v444, %v712
  %v777 = vsel %vm649, %v449, %v713
  %v778 = vsel %vm650, %v452, %v714
  %v779 = vsel %vm651, %v457, %v715
  %v780 = vsel %vm652, %v460, %v716
  %v781 = vsel %vm653, %v465, %v717
  %v782 = vsel %vm654, %v468, %v718
  %v783 = vsel %vm655, %v473, %v719
  %v784 = vsel %vm656, %v476, %v720
  %v785 = vsel %vm657, %v481, %v721
  %v786 = vsel %vm658, %v484, %v722
  %v787 = vsel %vm659, %v489, %v723
  %v788 = vsel %vm660, %v492, %v724
  %v789 = vsel %vm661, %v497, %v725
  %v790 = vsel %vm662, %v500, %v726
  %v791 = vsel %vm663, %v505, %v727
  %v792 = vsel %vm664, %v508, %v728
  %v793 = vsel %vm665, %v513, %v729
  %v794 = vsel %vm666, %v516, %v730
  %v795 = vsel %vm667, %v521, %v731
  %v796 = vsel %vm668, %v524, %v732
  %v797 = vsel %vm669, %v529, %v733
  %v798 = vsel %vm670, %v532, %v734
  %v799 = vsel %vm671, %v537, %v735
  %v800 = vsel %vm672, %v540, %v736
  %v801 = vsel %vm673, %v545, %v737
  %v802 = vsel %vm674, %v548, %v738
  %v803 = vsel %vm675, %v553, %v739
  %v804 = vsel %vm676, %v556, %v740
  %v805 = vsel %vm677, %v561, %v741
  %v806 = vsel %vm678, %v564, %v742
  %v807 = vsel %vm679, %v569, %v743
  %v808 = vsel %vm680, %v572, %v744
  %v809 = vsel %vm681, %v577, %v745
  %v810 = vsel %vm682, %v580, %v746
  %v811 = vsel %vm683, %v585, %v747
  %v812 = vsel %vm684, %v588, %v748
  %v813 = vsel %vm685, %v593, %v749
  %v814 = vsel %vm686, %v596, %v750
  %v815 = vsel %vm687, %v601, %v751
  %v816 = vsel %vm688, %v604, %v752
  %v817 = vsel %vm689, %v609, %v753
  %v818 = vsel %vm690, %v612, %v754
  %v819 = vsel %vm691, %v617, %v755
  %v820 = vsel %vm692, %v620, %v756
  %v821 = vsel %vm693, %v625, %v757
  %v822 = vsel %vm694, %v628, %v758
  %v823 = vpack.c.bf16 %v760, %v759
  %v824 = vpack.c.bf16 %v762, %v761
  %v825 = vpack.c.bf16 %v764, %v763
  %v826 = vpack.c.bf16 %v766, %v765
  %v827 = vpack.c.bf16 %v768, %v767
  %v828 = vpack.c.bf16 %v770, %v769
  %v829 = vpack.c.bf16 %v772, %v771
  %v830 = vpack.c.bf16 %v774, %v773
  %v831 = vpack.c.bf16 %v776, %v775
  %v832 = vpack.c.bf16 %v778, %v777
  %v833 = vpack.c.bf16 %v780, %v779
  %v834 = vpack.c.bf16 %v782, %v781
  %v835 = vpack.c.bf16 %v784, %v783
  %v836 = vpack.c.bf16 %v786, %v785
  %v837 = vpack.c.bf16 %v788, %v787
  %v838 = vpack.c.bf16 %v790, %v789
  %v839 = vpack.c.bf16 %v792, %v791
  %v840 = vpack.c.bf16 %v794, %v793
  %v841 = vpack.c.bf16 %v796, %v795
  %v842 = vpack.c.bf16 %v798, %v797
  %v843 = vpack.c.bf16 %v800, %v799
  %v844 = vpack.c.bf16 %v802, %v801
  %v845 = vpack.c.bf16 %v804, %v803
  %v846 = vpack.c.bf16 %v806, %v805
  %v847 = vpack.c.bf16 %v808, %v807
  %v848 = vpack.c.bf16 %v810, %v809
  %v849 = vpack.c.bf16 %v812, %v811
  %v850 = vpack.c.bf16 %v814, %v813
  %v851 = vpack.c.bf16 %v816, %v815
  %v852 = vpack.c.bf16 %v818, %v817
  %v853 = vpack.c.bf16 %v820, %v819
  %v854 = vpack.c.bf16 %v822, %v821
  %v887 = vunpack.c.l.b16 %v823
  %v888 = vunpack.c.h.b16 %v823
  %v889 = vunpack.c.l.b16 %v824
  %v890 = vunpack.c.h.b16 %v824
  %v891 = vunpack.c.l.b16 %v825
  %v892 = vunpack.c.h.b16 %v825
  %v893 = vunpack.c.l.b16 %v826
  %v894 = vunpack.c.h.b16 %v826
  %v895 = vunpack.c.l.b16 %v827
  %v896 = vunpack.c.h.b16 %v827
  %v897 = vunpack.c.l.b16 %v828
  %v898 = vunpack.c.h.b16 %v828
  %v899 = vunpack.c.l.b16 %v829
  %v900 = vunpack.c.h.b16 %v829
  %v901 = vunpack.c.l.b16 %v830
  %v902 = vunpack.c.h.b16 %v830
  %v903 = vunpack.c.l.b16 %v831
  %v904 = vunpack.c.h.b16 %v831
  %v905 = vunpack.c.l.b16 %v832
  %v906 = vunpack.c.h.b16 %v832
  %v907 = vunpack.c.l.b16 %v833
  %v908 = vunpack.c.h.b16 %v833
  %v909 = vunpack.c.l.b16 %v834
  %v910 = vunpack.c.h.b16 %v834
  %v911 = vunpack.c.l.b16 %v835
  %v912 = vunpack.c.h.b16 %v835
  %v913 = vunpack.c.l.b16 %v836
  %v914 = vunpack.c.h.b16 %v836
  %v915 = vunpack.c.l.b16 %v837
  %v916 = vunpack.c.h.b16 %v837
  %v917 = vunpack.c.l.b16 %v838
  %v918 = vunpack.c.h.b16 %v838
  %v919 = vunpack.c.l.b16 %v839
  %v920 = vunpack.c.h.b16 %v839
  %v921 = vunpack.c.l.b16 %v840
  %v922 = vunpack.c.h.b16 %v840
  %v923 = vunpack.c.l.b16 %v841
  %v924 = vunpack.c.h.b16 %v841
  %v925 = vunpack.c.l.b16 %v842
  %v926 = vunpack.c.h.b16 %v842
  %v927 = vunpack.c.l.b16 %v843
  %v928 = vunpack.c.h.b16 %v843
  %v929 = vunpack.c.l.b16 %v844
  %v930 = vunpack.c.h.b16 %v844
  %v931 = vunpack.c.l.b16 %v845
  %v932 = vunpack.c.h.b16 %v845
  %v933 = vunpack.c.l.b16 %v846
  %v934 = vunpack.c.h.b16 %v846
  %v935 = vunpack.c.l.b16 %v847
  %v936 = vunpack.c.h.b16 %v847
  %v937 = vunpack.c.l.b16 %v848
  %v938 = vunpack.c.h.b16 %v848
  %v939 = vunpack.c.l.b16 %v849
  %v940 = vunpack.c.h.b16 %v849
  %v941 = vunpack.c.l.b16 %v850
  %v942 = vunpack.c.h.b16 %v850
  %v943 = vunpack.c.l.b16 %v851
  %v944 = vunpack.c.h.b16 %v851
  %v945 = vunpack.c.l.b16 %v852
  %v946 = vunpack.c.h.b16 %v852
  %v947 = vunpack.c.l.b16 %v853
  %v948 = vunpack.c.h.b16 %v853
  %v949 = vunpack.c.l.b16 %v854
  %v950 = vunpack.c.h.b16 %v854
  %v951 = vpack.c.b16 %v887, %v887
  %v952 = vpack.c.b16 %v888, %v888
  %v953 = vpack.c.b16 %v889, %v889
  %v954 = vpack.c.b16 %v890, %v890
  %v955 = vpack.c.b16 %v891, %v891
  %v956 = vpack.c.b16 %v892, %v892
  %v957 = vpack.c.b16 %v893, %v893
  %v958 = vpack.c.b16 %v894, %v894
  %v959 = vpack.c.b16 %v895, %v895
  %v960 = vpack.c.b16 %v896, %v896
  %v961 = vpack.c.b16 %v897, %v897
  %v962 = vpack.c.b16 %v898, %v898
  %v963 = vpack.c.b16 %v899, %v899
  %v964 = vpack.c.b16 %v900, %v900
  %v965 = vpack.c.b16 %v901, %v901
  %v966 = vpack.c.b16 %v902, %v902
  %v967 = vpack.c.b16 %v903, %v903
  %v968 = vpack.c.b16 %v904, %v904
  %v969 = vpack.c.b16 %v905, %v905
  %v970 = vpack.c.b16 %v906, %v906
  %v971 = vpack.c.b16 %v907, %v907
  %v972 = vpack.c.b16 %v908, %v908
  %v973 = vpack.c.b16 %v909, %v909
  %v974 = vpack.c.b16 %v910, %v910
  %v975 = vpack.c.b16 %v911, %v911
  %v976 = vpack.c.b16 %v912, %v912
  %v977 = vpack.c.b16 %v913, %v913
  %v978 = vpack.c.b16 %v914, %v914
  %v979 = vpack.c.b16 %v915, %v915
  %v980 = vpack.c.b16 %v916, %v916
  %v981 = vpack.c.b16 %v917, %v917
  %v982 = vpack.c.b16 %v918, %v918
  %v983 = vpack.c.b16 %v919, %v919
  %v984 = vpack.c.b16 %v920, %v920
  %v985 = vpack.c.b16 %v921, %v921
  %v986 = vpack.c.b16 %v922, %v922
  %v987 = vpack.c.b16 %v923, %v923
  %v988 = vpack.c.b16 %v924, %v924
  %v989 = vpack.c.b16 %v925, %v925
  %v990 = vpack.c.b16 %v926, %v926
  %v991 = vpack.c.b16 %v927, %v927
  %v992 = vpack.c.b16 %v928, %v928
  %v993 = vpack.c.b16 %v929, %v929
  %v994 = vpack.c.b16 %v930, %v930
  %v995 = vpack.c.b16 %v931, %v931
  %v996 = vpack.c.b16 %v932, %v932
  %v997 = vpack.c.b16 %v933, %v933
  %v998 = vpack.c.b16 %v934, %v934
  %v999 = vpack.c.b16 %v935, %v935
  %v1000 = vpack.c.b16 %v936, %v936
  %v1001 = vpack.c.b16 %v937, %v937
  %v1002 = vpack.c.b16 %v938, %v938
  %v1003 = vpack.c.b16 %v939, %v939
  %v1004 = vpack.c.b16 %v940, %v940
  %v1005 = vpack.c.b16 %v941, %v941
  %v1006 = vpack.c.b16 %v942, %v942
  %v1007 = vpack.c.b16 %v943, %v943
  %v1008 = vpack.c.b16 %v944, %v944
  %v1009 = vpack.c.b16 %v945, %v945
  %v1010 = vpack.c.b16 %v946, %v946
  %v1011 = vpack.c.b16 %v947, %v947
  %v1012 = vpack.c.b16 %v948, %v948
  %v1013 = vpack.c.b16 %v949, %v949
  %v1014 = vpack.c.b16 %v950, %v950
  %1079 = vst [vmem:[%s3] sm:$0xf] %v951
  %1080 = vst [vmem:[%s3 + $0x4] sm:$0xf] %v952
  %1081 = vst [vmem:[%s3 + $0x8] sm:$0xf] %v953
  %1082 = vst [vmem:[%s3 + $0xc] sm:$0xf] %v954
  %1083 = vst [vmem:[%s3 + $0x10] sm:$0xf] %v955
  %1084 = vst [vmem:[%s3 + $0x14] sm:$0xf] %v956
  %1085 = vst [vmem:[%s3 + $0x18] sm:$0xf] %v957
  %1086 = vst [vmem:[%s3 + $0x1c] sm:$0xf] %v958
  %1087 = vst [vmem:[%s3 + $0x20] sm:$0xf] %v959
  %1088 = vst [vmem:[%s3 + $0x24] sm:$0xf] %v960
  %1089 = vst [vmem:[%s3 + $0x28] sm:$0xf] %v961
  %1090 = vst [vmem:[%s3 + $0x2c] sm:$0xf] %v962
  %1091 = vst [vmem:[%s3 + $0x30] sm:$0xf] %v963
  %1092 = vst [vmem:[%s3 + $0x34] sm:$0xf] %v964
  %1093 = vst [vmem:[%s3 + $0x38] sm:$0xf] %v965
  %1094 = vst [vmem:[%s3 + $0x3c] sm:$0xf] %v966
  %1095 = vst [vmem:[%s3 + $0x40] sm:$0xf] %v967
  %1096 = vst [vmem:[%s3 + $0x44] sm:$0xf] %v968
  %1097 = vst [vmem:[%s3 + $0x48] sm:$0xf] %v969
  %1098 = vst [vmem:[%s3 + $0x4c] sm:$0xf] %v970
  %1099 = vst [vmem:[%s3 + $0x50] sm:$0xf] %v971
  %1100 = vst [vmem:[%s3 + $0x54] sm:$0xf] %v972
  %1101 = vst [vmem:[%s3 + $0x58] sm:$0xf] %v973
  %1102 = vst [vmem:[%s3 + $0x5c] sm:$0xf] %v974
  %1103 = vst [vmem:[%s3 + $0x60] sm:$0xf] %v975
  %1104 = vst [vmem:[%s3 + $0x64] sm:$0xf] %v976
  %1105 = vst [vmem:[%s3 + $0x68] sm:$0xf] %v977
  %1106 = vst [vmem:[%s3 + $0x6c] sm:$0xf] %v978
  %1107 = vst [vmem:[%s3 + $0x70] sm:$0xf] %v979
  %1108 = vst [vmem:[%s3 + $0x74] sm:$0xf] %v980
  %1109 = vst [vmem:[%s3 + $0x78] sm:$0xf] %v981
  %1110 = vst [vmem:[%s3 + $0x7c] sm:$0xf] %v982
  %1111 = vst [vmem:[%s3 + $0x80] sm:$0xf] %v983
  %1112 = vst [vmem:[%s3 + $0x84] sm:$0xf] %v984
  %1113 = vst [vmem:[%s3 + $0x88] sm:$0xf] %v985
  %1114 = vst [vmem:[%s3 + $0x8c] sm:$0xf] %v986
  %1115 = vst [vmem:[%s3 + $0x90] sm:$0xf] %v987
  %1116 = vst [vmem:[%s3 + $0x94] sm:$0xf] %v988
  %1117 = vst [vmem:[%s3 + $0x98] sm:$0xf] %v989
  %1118 = vst [vmem:[%s3 + $0x9c] sm:$0xf] %v990
  %1119 = vst [vmem:[%s3 + $0xa0] sm:$0xf] %v991
  %1120 = vst [vmem:[%s3 + $0xa4] sm:$0xf] %v992
  %1121 = vst [vmem:[%s3 + $0xa8] sm:$0xf] %v993
  %1122 = vst [vmem:[%s3 + $0xac] sm:$0xf] %v994
  %1123 = vst [vmem:[%s3 + $0xb0] sm:$0xf] %v995
  %1124 = vst [vmem:[%s3 + $0xb4] sm:$0xf] %v996
  %1125 = vst [vmem:[%s3 + $0xb8] sm:$0xf] %v997
  %1126 = vst [vmem:[%s3 + $0xbc] sm:$0xf] %v998
  %1127 = vst [vmem:[%s3 + $0xc0] sm:$0xf] %v999
  %1128 = vst [vmem:[%s3 + $0xc4] sm:$0xf] %v1000
  %1129 = vst [vmem:[%s3 + $0xc8] sm:$0xf] %v1001
  %1130 = vst [vmem:[%s3 + $0xcc] sm:$0xf] %v1002
  %1131 = vst [vmem:[%s3 + $0xd0] sm:$0xf] %v1003
  %1132 = vst [vmem:[%s3 + $0xd4] sm:$0xf] %v1004
  %1133 = vst [vmem:[%s3 + $0xd8] sm:$0xf] %v1005
  %1134 = vst [vmem:[%s3 + $0xdc] sm:$0xf] %v1006
  %1135 = vst [vmem:[%s3 + $0xe0] sm:$0xf] %v1007
  %1136 = vst [vmem:[%s3 + $0xe4] sm:$0xf] %v1008
  %1137 = vst [vmem:[%s3 + $0xe8] sm:$0xf] %v1009
  %1138 = vst [vmem:[%s3 + $0xec] sm:$0xf] %v1010
  %1139 = vst [vmem:[%s3 + $0xf0] sm:$0xf] %v1011
  %1140 = vst [vmem:[%s3 + $0xf4] sm:$0xf] %v1012
  %1141 = vst [vmem:[%s3 + $0xf8] sm:$0xf] %v1013
  %1142 = vst [vmem:[%s3 + $0xfc] sm:$0xf] %v1014
  // Predicated region
  $region14: #{_lambda_.8} parent=0 // pred_check
    _
  $region15: #{_lambda_.8} parent=0 // pred_check_branch
    %1144 = sbr.rel (0) target = $region17
  $region16: #{_lambda_.8} parent=0 // pred_region
    _
  $region17: #{_lambda_.8} parent=0 // pred_fallthru
    _
  // Predicated region
  $region18: #{_lambda_.8} parent=0 // pred_check
    _
  $region19: #{_lambda_.8} parent=0 // pred_check_branch
    %1146 = sbr.rel (0) target = $region21
  $region20: #{_lambda_.8} parent=0 // pred_region
    _
  $region21: #{_lambda_.8} parent=0 // pred_fallthru
    _

// kernel: _lambda_.9
$region0: #{_lambda_.9}
  #allocation0 [shape = 'u32[]', space=smem, size = 0x4, offset = 0x4, fixed_abs, tag = 'smem constant byte address 0x4 - core index']
  #allocation1 [shape = 'u32[144,128]{1,0:T(1,128)}', space=vmem, size = 0x12000, scoped, tag = 'internal scratch']
  %s0 = inlined_call_operand.vmem [shape: bf16[128,128], index: 0, kind: input, shape index: {}]
  %s1 = inlined_call_operand.vmem [shape: bf16[128,128], index: 1, kind: input, shape index: {}]
  %s2 = inlined_call_operand.vmem [shape: f32[128,128], index: 2, kind: output, shape index: {0}]
  %s3 = inlined_call_operand.vmem [shape: f32[1,128], index: 3, kind: output, shape index: {1}]
  %s4 = inlined_call_operand.vmem [shape: f32[1,128], index: 4, kind: output, shape index: {2}]
  %5 = xla_tuple %s2, %s3, %s4
  %s6 = sld [smem:[#allocation0]]
  $region38: #{_lambda_.9} parent=0
    _
  %s8 = ssub.s32 1, %s6
  %s9 = scalar_select 0, %s8, %s6
  // Predicated region
  $region2: #{_lambda_.9} parent=0 // pred_check
    _
  $region3: #{_lambda_.9} parent=0 // pred_check_branch
    %11 = sbr.rel (0) target = $region5
  $region4: #{_lambda_.9} parent=0 // pred_region
    _
  $region5: #{_lambda_.9} parent=0 // pred_fallthru
    _
  // Predicated region
  $region6: #{_lambda_.9} parent=0 // pred_check
    _
  $region7: #{_lambda_.9} parent=0 // pred_check_branch
    %13 = sbr.rel (0) target = $region9
  $region8: #{_lambda_.9} parent=0 // pred_region
    _
  $region9: #{_lambda_.9} parent=0 // pred_fallthru
    _
  %v15 = vld [vmem:[%s0] sm:$0xf]
  %v16 = vld [vmem:[%s0 + $0x4] sm:$0xf]
  %v17 = vld [vmem:[%s0 + $0x8] sm:$0xf]
  %v18 = vld [vmem:[%s0 + $0xc] sm:$0xf]
  %v19 = vld [vmem:[%s0 + $0x10] sm:$0xf]
  %v20 = vld [vmem:[%s0 + $0x14] sm:$0xf]
  %v21 = vld [vmem:[%s0 + $0x18] sm:$0xf]
  %v22 = vld [vmem:[%s0 + $0x1c] sm:$0xf]
  %v23 = vld [vmem:[%s0 + $0x20] sm:$0xf]
  %v24 = vld [vmem:[%s0 + $0x24] sm:$0xf]
  %v25 = vld [vmem:[%s0 + $0x28] sm:$0xf]
  %v26 = vld [vmem:[%s0 + $0x2c] sm:$0xf]
  %v27 = vld [vmem:[%s0 + $0x30] sm:$0xf]
  %v28 = vld [vmem:[%s0 + $0x34] sm:$0xf]
  %v29 = vld [vmem:[%s0 + $0x38] sm:$0xf]
  %v30 = vld [vmem:[%s0 + $0x3c] sm:$0xf]
  %v31 = vld [vmem:[%s1] sm:$0xf]
  %v32 = vld [vmem:[%s1 + $0x4] sm:$0xf]
  %v33 = vld [vmem:[%s1 + $0x8] sm:$0xf]
  %v34 = vld [vmem:[%s1 + $0xc] sm:$0xf]
  %v35 = vld [vmem:[%s1 + $0x10] sm:$0xf]
  %v36 = vld [vmem:[%s1 + $0x14] sm:$0xf]
  %v37 = vld [vmem:[%s1 + $0x18] sm:$0xf]
  %v38 = vld [vmem:[%s1 + $0x1c] sm:$0xf]
  %v39 = vld [vmem:[%s1 + $0x20] sm:$0xf]
  %v40 = vld [vmem:[%s1 + $0x24] sm:$0xf]
  %v41 = vld [vmem:[%s1 + $0x28] sm:$0xf]
  %v42 = vld [vmem:[%s1 + $0x2c] sm:$0xf]
  %v43 = vld [vmem:[%s1 + $0x30] sm:$0xf]
  %v44 = vld [vmem:[%s1 + $0x34] sm:$0xf]
  %v45 = vld [vmem:[%s1 + $0x38] sm:$0xf]
  %v46 = vld [vmem:[%s1 + $0x3c] sm:$0xf]
  %v63 = vunpack.c.l.b16 %v15
  %v64 = vunpack.c.l.b16 %v16
  %v65 = vunpack.c.l.b16 %v17
  %v66 = vunpack.c.l.b16 %v18
  %v67 = vunpack.c.l.b16 %v19
  %v68 = vunpack.c.l.b16 %v20
  %v69 = vunpack.c.l.b16 %v21
  %v70 = vunpack.c.l.b16 %v22
  %v71 = vunpack.c.l.b16 %v23
  %v72 = vunpack.c.l.b16 %v24
  %v73 = vunpack.c.l.b16 %v25
  %v74 = vunpack.c.l.b16 %v26
  %v75 = vunpack.c.l.b16 %v27
  %v76 = vunpack.c.l.b16 %v28
  %v77 = vunpack.c.l.b16 %v29
  %v78 = vunpack.c.l.b16 %v30
  %v79 = vpack.c.b16 %v64, %v63
  %v80 = vpack.c.b16 %v66, %v65
  %v81 = vpack.c.b16 %v68, %v67
  %v82 = vpack.c.b16 %v70, %v69
  %v83 = vpack.c.b16 %v72, %v71
  %v84 = vpack.c.b16 %v74, %v73
  %v85 = vpack.c.b16 %v76, %v75
  %v86 = vpack.c.b16 %v78, %v77
  %v111 = vunpack.c.l.b16 %v31
  %v112 = vunpack.c.l.b16 %v32
  %v113 = vunpack.c.l.b16 %v33
  %v114 = vunpack.c.l.b16 %v34
  %v115 = vunpack.c.l.b16 %v35
  %v116 = vunpack.c.l.b16 %v36
  %v117 = vunpack.c.l.b16 %v37
  %v118 = vunpack.c.l.b16 %v38
  %v119 = vunpack.c.l.b16 %v39
  %v120 = vunpack.c.l.b16 %v40
  %v121 = vunpack.c.l.b16 %v41
  %v122 = vunpack.c.l.b16 %v42
  %v123 = vunpack.c.l.b16 %v43
  %v124 = vunpack.c.l.b16 %v44
  %v125 = vunpack.c.l.b16 %v45
  %v126 = vunpack.c.l.b16 %v46
  %v127 = vpack.c.b16 %v112, %v111
  %v128 = vpack.c.b16 %v114, %v113
  %v129 = vpack.c.b16 %v116, %v115
  %v130 = vpack.c.b16 %v118, %v117
  %v131 = vpack.c.b16 %v120, %v119
  %v132 = vpack.c.b16 %v122, %v121
  %v133 = vpack.c.b16 %v124, %v123
  %v134 = vpack.c.b16 %v126, %v125
  %143 = vmatprep.subr.bf16.mxu0 0
  %144 = vmatpush1.bf16.msra.mxu0 %v127
  %145 = vmatprep.subr.bf16.mxu0 0
  %146 = vmatpush1.bf16.msra.mxu0 %v128
  %147 = vmatprep.subr.bf16.mxu0 0
  %148 = vmatpush1.bf16.msra.mxu0 %v129
  %149 = vmatprep.subr.bf16.mxu0 0
  %150 = vmatpush1.bf16.msra.mxu0 %v130
  %151 = vmatprep.subr.bf16.mxu0 0
  %152 = vmatpush1.bf16.msra.mxu0 %v131
  %153 = vmatprep.subr.bf16.mxu0 0
  %154 = vmatpush1.bf16.msra.mxu0 %v132
  %155 = vmatprep.subr.bf16.mxu0 0
  %156 = vmatpush1.bf16.msra.mxu0 %v133
  %157 = vmatprep.subr.bf16.mxu0 0
  %158 = vmatpush1.bf16.msra.mxu0 %v134
  %159 = vmatprep.subr.bf16.mxu0 0
  %160 = vmatpush1.bf16.msra.mxu0 0
  %161 = vmatprep.subr.bf16.mxu0 0
  %162 = vmatpush1.bf16.msra.mxu0 0
  %163 = vmatprep.subr.bf16.mxu0 0
  %164 = vmatpush1.bf16.msra.mxu0 0
  %165 = vmatprep.subr.bf16.mxu0 0
  %166 = vmatpush1.bf16.msra.mxu0 0
  %167 = vmatprep.subr.bf16.mxu0 0
  %168 = vmatpush1.bf16.msra.mxu0 0
  %169 = vmatprep.subr.bf16.mxu0 0
  %170 = vmatpush1.bf16.msra.mxu0 0
  %171 = vmatprep.subr.bf16.mxu0 0
  %172 = vmatpush1.bf16.msra.mxu0 0
  %173 = vmatprep.subr.bf16.mxu0 0
  %174 = vmatpush1.bf16.msra.mxu0 0
  %175 = vmatprep.mubr.bf16.mxu0 0
  %176 = vmatmul.mubr.bf16.gmra.mrb[0].mxu0 %v79
  %v177 = vpop.f32.mrb[0].mxu0
  %v178 = vadd.f32 0.0, %v177
  %v179 = vpop.f32.mrb[0].mxu0
  %v180 = vpop.f32.mrb[0].mxu0
  %v181 = vadd.f32 0.0, %v180
  %v182 = vpop.f32.mrb[0].mxu0
  %183 = vmatprep.mubr.bf16.mxu0 0
  %184 = vmatmul.mubr.bf16.gmra.mrb[0].mxu0 %v80
  %v185 = vpop.f32.mrb[0].mxu0
  %v186 = vadd.f32 0.0, %v185
  %v187 = vpop.f32.mrb[0].mxu0
  %v188 = vpop.f32.mrb[0].mxu0
  %v189 = vadd.f32 0.0, %v188
  %v190 = vpop.f32.mrb[0].mxu0
  %191 = vmatprep.mubr.bf16.mxu0 0
  %192 = vmatmul.mubr.bf16.gmra.mrb[0].mxu0 %v81
  %v193 = vpop.f32.mrb[0].mxu0
  %v194 = vadd.f32 0.0, %v193
  %v195 = vpop.f32.mrb[0].mxu0
  %v196 = vpop.f32.mrb[0].mxu0
  %v197 = vadd.f32 0.0, %v196
  %v198 = vpop.f32.mrb[0].mxu0
  %199 = vmatprep.mubr.bf16.mxu0 0
  %200 = vmatmul.mubr.bf16.gmra.mrb[0].mxu0 %v82
  %v201 = vpop.f32.mrb[0].mxu0
  %v202 = vadd.f32 0.0, %v201
  %v203 = vpop.f32.mrb[0].mxu0
  %v204 = vpop.f32.mrb[0].mxu0
  %v205 = vadd.f32 0.0, %v204
  %v206 = vpop.f32.mrb[0].mxu0
  %207 = vmatprep.mubr.bf16.mxu0 0
  %208 = vmatmul.mubr.bf16.gmra.mrb[0].mxu0 %v83
  %v209 = vpop.f32.mrb[0].mxu0
  %v210 = vadd.f32 0.0, %v209
  %v211 = vpop.f32.mrb[0].mxu0
  %v212 = vpop.f32.mrb[0].mxu0
  %v213 = vadd.f32 0.0, %v212
  %v214 = vpop.f32.mrb[0].mxu0
  %215 = vmatprep.mubr.bf16.mxu0 0
  %216 = vmatmul.mubr.bf16.gmra.mrb[0].mxu0 %v84
  %v217 = vpop.f32.mrb[0].mxu0
  %v218 = vadd.f32 0.0, %v217
  %v219 = vpop.f32.mrb[0].mxu0
  %v220 = vpop.f32.mrb[0].mxu0
  %v221 = vadd.f32 0.0, %v220
  %v222 = vpop.f32.mrb[0].mxu0
  %223 = vmatprep.mubr.bf16.mxu0 0
  %224 = vmatmul.mubr.bf16.gmra.mrb[0].mxu0 %v85
  %v225 = vpop.f32.mrb[0].mxu0
  %v226 = vadd.f32 0.0, %v225
  %v227 = vpop.f32.mrb[0].mxu0
  %v228 = vpop.f32.mrb[0].mxu0
  %v229 = vadd.f32 0.0, %v228
  %v230 = vpop.f32.mrb[0].mxu0
  %231 = vmatprep.mubr.bf16.mxu0 0
  %232 = vmatmul.mubr.bf16.gmra.mrb[0].mxu0 %v86
  %v233 = vpop.f32.mrb[0].mxu0
  %v234 = vadd.f32 0.0, %v233
  %v235 = vpop.f32.mrb[0].mxu0
  %v236 = vpop.f32.mrb[0].mxu0
  %v237 = vadd.f32 0.0, %v236
  %v238 = vpop.f32.mrb[0].mxu0
  %239 = vdwg.mxu0
  %240 = vst [vmem:[%s2] sm:$0xff] %v178
  %241 = vst [vmem:[%s2 + $0x8] sm:$0xff] %v181
  %242 = vst [vmem:[%s2 + $0x10] sm:$0xff] %v186
  %243 = vst [vmem:[%s2 + $0x18] sm:$0xff] %v189
  %244 = vst [vmem:[%s2 + $0x20] sm:$0xff] %v194
  %245 = vst [vmem:[%s2 + $0x28] sm:$0xff] %v197
  %246 = vst [vmem:[%s2 + $0x30] sm:$0xff] %v202
  %247 = vst [vmem:[%s2 + $0x38] sm:$0xff] %v205
  %248 = vst [vmem:[%s2 + $0x40] sm:$0xff] %v210
  %249 = vst [vmem:[%s2 + $0x48] sm:$0xff] %v213
  %250 = vst [vmem:[%s2 + $0x50] sm:$0xff] %v218
  %251 = vst [vmem:[%s2 + $0x58] sm:$0xff] %v221
  %252 = vst [vmem:[%s2 + $0x60] sm:$0xff] %v226
  %253 = vst [vmem:[%s2 + $0x68] sm:$0xff] %v229
  %254 = vst [vmem:[%s2 + $0x70] sm:$0xff] %v234
  %255 = vst [vmem:[%s2 + $0x78] sm:$0xff] %v237
  %p256 = scmp.eq.s32.totalorder 0, 0
  // Predicated region
  $region10: #{_lambda_.9} parent=0 // pred_check
    %p257 = pneg %p256
  $region11: #{_lambda_.9} parent=0 // pred_check_branch
    %259 = sbr.rel (%p257) target = $region13
  $region12: #{_lambda_.9} parent=0 // pred_region
    %260 = vst [vmem:[%s3] sm:$0x1] 0.0
    %261 = vst [vmem:[%s4] sm:$0x1] 0.0
  $region13: #{_lambda_.9} parent=0 // pred_fallthru
    _
  %v262 = vld [vmem:[%s3] sm:$0x1]
  %v263 = vadd.f32 %v178, %v181
  %v264 = vadd.f32 %v263, %v186
  %v265 = vadd.f32 %v264, %v189
  %v266 = vadd.f32 %v265, %v194
  %v267 = vadd.f32 %v266, %v197
  %v268 = vadd.f32 %v267, %v202
  %v269 = vadd.f32 %v268, %v205
  %v270 = vadd.f32 %v269, %v210
  %v271 = vadd.f32 %v270, %v213
  %v272 = vadd.f32 %v271, %v218
  %v273 = vadd.f32 %v272, %v221
  %v274 = vadd.f32 %v273, %v226
  %v275 = vadd.f32 %v274, %v229
  %v276 = vadd.f32 %v275, %v234
  %v277 = vadd.f32 %v276, %v237
  %v278 = vrot.slane %v277, 4
  %v279 = vadd.f32 %v277, %v278
  %v280 = vrot.slane %v279, 2
  %v281 = vadd.f32 %v279, %v280
  %v282 = vrot.slane %v281, 1
  %v283 = vadd.f32 %v281, %v282
  %v284 = vadd.f32 %v262, %v283
  %285 = vst [vmem:[%s3] sm:$0x1] %v284
  %v286 = vld [vmem:[%s4] sm:$0x1]
  %v287 = vmul.f32 %v178, %v178
  %v288 = vmul.f32 %v181, %v181
  %v289 = vmul.f32 %v186, %v186
  %v290 = vmul.f32 %v189, %v189
  %v291 = vmul.f32 %v194, %v194
  %v292 = vmul.f32 %v197, %v197
  %v293 = vmul.f32 %v202, %v202
  %v294 = vmul.f32 %v205, %v205
  %v295 = vmul.f32 %v210, %v210
  %v296 = vmul.f32 %v213, %v213
  %v297 = vmul.f32 %v218, %v218
  %v298 = vmul.f32 %v221, %v221
  %v299 = vmul.f32 %v226, %v226
  %v300 = vmul.f32 %v229, %v229
  %v301 = vmul.f32 %v234, %v234
  %v302 = vmul.f32 %v237, %v237
  %v303 = vadd.f32 %v287, %v288
  %v304 = vadd.f32 %v303, %v289
  %v305 = vadd.f32 %v304, %v290
  %v306 = vadd.f32 %v305, %v291
  %v307 = vadd.f32 %v306, %v292
  %v308 = vadd.f32 %v307, %v293
  %v309 = vadd.f32 %v308, %v294
  %v310 = vadd.f32 %v309, %v295
  %v311 = vadd.f32 %v310, %v296
  %v312 = vadd.f32 %v311, %v297
  %v313 = vadd.f32 %v312, %v298
  %v314 = vadd.f32 %v313, %v299
  %v315 = vadd.f32 %v314, %v300
  %v316 = vadd.f32 %v315, %v301
  %v317 = vadd.f32 %v316, %v302
  %v318 = vrot.slane %v317, 4
  %v319 = vadd.f32 %v317, %v318
  %v320 = vrot.slane %v319, 2
  %v321 = vadd.f32 %v319, %v320
  %v322 = vrot.slane %v321, 1
  %v323 = vadd.f32 %v321, %v322
  %v324 = vadd.f32 %v286, %v323
  %325 = vst [vmem:[%s4] sm:$0x1] %v324
  // Predicated region
  $region14: #{_lambda_.9} parent=0 // pred_check
    _
  $region15: #{_lambda_.9} parent=0 // pred_check_branch
    %327 = sbr.rel (0) target = $region17
  $region16: #{_lambda_.9} parent=0 // pred_region
    _
  $region17: #{_lambda_.9} parent=0 // pred_fallthru
    _
  // Predicated region
  $region18: #{_lambda_.9} parent=0 // pred_check
    _
  $region19: #{_lambda_.9} parent=0 // pred_check_branch
    %329 = sbr.rel (0) target = $region21
  $region20: #{_lambda_.9} parent=0 // pred_region
    _
  $region21: #{_lambda_.9} parent=0 // pred_fallthru
    _
  // Predicated region
  $region22: #{_lambda_.9} parent=0 // pred_check
    _
  $region23: #{_lambda_.9} parent=0 // pred_check_branch
    %331 = sbr.rel (0) target = $region25
  $region24: #{_lambda_.9} parent=0 // pred_region
    _
  $region25: #{_lambda_.9} parent=0 // pred_fallthru
    _
  // Predicated region
  $region26: #{_lambda_.9} parent=0 // pred_check
    _
  $region27: #{_lambda_.9} parent=0 // pred_check_branch
    %333 = sbr.rel (0) target = $region29
  $region28: #{_lambda_.9} parent=0 // pred_region
    _
  $region29: #{_lambda_.9} parent=0 // pred_fallthru
    _
  // Predicated region
  $region30: #{_lambda_.9} parent=0 // pred_check
    _
  $region31: #{_lambda_.9} parent=0 // pred_check_branch
    %335 = sbr.rel (0) target = $region33
  $region32: #{_lambda_.9} parent=0 // pred_region
    _
  $region33: #{_lambda_.9} parent=0 // pred_fallthru
    _
  // Predicated region
  $region34: #{_lambda_.9} parent=0 // pred_check
    _
  $region35: #{_lambda_.9} parent=0 // pred_check_branch
    %337 = sbr.rel (0) target = $region37
  $region36: #{_lambda_.9} parent=0 // pred_region
    _
  $region37: #{_lambda_.9} parent=0 // pred_fallthru
    _

// kernel: _lambda_.10
$region0: #{_lambda_.10}
  #allocation0 [shape = 'u32[]', space=smem, size = 0x4, offset = 0x4, fixed_abs, tag = 'smem constant byte address 0x4 - core index']
  #allocation1 [shape = 'u32[144,128]{1,0:T(1,128)}', space=vmem, size = 0x12000, scoped, tag = 'internal scratch']
  %s0 = inlined_call_operand.vmem [shape: f32[128,128], index: 0, kind: input, shape index: {}]
  %s1 = inlined_call_operand.vmem [shape: f32[1,128], index: 1, kind: input, shape index: {}]
  %s2 = inlined_call_operand.vmem [shape: f32[1,128], index: 2, kind: input, shape index: {}]
  %s3 = inlined_call_operand.vmem [shape: bf16[128,128], index: 3, kind: output, shape index: {}]
  %s4 = sld [smem:[#allocation0]]
  $region22: #{_lambda_.10} parent=0
    _
  %s6 = ssub.s32 1, %s4
  %s7 = scalar_select 0, %s6, %s4
  // Predicated region
  $region2: #{_lambda_.10} parent=0 // pred_check
    _
  $region3: #{_lambda_.10} parent=0 // pred_check_branch
    %9 = sbr.rel (0) target = $region5
  $region4: #{_lambda_.10} parent=0 // pred_region
    _
  $region5: #{_lambda_.10} parent=0 // pred_fallthru
    _
  // Predicated region
  $region6: #{_lambda_.10} parent=0 // pred_check
    _
  $region7: #{_lambda_.10} parent=0 // pred_check_branch
    %11 = sbr.rel (0) target = $region9
  $region8: #{_lambda_.10} parent=0 // pred_region
    _
  $region9: #{_lambda_.10} parent=0 // pred_fallthru
    _
  // Predicated region
  $region10: #{_lambda_.10} parent=0 // pred_check
    _
  $region11: #{_lambda_.10} parent=0 // pred_check_branch
    %13 = sbr.rel (0) target = $region13
  $region12: #{_lambda_.10} parent=0 // pred_region
    _
  $region13: #{_lambda_.10} parent=0 // pred_fallthru
    _
  %v14 = vld [vmem:[%s0] sm:$0xff]
  %v15 = vld [vmem:[%s0 + $0x8] sm:$0xff]
  %v16 = vld [vmem:[%s0 + $0x10] sm:$0xff]
  %v17 = vld [vmem:[%s0 + $0x18] sm:$0xff]
  %v18 = vld [vmem:[%s0 + $0x20] sm:$0xff]
  %v19 = vld [vmem:[%s0 + $0x28] sm:$0xff]
  %v20 = vld [vmem:[%s0 + $0x30] sm:$0xff]
  %v21 = vld [vmem:[%s0 + $0x38] sm:$0xff]
  %v22 = vld [vmem:[%s0 + $0x40] sm:$0xff]
  %v23 = vld [vmem:[%s0 + $0x48] sm:$0xff]
  %v24 = vld [vmem:[%s0 + $0x50] sm:$0xff]
  %v25 = vld [vmem:[%s0 + $0x58] sm:$0xff]
  %v26 = vld [vmem:[%s0 + $0x60] sm:$0xff]
  %v27 = vld [vmem:[%s0 + $0x68] sm:$0xff]
  %v28 = vld [vmem:[%s0 + $0x70] sm:$0xff]
  %v29 = vld [vmem:[%s0 + $0x78] sm:$0xff]
  %v30 = vld [vmem:[%s1] sm:$0x1]
  %v32 = vlaneseq
  %v33 = vshrl.u32 %v32, 7
  %v34 = vsub.s32 0, %v33
  %v35 = vrot.slane %v30, %v34
  %v37 = vmul.f32 %v14, %v35
  %v38 = vmul.f32 %v15, %v35
  %v39 = vmul.f32 %v16, %v35
  %v40 = vmul.f32 %v17, %v35
  %v41 = vmul.f32 %v18, %v35
  %v42 = vmul.f32 %v19, %v35
  %v43 = vmul.f32 %v20, %v35
  %v44 = vmul.f32 %v21, %v35
  %v45 = vmul.f32 %v22, %v35
  %v46 = vmul.f32 %v23, %v35
  %v47 = vmul.f32 %v24, %v35
  %v48 = vmul.f32 %v25, %v35
  %v49 = vmul.f32 %v26, %v35
  %v50 = vmul.f32 %v27, %v35
  %v51 = vmul.f32 %v28, %v35
  %v52 = vmul.f32 %v29, %v35
  %v53 = vld [vmem:[%s2] sm:$0x1]
  %v55 = vlaneseq
  %v56 = vshrl.u32 %v55, 7
  %v57 = vsub.s32 0, %v56
  %v58 = vrot.slane %v53, %v57
  %v60 = vadd.f32 %v37, %v58
  %v61 = vadd.f32 %v38, %v58
  %v62 = vadd.f32 %v39, %v58
  %v63 = vadd.f32 %v40, %v58
  %v64 = vadd.f32 %v41, %v58
  %v65 = vadd.f32 %v42, %v58
  %v66 = vadd.f32 %v43, %v58
  %v67 = vadd.f32 %v44, %v58
  %v68 = vadd.f32 %v45, %v58
  %v69 = vadd.f32 %v46, %v58
  %v70 = vadd.f32 %v47, %v58
  %v71 = vadd.f32 %v48, %v58
  %v72 = vadd.f32 %v49, %v58
  %v73 = vadd.f32 %v50, %v58
  %v74 = vadd.f32 %v51, %v58
  %v75 = vadd.f32 %v52, %v58
  %vm76 = vcmp.ge.f32.partialorder %v60, 0.0
  %vm77 = vcmp.ge.f32.partialorder %v61, 0.0
  %vm78 = vcmp.ge.f32.partialorder %v62, 0.0
  %vm79 = vcmp.ge.f32.partialorder %v63, 0.0
  %vm80 = vcmp.ge.f32.partialorder %v64, 0.0
  %vm81 = vcmp.ge.f32.partialorder %v65, 0.0
  %vm82 = vcmp.ge.f32.partialorder %v66, 0.0
  %vm83 = vcmp.ge.f32.partialorder %v67, 0.0
  %vm84 = vcmp.ge.f32.partialorder %v68, 0.0
  %vm85 = vcmp.ge.f32.partialorder %v69, 0.0
  %vm86 = vcmp.ge.f32.partialorder %v70, 0.0
  %vm87 = vcmp.ge.f32.partialorder %v71, 0.0
  %vm88 = vcmp.ge.f32.partialorder %v72, 0.0
  %vm89 = vcmp.ge.f32.partialorder %v73, 0.0
  %vm90 = vcmp.ge.f32.partialorder %v74, 0.0
  %vm91 = vcmp.ge.f32.partialorder %v75, 0.0
  %v92 = vmul.f32 %v60, 0.2
  %v93 = vmul.f32 %v61, 0.2
  %v94 = vmul.f32 %v62, 0.2
  %v95 = vmul.f32 %v63, 0.2
  %v96 = vmul.f32 %v64, 0.2
  %v97 = vmul.f32 %v65, 0.2
  %v98 = vmul.f32 %v66, 0.2
  %v99 = vmul.f32 %v67, 0.2
  %v100 = vmul.f32 %v68, 0.2
  %v101 = vmul.f32 %v69, 0.2
  %v102 = vmul.f32 %v70, 0.2
  %v103 = vmul.f32 %v71, 0.2
  %v104 = vmul.f32 %v72, 0.2
  %v105 = vmul.f32 %v73, 0.2
  %v106 = vmul.f32 %v74, 0.2
  %v107 = vmul.f32 %v75, 0.2
  %v108 = vsel %vm76, %v60, %v92
  %v109 = vsel %vm77, %v61, %v93
  %v110 = vsel %vm78, %v62, %v94
  %v111 = vsel %vm79, %v63, %v95
  %v112 = vsel %vm80, %v64, %v96
  %v113 = vsel %vm81, %v65, %v97
  %v114 = vsel %vm82, %v66, %v98
  %v115 = vsel %vm83, %v67, %v99
  %v116 = vsel %vm84, %v68, %v100
  %v117 = vsel %vm85, %v69, %v101
  %v118 = vsel %vm86, %v70, %v102
  %v119 = vsel %vm87, %v71, %v103
  %v120 = vsel %vm88, %v72, %v104
  %v121 = vsel %vm89, %v73, %v105
  %v122 = vsel %vm90, %v74, %v106
  %v123 = vsel %vm91, %v75, %v107
  %v124 = vpack.c.bf16 %v109, %v108
  %v125 = vpack.c.bf16 %v111, %v110
  %v126 = vpack.c.bf16 %v113, %v112
  %v127 = vpack.c.bf16 %v115, %v114
  %v128 = vpack.c.bf16 %v117, %v116
  %v129 = vpack.c.bf16 %v119, %v118
  %v130 = vpack.c.bf16 %v121, %v120
  %v131 = vpack.c.bf16 %v123, %v122
  %v140 = vunpack.c.l.b16 %v124
  %v141 = vunpack.c.h.b16 %v124
  %v142 = vunpack.c.l.b16 %v125
  %v143 = vunpack.c.h.b16 %v125
  %v144 = vunpack.c.l.b16 %v126
  %v145 = vunpack.c.h.b16 %v126
  %v146 = vunpack.c.l.b16 %v127
  %v147 = vunpack.c.h.b16 %v127
  %v148 = vunpack.c.l.b16 %v128
  %v149 = vunpack.c.h.b16 %v128
  %v150 = vunpack.c.l.b16 %v129
  %v151 = vunpack.c.h.b16 %v129
  %v152 = vunpack.c.l.b16 %v130
  %v153 = vunpack.c.h.b16 %v130
  %v154 = vunpack.c.l.b16 %v131
  %v155 = vunpack.c.h.b16 %v131
  %v156 = vpack.c.b16 %v140, %v140
  %v157 = vpack.c.b16 %v141, %v141
  %v158 = vpack.c.b16 %v142, %v142
  %v159 = vpack.c.b16 %v143, %v143
  %v160 = vpack.c.b16 %v144, %v144
  %v161 = vpack.c.b16 %v145, %v145
  %v162 = vpack.c.b16 %v146, %v146
  %v163 = vpack.c.b16 %v147, %v147
  %v164 = vpack.c.b16 %v148, %v148
  %v165 = vpack.c.b16 %v149, %v149
  %v166 = vpack.c.b16 %v150, %v150
  %v167 = vpack.c.b16 %v151, %v151
  %v168 = vpack.c.b16 %v152, %v152
  %v169 = vpack.c.b16 %v153, %v153
  %v170 = vpack.c.b16 %v154, %v154
  %v171 = vpack.c.b16 %v155, %v155
  %188 = vst [vmem:[%s3] sm:$0xf] %v156
  %189 = vst [vmem:[%s3 + $0x4] sm:$0xf] %v157
  %190 = vst [vmem:[%s3 + $0x8] sm:$0xf] %v158
  %191 = vst [vmem:[%s3 + $0xc] sm:$0xf] %v159
  %192 = vst [vmem:[%s3 + $0x10] sm:$0xf] %v160
  %193 = vst [vmem:[%s3 + $0x14] sm:$0xf] %v161
  %194 = vst [vmem:[%s3 + $0x18] sm:$0xf] %v162
  %195 = vst [vmem:[%s3 + $0x1c] sm:$0xf] %v163
  %196 = vst [vmem:[%s3 + $0x20] sm:$0xf] %v164
  %197 = vst [vmem:[%s3 + $0x24] sm:$0xf] %v165
  %198 = vst [vmem:[%s3 + $0x28] sm:$0xf] %v166
  %199 = vst [vmem:[%s3 + $0x2c] sm:$0xf] %v167
  %200 = vst [vmem:[%s3 + $0x30] sm:$0xf] %v168
  %201 = vst [vmem:[%s3 + $0x34] sm:$0xf] %v169
  %202 = vst [vmem:[%s3 + $0x38] sm:$0xf] %v170
  %203 = vst [vmem:[%s3 + $0x3c] sm:$0xf] %v171
  // Predicated region
  $region14: #{_lambda_.10} parent=0 // pred_check
    _
  $region15: #{_lambda_.10} parent=0 // pred_check_branch
    %205 = sbr.rel (0) target = $region17
  $region16: #{_lambda_.10} parent=0 // pred_region
    _
  $region17: #{_lambda_.10} parent=0 // pred_fallthru
    _
  // Predicated region
  $region18: #{_lambda_.10} parent=0 // pred_check
    _
  $region19: #{_lambda_.10} parent=0 // pred_check_branch
    %207 = sbr.rel (0) target = $region21
  $region20: #{_lambda_.10} parent=0 // pred_region
    _
  $region21: #{_lambda_.10} parent=0 // pred_fallthru
    _

// kernel: _lambda_.11
$region0: #{_lambda_.11}
  #allocation0 [shape = 'u32[]', space=smem, size = 0x4, offset = 0x4, fixed_abs, tag = 'smem constant byte address 0x4 - core index']
  #allocation1 [shape = 'u32[144,128]{1,0:T(1,128)}', space=vmem, size = 0x12000, scoped, tag = 'internal scratch']
  %s0 = inlined_call_operand.vmem [shape: bf16[32,256], index: 0, kind: input, shape index: {}]
  %s1 = inlined_call_operand.vmem [shape: bf16[256,128], index: 1, kind: input, shape index: {}]
  %s2 = inlined_call_operand.vmem [shape: f32[32,128], index: 2, kind: output, shape index: {0}]
  %s3 = inlined_call_operand.vmem [shape: f32[1,128], index: 3, kind: output, shape index: {1}]
  %s4 = inlined_call_operand.vmem [shape: f32[1,128], index: 4, kind: output, shape index: {2}]
  %5 = xla_tuple %s2, %s3, %s4
  %s6 = sld [smem:[#allocation0]]
  $region38: #{_lambda_.11} parent=0
    _
  %s8 = ssub.s32 1, %s6
  %s9 = scalar_select 0, %s8, %s6
  // Predicated region
  $region2: #{_lambda_.11} parent=0 // pred_check
    _
  $region3: #{_lambda_.11} parent=0 // pred_check_branch
    %11 = sbr.rel (0) target = $region5
  $region4: #{_lambda_.11} parent=0 // pred_region
    _
  $region5: #{_lambda_.11} parent=0 // pred_fallthru
    _
  // Predicated region
  $region6: #{_lambda_.11} parent=0 // pred_check
    _
  $region7: #{_lambda_.11} parent=0 // pred_check_branch
    %13 = sbr.rel (0) target = $region9
  $region8: #{_lambda_.11} parent=0 // pred_region
    _
  $region9: #{_lambda_.11} parent=0 // pred_fallthru
    _
  %v15 = vld [vmem:[%s0] sm:$0xff]
  %v16 = vld [vmem:[%s0 + $0x8] sm:$0xff]
  %v17 = vld [vmem:[%s0 + $0x10] sm:$0xff]
  %v18 = vld [vmem:[%s0 + $0x18] sm:$0xff]
  %v19 = vld [vmem:[%s1] sm:$0xf]
  %v20 = vld [vmem:[%s1 + $0x4] sm:$0xf]
  %v21 = vld [vmem:[%s1 + $0x8] sm:$0xf]
  %v22 = vld [vmem:[%s1 + $0xc] sm:$0xf]
  %v23 = vld [vmem:[%s1 + $0x10] sm:$0xf]
  %v24 = vld [vmem:[%s1 + $0x14] sm:$0xf]
  %v25 = vld [vmem:[%s1 + $0x18] sm:$0xf]
  %v26 = vld [vmem:[%s1 + $0x1c] sm:$0xf]
  %v27 = vld [vmem:[%s1 + $0x20] sm:$0xf]
  %v28 = vld [vmem:[%s1 + $0x24] sm:$0xf]
  %v29 = vld [vmem:[%s1 + $0x28] sm:$0xf]
  %v30 = vld [vmem:[%s1 + $0x2c] sm:$0xf]
  %v31 = vld [vmem:[%s1 + $0x30] sm:$0xf]
  %v32 = vld [vmem:[%s1 + $0x34] sm:$0xf]
  %v33 = vld [vmem:[%s1 + $0x38] sm:$0xf]
  %v34 = vld [vmem:[%s1 + $0x3c] sm:$0xf]
  %v35 = vld [vmem:[%s1 + $0x40] sm:$0xf]
  %v36 = vld [vmem:[%s1 + $0x44] sm:$0xf]
  %v37 = vld [vmem:[%s1 + $0x48] sm:$0xf]
  %v38 = vld [vmem:[%s1 + $0x4c] sm:$0xf]
  %v39 = vld [vmem:[%s1 + $0x50] sm:$0xf]
  %v40 = vld [vmem:[%s1 + $0x54] sm:$0xf]
  %v41 = vld [vmem:[%s1 + $0x58] sm:$0xf]
  %v42 = vld [vmem:[%s1 + $0x5c] sm:$0xf]
  %v43 = vld [vmem:[%s1 + $0x60] sm:$0xf]
  %v44 = vld [vmem:[%s1 + $0x64] sm:$0xf]
  %v45 = vld [vmem:[%s1 + $0x68] sm:$0xf]
  %v46 = vld [vmem:[%s1 + $0x6c] sm:$0xf]
  %v47 = vld [vmem:[%s1 + $0x70] sm:$0xf]
  %v48 = vld [vmem:[%s1 + $0x74] sm:$0xf]
  %v49 = vld [vmem:[%s1 + $0x78] sm:$0xf]
  %v50 = vld [vmem:[%s1 + $0x7c] sm:$0xf]
  %v55 = vunpack.c.l.b16 %v15
  %v56 = vunpack.c.h.b16 %v15
  %v57 = vunpack.c.l.b16 %v16
  %v58 = vunpack.c.h.b16 %v16
  %v59 = vunpack.c.l.b16 %v17
  %v60 = vunpack.c.h.b16 %v17
  %v61 = vunpack.c.l.b16 %v18
  %v62 = vunpack.c.h.b16 %v18
  %v63 = vpack.c.b16 %v57, %v55
  %v64 = vpack.c.b16 %v58, %v56
  %v65 = vpack.c.b16 %v61, %v59
  %v66 = vpack.c.b16 %v62, %v60
  %v103 = vunpack.c.l.b16 %v19
  %v104 = vunpack.c.l.b16 %v20
  %v105 = vunpack.c.l.b16 %v21
  %v106 = vunpack.c.l.b16 %v22
  %v107 = vunpack.c.l.b16 %v23
  %v108 = vunpack.c.l.b16 %v24
  %v109 = vunpack.c.l.b16 %v25
  %v110 = vunpack.c.l.b16 %v26
  %v111 = vunpack.c.l.b16 %v27
  %v112 = vunpack.c.l.b16 %v28
  %v113 = vunpack.c.l.b16 %v29
  %v114 = vunpack.c.l.b16 %v30
  %v115 = vunpack.c.l.b16 %v31
  %v116 = vunpack.c.l.b16 %v32
  %v117 = vunpack.c.l.b16 %v33
  %v118 = vunpack.c.l.b16 %v34
  %v119 = vunpack.c.l.b16 %v35
  %v120 = vunpack.c.l.b16 %v36
  %v121 = vunpack.c.l.b16 %v37
  %v122 = vunpack.c.l.b16 %v38
  %v123 = vunpack.c.l.b16 %v39
  %v124 = vunpack.c.l.b16 %v40
  %v125 = vunpack.c.l.b16 %v41
  %v126 = vunpack.c.l.b16 %v42
  %v127 = vunpack.c.l.b16 %v43
  %v128 = vunpack.c.l.b16 %v44
  %v129 = vunpack.c.l.b16 %v45
  %v130 = vunpack.c.l.b16 %v46
  %v131 = vunpack.c.l.b16 %v47
  %v132 = vunpack.c.l.b16 %v48
  %v133 = vunpack.c.l.b16 %v49
  %v134 = vunpack.c.l.b16 %v50
  %v135 = vpack.c.b16 %v104, %v103
  %v136 = vpack.c.b16 %v106, %v105
  %v137 = vpack.c.b16 %v108, %v107
  %v138 = vpack.c.b16 %v110, %v109
  %v139 = vpack.c.b16 %v112, %v111
  %v140 = vpack.c.b16 %v114, %v113
  %v141 = vpack.c.b16 %v116, %v115
  %v142 = vpack.c.b16 %v118, %v117
  %v143 = vpack.c.b16 %v120, %v119
  %v144 = vpack.c.b16 %v122, %v121
  %v145 = vpack.c.b16 %v124, %v123
  %v146 = vpack.c.b16 %v126, %v125
  %v147 = vpack.c.b16 %v128, %v127
  %v148 = vpack.c.b16 %v130, %v129
  %v149 = vpack.c.b16 %v132, %v131
  %v150 = vpack.c.b16 %v134, %v133
  %167 = vmatprep.subr.bf16.mxu0 0
  %168 = vmatpush1.bf16.msra.mxu0 %v135
  %169 = vmatprep.subr.bf16.mxu0 0
  %170 = vmatpush1.bf16.msra.mxu0 %v136
  %171 = vmatprep.subr.bf16.mxu0 0
  %172 = vmatpush1.bf16.msra.mxu0 %v137
  %173 = vmatprep.subr.bf16.mxu0 0
  %174 = vmatpush1.bf16.msra.mxu0 %v138
  %175 = vmatprep.subr.bf16.mxu0 0
  %176 = vmatpush1.bf16.msra.mxu0 %v139
  %177 = vmatprep.subr.bf16.mxu0 0
  %178 = vmatpush1.bf16.msra.mxu0 %v140
  %179 = vmatprep.subr.bf16.mxu0 0
  %180 = vmatpush1.bf16.msra.mxu0 %v141
  %181 = vmatprep.subr.bf16.mxu0 0
  %182 = vmatpush1.bf16.msra.mxu0 %v142
  %183 = vmatprep.subr.bf16.mxu0 0
  %184 = vmatpush1.bf16.msra.mxu0 %v143
  %185 = vmatprep.subr.bf16.mxu0 0
  %186 = vmatpush1.bf16.msra.mxu0 %v144
  %187 = vmatprep.subr.bf16.mxu0 0
  %188 = vmatpush1.bf16.msra.mxu0 %v145
  %189 = vmatprep.subr.bf16.mxu0 0
  %190 = vmatpush1.bf16.msra.mxu0 %v146
  %191 = vmatprep.subr.bf16.mxu0 0
  %192 = vmatpush1.bf16.msra.mxu0 %v147
  %193 = vmatprep.subr.bf16.mxu0 0
  %194 = vmatpush1.bf16.msra.mxu0 %v148
  %195 = vmatprep.subr.bf16.mxu0 0
  %196 = vmatpush1.bf16.msra.mxu0 %v149
  %197 = vmatprep.subr.bf16.mxu0 0
  %198 = vmatpush1.bf16.msra.mxu0 %v150
  %199 = vmatprep.mubr.bf16.mxu0 %v64
  %200 = vmatmul.mubr.bf16.gmra.mrb[0].mxu0 %v63
  %v201 = vpop.f32.mrb[0].mxu0
  %v202 = vadd.f32 0.0, %v201
  %v203 = vpop.f32.mrb[0].mxu0
  %v204 = vpop.f32.mrb[0].mxu0
  %v205 = vadd.f32 0.0, %v204
  %v206 = vpop.f32.mrb[0].mxu0
  %207 = vmatprep.mubr.bf16.mxu0 %v66
  %208 = vmatmul.mubr.bf16.gmra.mrb[0].mxu0 %v65
  %v209 = vpop.f32.mrb[0].mxu0
  %v210 = vadd.f32 0.0, %v209
  %v211 = vpop.f32.mrb[0].mxu0
  %v212 = vpop.f32.mrb[0].mxu0
  %v213 = vadd.f32 0.0, %v212
  %v214 = vpop.f32.mrb[0].mxu0
  %215 = vdwg.mxu0
  %216 = vst [vmem:[%s2] sm:$0xff] %v202
  %217 = vst [vmem:[%s2 + $0x8] sm:$0xff] %v205
  %218 = vst [vmem:[%s2 + $0x10] sm:$0xff] %v210
  %219 = vst [vmem:[%s2 + $0x18] sm:$0xff] %v213
  %p220 = scmp.eq.s32.totalorder 0, 0
  // Predicated region
  $region10: #{_lambda_.11} parent=0 // pred_check
    %p221 = pneg %p220
  $region11: #{_lambda_.11} parent=0 // pred_check_branch
    %223 = sbr.rel (%p221) target = $region13
  $region12: #{_lambda_.11} parent=0 // pred_region
    %224 = vst [vmem:[%s3] sm:$0x1] 0.0
    %225 = vst [vmem:[%s4] sm:$0x1] 0.0
  $region13: #{_lambda_.11} parent=0 // pred_fallthru
    _
  %v226 = vld [vmem:[%s3] sm:$0x1]
  %v227 = vadd.f32 %v202, %v205
  %v228 = vadd.f32 %v227, %v210
  %v229 = vadd.f32 %v228, %v213
  %v230 = vrot.slane %v229, 4
  %v231 = vadd.f32 %v229, %v230
  %v232 = vrot.slane %v231, 2
  %v233 = vadd.f32 %v231, %v232
  %v234 = vrot.slane %v233, 1
  %v235 = vadd.f32 %v233, %v234
  %v236 = vadd.f32 %v226, %v235
  %237 = vst [vmem:[%s3] sm:$0x1] %v236
  %v238 = vld [vmem:[%s4] sm:$0x1]
  %v239 = vmul.f32 %v202, %v202
  %v240 = vmul.f32 %v205, %v205
  %v241 = vmul.f32 %v210, %v210
  %v242 = vmul.f32 %v213, %v213
  %v243 = vadd.f32 %v239, %v240
  %v244 = vadd.f32 %v243, %v241
  %v245 = vadd.f32 %v244, %v242
  %v246 = vrot.slane %v245, 4
  %v247 = vadd.f32 %v245, %v246
  %v248 = vrot.slane %v247, 2
  %v249 = vadd.f32 %v247, %v248
  %v250 = vrot.slane %v249, 1
  %v251 = vadd.f32 %v249, %v250
  %v252 = vadd.f32 %v238, %v251
  %253 = vst [vmem:[%s4] sm:$0x1] %v252
  // Predicated region
  $region14: #{_lambda_.11} parent=0 // pred_check
    _
  $region15: #{_lambda_.11} parent=0 // pred_check_branch
    %255 = sbr.rel (0) target = $region17
  $region16: #{_lambda_.11} parent=0 // pred_region
    _
  $region17: #{_lambda_.11} parent=0 // pred_fallthru
    _
  // Predicated region
  $region18: #{_lambda_.11} parent=0 // pred_check
    _
  $region19: #{_lambda_.11} parent=0 // pred_check_branch
    %257 = sbr.rel (0) target = $region21
  $region20: #{_lambda_.11} parent=0 // pred_region
    _
  $region21: #{_lambda_.11} parent=0 // pred_fallthru
    _
  // Predicated region
  $region22: #{_lambda_.11} parent=0 // pred_check
    _
  $region23: #{_lambda_.11} parent=0 // pred_check_branch
    %259 = sbr.rel (0) target = $region25
  $region24: #{_lambda_.11} parent=0 // pred_region
    _
  $region25: #{_lambda_.11} parent=0 // pred_fallthru
    _
  // Predicated region
  $region26: #{_lambda_.11} parent=0 // pred_check
    _
  $region27: #{_lambda_.11} parent=0 // pred_check_branch
    %261 = sbr.rel (0) target = $region29
  $region28: #{_lambda_.11} parent=0 // pred_region
    _
  $region29: #{_lambda_.11} parent=0 // pred_fallthru
    _
  // Predicated region
  $region30: #{_lambda_.11} parent=0 // pred_check
    _
  $region31: #{_lambda_.11} parent=0 // pred_check_branch
    %263 = sbr.rel (0) target = $region33
  $region32: #{_lambda_.11} parent=0 // pred_region
    _
  $region33: #{_lambda_.11} parent=0 // pred_fallthru
    _
  // Predicated region
  $region34: #{_lambda_.11} parent=0 // pred_check
    _
  $region35: #{_lambda_.11} parent=0 // pred_check_branch
    %265 = sbr.rel (0) target = $region37
  $region36: #{_lambda_.11} parent=0 // pred_region
    _
  $region37: #{_lambda_.11} parent=0 // pred_fallthru
    _

// kernel: _lambda_.12
$region0: #{_lambda_.12}
  #allocation0 [shape = 'u32[]', space=smem, size = 0x4, offset = 0x4, fixed_abs, tag = 'smem constant byte address 0x4 - core index']
  #allocation1 [shape = 'u32[144,128]{1,0:T(1,128)}', space=vmem, size = 0x12000, scoped, tag = 'internal scratch']
  %s0 = inlined_call_operand.vmem [shape: f32[32,128], index: 0, kind: input, shape index: {}]
  %s1 = inlined_call_operand.vmem [shape: f32[1,128], index: 1, kind: input, shape index: {}]
  %s2 = inlined_call_operand.vmem [shape: f32[1,128], index: 2, kind: input, shape index: {}]
  %s3 = inlined_call_operand.vmem [shape: bf16[32,128], index: 3, kind: output, shape index: {}]
  %s4 = sld [smem:[#allocation0]]
  $region22: #{_lambda_.12} parent=0
    _
  %s6 = ssub.s32 1, %s4
  %s7 = scalar_select 0, %s6, %s4
  // Predicated region
  $region2: #{_lambda_.12} parent=0 // pred_check
    _
  $region3: #{_lambda_.12} parent=0 // pred_check_branch
    %9 = sbr.rel (0) target = $region5
  $region4: #{_lambda_.12} parent=0 // pred_region
    _
  $region5: #{_lambda_.12} parent=0 // pred_fallthru
    _
  // Predicated region
  $region6: #{_lambda_.12} parent=0 // pred_check
    _
  $region7: #{_lambda_.12} parent=0 // pred_check_branch
    %11 = sbr.rel (0) target = $region9
  $region8: #{_lambda_.12} parent=0 // pred_region
    _
  $region9: #{_lambda_.12} parent=0 // pred_fallthru
    _
  // Predicated region
  $region10: #{_lambda_.12} parent=0 // pred_check
    _
  $region11: #{_lambda_.12} parent=0 // pred_check_branch
    %13 = sbr.rel (0) target = $region13
  $region12: #{_lambda_.12} parent=0 // pred_region
    _
  $region13: #{_lambda_.12} parent=0 // pred_fallthru
    _
  %v14 = vld [vmem:[%s0] sm:$0xff]
  %v15 = vld [vmem:[%s0 + $0x8] sm:$0xff]
  %v16 = vld [vmem:[%s0 + $0x10] sm:$0xff]
  %v17 = vld [vmem:[%s0 + $0x18] sm:$0xff]
  %v18 = vld [vmem:[%s1] sm:$0x1]
  %v20 = vlaneseq
  %v21 = vshrl.u32 %v20, 7
  %v22 = vsub.s32 0, %v21
  %v23 = vrot.slane %v18, %v22
  %v25 = vmul.f32 %v14, %v23
  %v26 = vmul.f32 %v15, %v23
  %v27 = vmul.f32 %v16, %v23
  %v28 = vmul.f32 %v17, %v23
  %v29 = vld [vmem:[%s2] sm:$0x1]
  %v31 = vlaneseq
  %v32 = vshrl.u32 %v31, 7
  %v33 = vsub.s32 0, %v32
  %v34 = vrot.slane %v29, %v33
  %v36 = vadd.f32 %v25, %v34
  %v37 = vadd.f32 %v26, %v34
  %v38 = vadd.f32 %v27, %v34
  %v39 = vadd.f32 %v28, %v34
  %vm40 = vcmp.ge.f32.partialorder %v36, 0.0
  %vm41 = vcmp.ge.f32.partialorder %v37, 0.0
  %vm42 = vcmp.ge.f32.partialorder %v38, 0.0
  %vm43 = vcmp.ge.f32.partialorder %v39, 0.0
  %v44 = vmul.f32 %v36, 0.2
  %v45 = vmul.f32 %v37, 0.2
  %v46 = vmul.f32 %v38, 0.2
  %v47 = vmul.f32 %v39, 0.2
  %v48 = vsel %vm40, %v36, %v44
  %v49 = vsel %vm41, %v37, %v45
  %v50 = vsel %vm42, %v38, %v46
  %v51 = vsel %vm43, %v39, %v47
  %v52 = vpack.c.bf16 %v49, %v48
  %v53 = vpack.c.bf16 %v51, %v50
  %v56 = vunpack.c.l.b16 %v52
  %v57 = vunpack.c.h.b16 %v52
  %v58 = vunpack.c.l.b16 %v53
  %v59 = vunpack.c.h.b16 %v53
  %v60 = vpack.c.b16 %v56, %v56
  %v61 = vpack.c.b16 %v57, %v57
  %v62 = vpack.c.b16 %v58, %v58
  %v63 = vpack.c.b16 %v59, %v59
  %68 = vst [vmem:[%s3] sm:$0xf] %v60
  %69 = vst [vmem:[%s3 + $0x4] sm:$0xf] %v61
  %70 = vst [vmem:[%s3 + $0x8] sm:$0xf] %v62
  %71 = vst [vmem:[%s3 + $0xc] sm:$0xf] %v63
  // Predicated region
  $region14: #{_lambda_.12} parent=0 // pred_check
    _
  $region15: #{_lambda_.12} parent=0 // pred_check_branch
    %73 = sbr.rel (0) target = $region17
  $region16: #{_lambda_.12} parent=0 // pred_region
    _
  $region17: #{_lambda_.12} parent=0 // pred_fallthru
    _
  // Predicated region
  $region18: #{_lambda_.12} parent=0 // pred_check
    _
  $region19: #{_lambda_.12} parent=0 // pred_check_branch
    %75 = sbr.rel (0) target = $region21
  $region20: #{_lambda_.12} parent=0 // pred_region
    _
  $region21: #{_lambda_.12} parent=0 // pred_fallthru
    _

// kernel: _lambda_.14
$region0: #{_lambda_.14}
  #allocation0 [shape = 'u32[]', space=smem, size = 0x4, offset = 0x4, fixed_abs, tag = 'smem constant byte address 0x4 - core index']
  #allocation1 [shape = 'u32[144,128]{1,0:T(1,128)}', space=vmem, size = 0x12000, scoped, tag = 'internal scratch']
  %s0 = inlined_call_operand.vmem [shape: f32[24,128], index: 0, kind: input, shape index: {}]
  %s1 = inlined_call_operand.vmem [shape: f32[1,128], index: 1, kind: input, shape index: {}]
  %s2 = inlined_call_operand.vmem [shape: f32[1,128], index: 2, kind: input, shape index: {}]
  %s3 = inlined_call_operand.vmem [shape: bf16[24,128], index: 3, kind: output, shape index: {}]
  %s4 = sld [smem:[#allocation0]]
  $region22: #{_lambda_.14} parent=0
    _
  %s6 = ssub.s32 1, %s4
  %s7 = scalar_select 0, %s6, %s4
  // Predicated region
  $region2: #{_lambda_.14} parent=0 // pred_check
    _
  $region3: #{_lambda_.14} parent=0 // pred_check_branch
    %9 = sbr.rel (0) target = $region5
  $region4: #{_lambda_.14} parent=0 // pred_region
    _
  $region5: #{_lambda_.14} parent=0 // pred_fallthru
    _
  // Predicated region
  $region6: #{_lambda_.14} parent=0 // pred_check
    _
  $region7: #{_lambda_.14} parent=0 // pred_check_branch
    %11 = sbr.rel (0) target = $region9
  $region8: #{_lambda_.14} parent=0 // pred_region
    _
  $region9: #{_lambda_.14} parent=0 // pred_fallthru
    _
  // Predicated region
  $region10: #{_lambda_.14} parent=0 // pred_check
    _
  $region11: #{_lambda_.14} parent=0 // pred_check_branch
    %13 = sbr.rel (0) target = $region13
  $region12: #{_lambda_.14} parent=0 // pred_region
    _
  $region13: #{_lambda_.14} parent=0 // pred_fallthru
    _
  %v14 = vld [vmem:[%s0] sm:$0xff]
  %v15 = vld [vmem:[%s0 + $0x8] sm:$0xff]
  %v16 = vld [vmem:[%s0 + $0x10] sm:$0xff]
  %v17 = vld [vmem:[%s1] sm:$0x1]
  %v19 = vlaneseq
  %v20 = vshrl.u32 %v19, 7
  %v21 = vsub.s32 0, %v20
  %v22 = vrot.slane %v17, %v21
  %v24 = vmul.f32 %v14, %v22
  %v25 = vmul.f32 %v15, %v22
  %v26 = vmul.f32 %v16, %v22
  %v27 = vld [vmem:[%s2] sm:$0x1]
  %v29 = vlaneseq
  %v30 = vshrl.u32 %v29, 7
  %v31 = vsub.s32 0, %v30
  %v32 = vrot.slane %v27, %v31
  %v34 = vadd.f32 %v24, %v32
  %v35 = vadd.f32 %v25, %v32
  %v36 = vadd.f32 %v26, %v32
  %vm37 = vcmp.ge.f32.partialorder %v34, 0.0
  %vm38 = vcmp.ge.f32.partialorder %v35, 0.0
  %vm39 = vcmp.ge.f32.partialorder %v36, 0.0
  %v40 = vmul.f32 %v34, 0.2
  %v41 = vmul.f32 %v35, 0.2
  %v42 = vmul.f32 %v36, 0.2
  %v43 = vsel %vm37, %v34, %v40
  %v44 = vsel %vm38, %v35, %v41
  %v45 = vsel %vm39, %v36, %v42
  %v46 = vpack.c.bf16 %v44, %v43
  %v47 = vpack.c.bf16 %v45, %v45
  %v50 = vunpack.c.l.b16 %v46
  %v51 = vunpack.c.h.b16 %v46
  %v52 = vunpack.c.l.b16 %v47
  %v53 = vpack.c.b16 %v50, %v50
  %v54 = vpack.c.b16 %v51, %v51
  %v55 = vpack.c.b16 %v52, %v52
  %59 = vst [vmem:[%s3] sm:$0xf] %v53
  %60 = vst [vmem:[%s3 + $0x4] sm:$0xf] %v54
  %61 = vst [vmem:[%s3 + $0x8] sm:$0xf] %v55
  // Predicated region
  $region14: #{_lambda_.14} parent=0 // pred_check
    _
  $region15: #{_lambda_.14} parent=0 // pred_check_branch
    %63 = sbr.rel (0) target = $region17
  $region16: #{_lambda_.14} parent=0 // pred_region
    _
  $region17: #{_lambda_.14} parent=0 // pred_fallthru
    _
  // Predicated region
  $region18: #{_lambda_.14} parent=0 // pred_check
    _
  $region19: #{_lambda_.14} parent=0 // pred_check_branch
    %65 = sbr.rel (0) target = $region21
  $region20: #{_lambda_.14} parent=0 // pred_region
    _
  $region21: #{_lambda_.14} parent=0 // pred_fallthru
    _

// kernel: _lambda_.13
$region0: #{_lambda_.13}
  #allocation0 [shape = 'u32[]', space=smem, size = 0x4, offset = 0x4, fixed_abs, tag = 'smem constant byte address 0x4 - core index']
  #allocation1 [shape = 'u32[144,128]{1,0:T(1,128)}', space=vmem, size = 0x12000, scoped, tag = 'internal scratch']
  %s0 = inlined_call_operand.vmem [shape: bf16[24,512], index: 0, kind: input, shape index: {}]
  %s1 = inlined_call_operand.vmem [shape: bf16[512,128], index: 1, kind: input, shape index: {}]
  %s2 = inlined_call_operand.vmem [shape: f32[24,128], index: 2, kind: output, shape index: {0}]
  %s3 = inlined_call_operand.vmem [shape: f32[1,128], index: 3, kind: output, shape index: {1}]
  %s4 = inlined_call_operand.vmem [shape: f32[1,128], index: 4, kind: output, shape index: {2}]
  %5 = xla_tuple %s2, %s3, %s4
  %s6 = sld [smem:[#allocation0]]
  $region38: #{_lambda_.13} parent=0
    _
  %s8 = ssub.s32 1, %s6
  %s9 = scalar_select 0, %s8, %s6
  // Predicated region
  $region2: #{_lambda_.13} parent=0 // pred_check
    _
  $region3: #{_lambda_.13} parent=0 // pred_check_branch
    %11 = sbr.rel (0) target = $region5
  $region4: #{_lambda_.13} parent=0 // pred_region
    _
  $region5: #{_lambda_.13} parent=0 // pred_fallthru
    _
  // Predicated region
  $region6: #{_lambda_.13} parent=0 // pred_check
    _
  $region7: #{_lambda_.13} parent=0 // pred_check_branch
    %13 = sbr.rel (0) target = $region9
  $region8: #{_lambda_.13} parent=0 // pred_region
    _
  $region9: #{_lambda_.13} parent=0 // pred_fallthru
    _
  %v15 = vld [vmem:[%s0] sm:$0xff]
  %v16 = vld [vmem:[%s0 + $0x8] sm:$0xff]
  %v17 = vld [vmem:[%s0 + $0x10] sm:$0xff]
  %v18 = vld [vmem:[%s0 + $0x18] sm:$0xff]
  %v19 = vld [vmem:[%s0 + $0x20] sm:$0xff]
  %v20 = vld [vmem:[%s0 + $0x28] sm:$0xff]
  %v21 = vld [vmem:[%s1] sm:$0xf]
  %v22 = vld [vmem:[%s1 + $0x4] sm:$0xf]
  %v23 = vld [vmem:[%s1 + $0x8] sm:$0xf]
  %v24 = vld [vmem:[%s1 + $0xc] sm:$0xf]
  %v25 = vld [vmem:[%s1 + $0x10] sm:$0xf]
  %v26 = vld [vmem:[%s1 + $0x14] sm:$0xf]
  %v27 = vld [vmem:[%s1 + $0x18] sm:$0xf]
  %v28 = vld [vmem:[%s1 + $0x1c] sm:$0xf]
  %v29 = vld [vmem:[%s1 + $0x20] sm:$0xf]
  %v30 = vld [vmem:[%s1 + $0x24] sm:$0xf]
  %v31 = vld [vmem:[%s1 + $0x28] sm:$0xf]
  %v32 = vld [vmem:[%s1 + $0x2c] sm:$0xf]
  %v33 = vld [vmem:[%s1 + $0x30] sm:$0xf]
  %v34 = vld [vmem:[%s1 + $0x34] sm:$0xf]
  %v35 = vld [vmem:[%s1 + $0x38] sm:$0xf]
  %v36 = vld [vmem:[%s1 + $0x3c] sm:$0xf]
  %v37 = vld [vmem:[%s1 + $0x40] sm:$0xf]
  %v38 = vld [vmem:[%s1 + $0x44] sm:$0xf]
  %v39 = vld [vmem:[%s1 + $0x48] sm:$0xf]
  %v40 = vld [vmem:[%s1 + $0x4c] sm:$0xf]
  %v41 = vld [vmem:[%s1 + $0x50] sm:$0xf]
  %v42 = vld [vmem:[%s1 + $0x54] sm:$0xf]
  %v43 = vld [vmem:[%s1 + $0x58] sm:$0xf]
  %v44 = vld [vmem:[%s1 + $0x5c] sm:$0xf]
  %v45 = vld [vmem:[%s1 + $0x60] sm:$0xf]
  %v46 = vld [vmem:[%s1 + $0x64] sm:$0xf]
  %v47 = vld [vmem:[%s1 + $0x68] sm:$0xf]
  %v48 = vld [vmem:[%s1 + $0x6c] sm:$0xf]
  %v49 = vld [vmem:[%s1 + $0x70] sm:$0xf]
  %v50 = vld [vmem:[%s1 + $0x74] sm:$0xf]
  %v51 = vld [vmem:[%s1 + $0x78] sm:$0xf]
  %v52 = vld [vmem:[%s1 + $0x7c] sm:$0xf]
  %v53 = vld [vmem:[%s1 + $0x80] sm:$0xf]
  %v54 = vld [vmem:[%s1 + $0x84] sm:$0xf]
  %v55 = vld [vmem:[%s1 + $0x88] sm:$0xf]
  %v56 = vld [vmem:[%s1 + $0x8c] sm:$0xf]
  %v57 = vld [vmem:[%s1 + $0x90] sm:$0xf]
  %v58 = vld [vmem:[%s1 + $0x94] sm:$0xf]
  %v59 = vld [vmem:[%s1 + $0x98] sm:$0xf]
  %v60 = vld [vmem:[%s1 + $0x9c] sm:$0xf]
  %v61 = vld [vmem:[%s1 + $0xa0] sm:$0xf]
  %v62 = vld [vmem:[%s1 + $0xa4] sm:$0xf]
  %v63 = vld [vmem:[%s1 + $0xa8] sm:$0xf]
  %v64 = vld [vmem:[%s1 + $0xac] sm:$0xf]
  %v65 = vld [vmem:[%s1 + $0xb0] sm:$0xf]
  %v66 = vld [vmem:[%s1 + $0xb4] sm:$0xf]
  %v67 = vld [vmem:[%s1 + $0xb8] sm:$0xf]
  %v68 = vld [vmem:[%s1 + $0xbc] sm:$0xf]
  %v69 = vld [vmem:[%s1 + $0xc0] sm:$0xf]
  %v70 = vld [vmem:[%s1 + $0xc4] sm:$0xf]
  %v71 = vld [vmem:[%s1 + $0xc8] sm:$0xf]
  %v72 = vld [vmem:[%s1 + $0xcc] sm:$0xf]
  %v73 = vld [vmem:[%s1 + $0xd0] sm:$0xf]
  %v74 = vld [vmem:[%s1 + $0xd4] sm:$0xf]
  %v75 = vld [vmem:[%s1 + $0xd8] sm:$0xf]
  %v76 = vld [vmem:[%s1 + $0xdc] sm:$0xf]
  %v77 = vld [vmem:[%s1 + $0xe0] sm:$0xf]
  %v78 = vld [vmem:[%s1 + $0xe4] sm:$0xf]
  %v79 = vld [vmem:[%s1 + $0xe8] sm:$0xf]
  %v80 = vld [vmem:[%s1 + $0xec] sm:$0xf]
  %v81 = vld [vmem:[%s1 + $0xf0] sm:$0xf]
  %v82 = vld [vmem:[%s1 + $0xf4] sm:$0xf]
  %v83 = vld [vmem:[%s1 + $0xf8] sm:$0xf]
  %v84 = vld [vmem:[%s1 + $0xfc] sm:$0xf]
  %v91 = vunpack.c.l.b16 %v15
  %v92 = vunpack.c.h.b16 %v15
  %v93 = vunpack.c.l.b16 %v16
  %v94 = vunpack.c.h.b16 %v16
  %v95 = vunpack.c.l.b16 %v17
  %v96 = vunpack.c.h.b16 %v17
  %v97 = vunpack.c.l.b16 %v18
  %v98 = vunpack.c.h.b16 %v18
  %v99 = vunpack.c.l.b16 %v19
  %v100 = vunpack.c.h.b16 %v19
  %v101 = vunpack.c.l.b16 %v20
  %v102 = vunpack.c.h.b16 %v20
  %v103 = vpack.c.b16 %v95, %v91
  %v104 = vpack.c.b16 %v96, %v92
  %v105 = vpack.c.b16 %v97, %v93
  %v106 = vpack.c.b16 %v98, %v94
  %v107 = vpack.c.b16 %v99, %v99
  %v108 = vpack.c.b16 %v100, %v100
  %v109 = vpack.c.b16 %v101, %v101
  %v110 = vpack.c.b16 %v102, %v102
  %v183 = vunpack.c.l.b16 %v21
  %v184 = vunpack.c.l.b16 %v22
  %v185 = vunpack.c.l.b16 %v23
  %v186 = vunpack.c.l.b16 %v24
  %v187 = vunpack.c.l.b16 %v25
  %v188 = vunpack.c.l.b16 %v26
  %v189 = vunpack.c.l.b16 %v27
  %v190 = vunpack.c.l.b16 %v28
  %v191 = vunpack.c.l.b16 %v29
  %v192 = vunpack.c.l.b16 %v30
  %v193 = vunpack.c.l.b16 %v31
  %v194 = vunpack.c.l.b16 %v32
  %v195 = vunpack.c.l.b16 %v33
  %v196 = vunpack.c.l.b16 %v34
  %v197 = vunpack.c.l.b16 %v35
  %v198 = vunpack.c.l.b16 %v36
  %v199 = vunpack.c.l.b16 %v37
  %v200 = vunpack.c.l.b16 %v38
  %v201 = vunpack.c.l.b16 %v39
  %v202 = vunpack.c.l.b16 %v40
  %v203 = vunpack.c.l.b16 %v41
  %v204 = vunpack.c.l.b16 %v42
  %v205 = vunpack.c.l.b16 %v43
  %v206 = vunpack.c.l.b16 %v44
  %v207 = vunpack.c.l.b16 %v45
  %v208 = vunpack.c.l.b16 %v46
  %v209 = vunpack.c.l.b16 %v47
  %v210 = vunpack.c.l.b16 %v48
  %v211 = vunpack.c.l.b16 %v49
  %v212 = vunpack.c.l.b16 %v50
  %v213 = vunpack.c.l.b16 %v51
  %v214 = vunpack.c.l.b16 %v52
  %v215 = vunpack.c.l.b16 %v53
  %v216 = vunpack.c.l.b16 %v54
  %v217 = vunpack.c.l.b16 %v55
  %v218 = vunpack.c.l.b16 %v56
  %v219 = vunpack.c.l.b16 %v57
  %v220 = vunpack.c.l.b16 %v58
  %v221 = vunpack.c.l.b16 %v59
  %v222 = vunpack.c.l.b16 %v60
  %v223 = vunpack.c.l.b16 %v61
  %v224 = vunpack.c.l.b16 %v62
  %v225 = vunpack.c.l.b16 %v63
  %v226 = vunpack.c.l.b16 %v64
  %v227 = vunpack.c.l.b16 %v65
  %v228 = vunpack.c.l.b16 %v66
  %v229 = vunpack.c.l.b16 %v67
  %v230 = vunpack.c.l.b16 %v68
  %v231 = vunpack.c.l.b16 %v69
  %v232 = vunpack.c.l.b16 %v70
  %v233 = vunpack.c.l.b16 %v71
  %v234 = vunpack.c.l.b16 %v72
  %v235 = vunpack.c.l.b16 %v73
  %v236 = vunpack.c.l.b16 %v74
  %v237 = vunpack.c.l.b16 %v75
  %v238 = vunpack.c.l.b16 %v76
  %v239 = vunpack.c.l.b16 %v77
  %v240 = vunpack.c.l.b16 %v78
  %v241 = vunpack.c.l.b16 %v79
  %v242 = vunpack.c.l.b16 %v80
  %v243 = vunpack.c.l.b16 %v81
  %v244 = vunpack.c.l.b16 %v82
  %v245 = vunpack.c.l.b16 %v83
  %v246 = vunpack.c.l.b16 %v84
  %v247 = vpack.c.b16 %v184, %v183
  %v248 = vpack.c.b16 %v186, %v185
  %v249 = vpack.c.b16 %v188, %v187
  %v250 = vpack.c.b16 %v190, %v189
  %v251 = vpack.c.b16 %v192, %v191
  %v252 = vpack.c.b16 %v194, %v193
  %v253 = vpack.c.b16 %v196, %v195
  %v254 = vpack.c.b16 %v198, %v197
  %v255 = vpack.c.b16 %v200, %v199
  %v256 = vpack.c.b16 %v202, %v201
  %v257 = vpack.c.b16 %v204, %v203
  %v258 = vpack.c.b16 %v206, %v205
  %v259 = vpack.c.b16 %v208, %v207
  %v260 = vpack.c.b16 %v210, %v209
  %v261 = vpack.c.b16 %v212, %v211
  %v262 = vpack.c.b16 %v214, %v213
  %v263 = vpack.c.b16 %v216, %v215
  %v264 = vpack.c.b16 %v218, %v217
  %v265 = vpack.c.b16 %v220, %v219
  %v266 = vpack.c.b16 %v222, %v221
  %v267 = vpack.c.b16 %v224, %v223
  %v268 = vpack.c.b16 %v226, %v225
  %v269 = vpack.c.b16 %v228, %v227
  %v270 = vpack.c.b16 %v230, %v229
  %v271 = vpack.c.b16 %v232, %v231
  %v272 = vpack.c.b16 %v234, %v233
  %v273 = vpack.c.b16 %v236, %v235
  %v274 = vpack.c.b16 %v238, %v237
  %v275 = vpack.c.b16 %v240, %v239
  %v276 = vpack.c.b16 %v242, %v241
  %v277 = vpack.c.b16 %v244, %v243
  %v278 = vpack.c.b16 %v246, %v245
  %311 = vmatprep.subr.bf16.mxu0 0
  %312 = vmatpush1.bf16.msra.mxu0 %v247
  %313 = vmatprep.subr.bf16.mxu0 0
  %314 = vmatpush1.bf16.msra.mxu0 %v248
  %315 = vmatprep.subr.bf16.mxu0 0
  %316 = vmatpush1.bf16.msra.mxu0 %v249
  %317 = vmatprep.subr.bf16.mxu0 0
  %318 = vmatpush1.bf16.msra.mxu0 %v250
  %319 = vmatprep.subr.bf16.mxu0 0
  %320 = vmatpush1.bf16.msra.mxu0 %v251
  %321 = vmatprep.subr.bf16.mxu0 0
  %322 = vmatpush1.bf16.msra.mxu0 %v252
  %323 = vmatprep.subr.bf16.mxu0 0
  %324 = vmatpush1.bf16.msra.mxu0 %v253
  %325 = vmatprep.subr.bf16.mxu0 0
  %326 = vmatpush1.bf16.msra.mxu0 %v254
  %327 = vmatprep.subr.bf16.mxu0 0
  %328 = vmatpush1.bf16.msra.mxu0 %v255
  %329 = vmatprep.subr.bf16.mxu0 0
  %330 = vmatpush1.bf16.msra.mxu0 %v256
  %331 = vmatprep.subr.bf16.mxu0 0
  %332 = vmatpush1.bf16.msra.mxu0 %v257
  %333 = vmatprep.subr.bf16.mxu0 0
  %334 = vmatpush1.bf16.msra.mxu0 %v258
  %335 = vmatprep.subr.bf16.mxu0 0
  %336 = vmatpush1.bf16.msra.mxu0 %v259
  %337 = vmatprep.subr.bf16.mxu0 0
  %338 = vmatpush1.bf16.msra.mxu0 %v260
  %339 = vmatprep.subr.bf16.mxu0 0
  %340 = vmatpush1.bf16.msra.mxu0 %v261
  %341 = vmatprep.subr.bf16.mxu0 0
  %342 = vmatpush1.bf16.msra.mxu0 %v262
  %343 = vmatprep.mubr.bf16.mxu0 %v104
  %344 = vmatmul.mubr.bf16.gmra.mrb[0].mxu0 %v103
  %v345 = vpop.f32.mrb[0].mxu0
  %v346 = vadd.f32 0.0, %v345
  %v347 = vpop.f32.mrb[0].mxu0
  %v348 = vpop.f32.mrb[0].mxu0
  %v349 = vadd.f32 0.0, %v348
  %v350 = vpop.f32.mrb[0].mxu0
  %351 = vmatprep.mubr.bf16.mxu0 %v108
  %352 = vmatmul.mubr.bf16.gmra.mrb[0].mxu0 %v107
  %v353 = vpop.f32.mrb[0].mxu0
  %v354 = vadd.f32 0.0, %v353
  %v355 = vpop.f32.mrb[0].mxu0
  %v356 = vpop.f32.mrb[0].mxu0
  %v357 = vpop.f32.mrb[0].mxu0
  %358 = vdwg.mxu0
  %359 = vmatprep.subr.bf16.mxu0 0
  %360 = vmatpush1.bf16.msra.mxu0 %v263
  %361 = vmatprep.subr.bf16.mxu0 0
  %362 = vmatpush1.bf16.msra.mxu0 %v264
  %363 = vmatprep.subr.bf16.mxu0 0
  %364 = vmatpush1.bf16.msra.mxu0 %v265
  %365 = vmatprep.subr.bf16.mxu0 0
  %366 = vmatpush1.bf16.msra.mxu0 %v266
  %367 = vmatprep.subr.bf16.mxu0 0
  %368 = vmatpush1.bf16.msra.mxu0 %v267
  %369 = vmatprep.subr.bf16.mxu0 0
  %370 = vmatpush1.bf16.msra.mxu0 %v268
  %371 = vmatprep.subr.bf16.mxu0 0
  %372 = vmatpush1.bf16.msra.mxu0 %v269
  %373 = vmatprep.subr.bf16.mxu0 0
  %374 = vmatpush1.bf16.msra.mxu0 %v270
  %375 = vmatprep.subr.bf16.mxu0 0
  %376 = vmatpush1.bf16.msra.mxu0 %v271
  %377 = vmatprep.subr.bf16.mxu0 0
  %378 = vmatpush1.bf16.msra.mxu0 %v272
  %379 = vmatprep.subr.bf16.mxu0 0
  %380 = vmatpush1.bf16.msra.mxu0 %v273
  %381 = vmatprep.subr.bf16.mxu0 0
  %382 = vmatpush1.bf16.msra.mxu0 %v274
  %383 = vmatprep.subr.bf16.mxu0 0
  %384 = vmatpush1.bf16.msra.mxu0 %v275
  %385 = vmatprep.subr.bf16.mxu0 0
  %386 = vmatpush1.bf16.msra.mxu0 %v276
  %387 = vmatprep.subr.bf16.mxu0 0
  %388 = vmatpush1.bf16.msra.mxu0 %v277
  %389 = vmatprep.subr.bf16.mxu0 0
  %390 = vmatpush1.bf16.msra.mxu0 %v278
  %391 = vmatprep.mubr.bf16.mxu0 %v106
  %392 = vmatmul.mubr.bf16.gmra.mrb[0].mxu0 %v105
  %v393 = vpop.f32.mrb[0].mxu0
  %v394 = vadd.f32 %v346, %v393
  %v395 = vpop.f32.mrb[0].mxu0
  %v396 = vpop.f32.mrb[0].mxu0
  %v397 = vadd.f32 %v349, %v396
  %v398 = vpop.f32.mrb[0].mxu0
  %399 = vmatprep.mubr.bf16.mxu0 %v110
  %400 = vmatmul.mubr.bf16.gmra.mrb[0].mxu0 %v109
  %v401 = vpop.f32.mrb[0].mxu0
  %v402 = vadd.f32 %v354, %v401
  %v403 = vpop.f32.mrb[0].mxu0
  %v404 = vpop.f32.mrb[0].mxu0
  %v405 = vpop.f32.mrb[0].mxu0
  %406 = vdwg.mxu0
  %407 = vst [vmem:[%s2] sm:$0xff] %v394
  %408 = vst [vmem:[%s2 + $0x8] sm:$0xff] %v397
  %409 = vst [vmem:[%s2 + $0x10] sm:$0xff] %v402
  %p410 = scmp.eq.s32.totalorder 0, 0
  // Predicated region
  $region10: #{_lambda_.13} parent=0 // pred_check
    %p411 = pneg %p410
  $region11: #{_lambda_.13} parent=0 // pred_check_branch
    %413 = sbr.rel (%p411) target = $region13
  $region12: #{_lambda_.13} parent=0 // pred_region
    %414 = vst [vmem:[%s3] sm:$0x1] 0.0
    %415 = vst [vmem:[%s4] sm:$0x1] 0.0
  $region13: #{_lambda_.13} parent=0 // pred_fallthru
    _
  %v416 = vld [vmem:[%s3] sm:$0x1]
  %v417 = vadd.f32 %v394, %v397
  %v418 = vadd.f32 %v417, %v402
  %v419 = vrot.slane %v418, 4
  %v420 = vadd.f32 %v418, %v419
  %v421 = vrot.slane %v420, 2
  %v422 = vadd.f32 %v420, %v421
  %v423 = vrot.slane %v422, 1
  %v424 = vadd.f32 %v422, %v423
  %v425 = vadd.f32 %v416, %v424
  %426 = vst [vmem:[%s3] sm:$0x1] %v425
  %v427 = vld [vmem:[%s4] sm:$0x1]
  %v428 = vmul.f32 %v394, %v394
  %v429 = vmul.f32 %v397, %v397
  %v430 = vmul.f32 %v402, %v402
  %v431 = vadd.f32 %v428, %v429
  %v432 = vadd.f32 %v431, %v430
  %v433 = vrot.slane %v432, 4
  %v434 = vadd.f32 %v432, %v433
  %v435 = vrot.slane %v434, 2
  %v436 = vadd.f32 %v434, %v435
  %v437 = vrot.slane %v436, 1
  %v438 = vadd.f32 %v436, %v437
  %v439 = vadd.f32 %v427, %v438
  %440 = vst [vmem:[%s4] sm:$0x1] %v439
  // Predicated region
  $region14: #{_lambda_.13} parent=0 // pred_check
    _
  $region15: #{_lambda_.13} parent=0 // pred_check_branch
    %442 = sbr.rel (0) target = $region17
  $region16: #{_lambda_.13} parent=0 // pred_region
    _
  $region17: #{_lambda_.13} parent=0 // pred_fallthru
    _
  // Predicated region
  $region18: #{_lambda_.13} parent=0 // pred_check
    _
  $region19: #{_lambda_.13} parent=0 // pred_check_branch
    %444 = sbr.rel (0) target = $region21
  $region20: #{_lambda_.13} parent=0 // pred_region
    _
  $region21: #{_lambda_.13} parent=0 // pred_fallthru
    _
  // Predicated region
  $region22: #{_lambda_.13} parent=0 // pred_check
    _
  $region23: #{_lambda_.13} parent=0 // pred_check_branch
    %446 = sbr.rel (0) target = $region25
  $region24: #{_lambda_.13} parent=0 // pred_region
    _
  $region25: #{_lambda_.13} parent=0 // pred_fallthru
    _
  // Predicated region
  $region26: #{_lambda_.13} parent=0 // pred_check
    _
  $region27: #{_lambda_.13} parent=0 // pred_check_branch
    %448 = sbr.rel (0) target = $region29
  $region28: #{_lambda_.13} parent=0 // pred_region
    _
  $region29: #{_lambda_.13} parent=0 // pred_fallthru
    _
  // Predicated region
  $region30: #{_lambda_.13} parent=0 // pred_check
    _
  $region31: #{_lambda_.13} parent=0 // pred_check_branch
    %450 = sbr.rel (0) target = $region33
  $region32: #{_lambda_.13} parent=0 // pred_region
    _
  $region33: #{_lambda_.13} parent=0 // pred_fallthru
    _
  // Predicated region
  $region34: #{_lambda_.13} parent=0 // pred_check
    _
  $region35: #{_lambda_.13} parent=0 // pred_check_branch
    %452 = sbr.rel (0) target = $region37
  $region36: #{_lambda_.13} parent=0 // pred_region
    _
  $region37: #{_lambda_.13} parent=0 // pred_fallthru
    _

// kernel: _lambda_.15
$region0: #{_lambda_.15}
  #allocation0 [shape = 'u32[]', space=smem, size = 0x4, offset = 0x4, fixed_abs, tag = 'smem constant byte address 0x4 - core index']
  #allocation1 [shape = 'u32[144,128]{1,0:T(1,128)}', space=vmem, size = 0x12000, scoped, tag = 'internal scratch']
  %s0 = inlined_call_operand.vmem [shape: bf16[8,1024], index: 0, kind: input, shape index: {}]
  %s1 = inlined_call_operand.vmem [shape: bf16[1024,128], index: 1, kind: input, shape index: {}]
  %s2 = inlined_call_operand.vmem [shape: f32[1,128], index: 2, kind: input, shape index: {}]
  %s3 = inlined_call_operand.vmem [shape: f32[8,128], index: 3, kind: output, shape index: {}]
  %s4 = sld [smem:[#allocation0]]
  $region22: #{_lambda_.15} parent=0
    _
  %s6 = ssub.s32 1, %s4
  %s7 = scalar_select 0, %s6, %s4
  // Predicated region
  $region2: #{_lambda_.15} parent=0 // pred_check
    _
  $region3: #{_lambda_.15} parent=0 // pred_check_branch
    %9 = sbr.rel (0) target = $region5
  $region4: #{_lambda_.15} parent=0 // pred_region
    _
  $region5: #{_lambda_.15} parent=0 // pred_fallthru
    _
  // Predicated region
  $region6: #{_lambda_.15} parent=0 // pred_check
    _
  $region7: #{_lambda_.15} parent=0 // pred_check_branch
    %11 = sbr.rel (0) target = $region9
  $region8: #{_lambda_.15} parent=0 // pred_region
    _
  $region9: #{_lambda_.15} parent=0 // pred_fallthru
    _
  // Predicated region
  $region10: #{_lambda_.15} parent=0 // pred_check
    _
  $region11: #{_lambda_.15} parent=0 // pred_check_branch
    %13 = sbr.rel (0) target = $region13
  $region12: #{_lambda_.15} parent=0 // pred_region
    _
  $region13: #{_lambda_.15} parent=0 // pred_fallthru
    _
  %v15 = vld [vmem:[%s0] sm:$0xff]
  %v16 = vld [vmem:[%s0 + $0x8] sm:$0xff]
  %v17 = vld [vmem:[%s0 + $0x10] sm:$0xff]
  %v18 = vld [vmem:[%s0 + $0x18] sm:$0xff]
  %v19 = vld [vmem:[%s1] sm:$0xf]
  %v20 = vld [vmem:[%s1 + $0x4] sm:$0xf]
  %v21 = vld [vmem:[%s1 + $0x8] sm:$0xf]
  %v22 = vld [vmem:[%s1 + $0xc] sm:$0xf]
  %v23 = vld [vmem:[%s1 + $0x10] sm:$0xf]
  %v24 = vld [vmem:[%s1 + $0x14] sm:$0xf]
  %v25 = vld [vmem:[%s1 + $0x18] sm:$0xf]
  %v26 = vld [vmem:[%s1 + $0x1c] sm:$0xf]
  %v27 = vld [vmem:[%s1 + $0x20] sm:$0xf]
  %v28 = vld [vmem:[%s1 + $0x24] sm:$0xf]
  %v29 = vld [vmem:[%s1 + $0x28] sm:$0xf]
  %v30 = vld [vmem:[%s1 + $0x2c] sm:$0xf]
  %v31 = vld [vmem:[%s1 + $0x30] sm:$0xf]
  %v32 = vld [vmem:[%s1 + $0x34] sm:$0xf]
  %v33 = vld [vmem:[%s1 + $0x38] sm:$0xf]
  %v34 = vld [vmem:[%s1 + $0x3c] sm:$0xf]
  %v35 = vld [vmem:[%s1 + $0x40] sm:$0xf]
  %v36 = vld [vmem:[%s1 + $0x44] sm:$0xf]
  %v37 = vld [vmem:[%s1 + $0x48] sm:$0xf]
  %v38 = vld [vmem:[%s1 + $0x4c] sm:$0xf]
  %v39 = vld [vmem:[%s1 + $0x50] sm:$0xf]
  %v40 = vld [vmem:[%s1 + $0x54] sm:$0xf]
  %v41 = vld [vmem:[%s1 + $0x58] sm:$0xf]
  %v42 = vld [vmem:[%s1 + $0x5c] sm:$0xf]
  %v43 = vld [vmem:[%s1 + $0x60] sm:$0xf]
  %v44 = vld [vmem:[%s1 + $0x64] sm:$0xf]
  %v45 = vld [vmem:[%s1 + $0x68] sm:$0xf]
  %v46 = vld [vmem:[%s1 + $0x6c] sm:$0xf]
  %v47 = vld [vmem:[%s1 + $0x70] sm:$0xf]
  %v48 = vld [vmem:[%s1 + $0x74] sm:$0xf]
  %v49 = vld [vmem:[%s1 + $0x78] sm:$0xf]
  %v50 = vld [vmem:[%s1 + $0x7c] sm:$0xf]
  %v51 = vld [vmem:[%s1 + $0x80] sm:$0xf]
  %v52 = vld [vmem:[%s1 + $0x84] sm:$0xf]
  %v53 = vld [vmem:[%s1 + $0x88] sm:$0xf]
  %v54 = vld [vmem:[%s1 + $0x8c] sm:$0xf]
  %v55 = vld [vmem:[%s1 + $0x90] sm:$0xf]
  %v56 = vld [vmem:[%s1 + $0x94] sm:$0xf]
  %v57 = vld [vmem:[%s1 + $0x98] sm:$0xf]
  %v58 = vld [vmem:[%s1 + $0x9c] sm:$0xf]
  %v59 = vld [vmem:[%s1 + $0xa0] sm:$0xf]
  %v60 = vld [vmem:[%s1 + $0xa4] sm:$0xf]
  %v61 = vld [vmem:[%s1 + $0xa8] sm:$0xf]
  %v62 = vld [vmem:[%s1 + $0xac] sm:$0xf]
  %v63 = vld [vmem:[%s1 + $0xb0] sm:$0xf]
  %v64 = vld [vmem:[%s1 + $0xb4] sm:$0xf]
  %v65 = vld [vmem:[%s1 + $0xb8] sm:$0xf]
  %v66 = vld [vmem:[%s1 + $0xbc] sm:$0xf]
  %v67 = vld [vmem:[%s1 + $0xc0] sm:$0xf]
  %v68 = vld [vmem:[%s1 + $0xc4] sm:$0xf]
  %v69 = vld [vmem:[%s1 + $0xc8] sm:$0xf]
  %v70 = vld [vmem:[%s1 + $0xcc] sm:$0xf]
  %v71 = vld [vmem:[%s1 + $0xd0] sm:$0xf]
  %v72 = vld [vmem:[%s1 + $0xd4] sm:$0xf]
  %v73 = vld [vmem:[%s1 + $0xd8] sm:$0xf]
  %v74 = vld [vmem:[%s1 + $0xdc] sm:$0xf]
  %v75 = vld [vmem:[%s1 + $0xe0] sm:$0xf]
  %v76 = vld [vmem:[%s1 + $0xe4] sm:$0xf]
  %v77 = vld [vmem:[%s1 + $0xe8] sm:$0xf]
  %v78 = vld [vmem:[%s1 + $0xec] sm:$0xf]
  %v79 = vld [vmem:[%s1 + $0xf0] sm:$0xf]
  %v80 = vld [vmem:[%s1 + $0xf4] sm:$0xf]
  %v81 = vld [vmem:[%s1 + $0xf8] sm:$0xf]
  %v82 = vld [vmem:[%s1 + $0xfc] sm:$0xf]
  %v83 = vld [vmem:[%s1 + $0x100] sm:$0xf]
  %v84 = vld [vmem:[%s1 + $0x104] sm:$0xf]
  %v85 = vld [vmem:[%s1 + $0x108] sm:$0xf]
  %v86 = vld [vmem:[%s1 + $0x10c] sm:$0xf]
  %v87 = vld [vmem:[%s1 + $0x110] sm:$0xf]
  %v88 = vld [vmem:[%s1 + $0x114] sm:$0xf]
  %v89 = vld [vmem:[%s1 + $0x118] sm:$0xf]
  %v90 = vld [vmem:[%s1 + $0x11c] sm:$0xf]
  %v91 = vld [vmem:[%s1 + $0x120] sm:$0xf]
  %v92 = vld [vmem:[%s1 + $0x124] sm:$0xf]
  %v93 = vld [vmem:[%s1 + $0x128] sm:$0xf]
  %v94 = vld [vmem:[%s1 + $0x12c] sm:$0xf]
  %v95 = vld [vmem:[%s1 + $0x130] sm:$0xf]
  %v96 = vld [vmem:[%s1 + $0x134] sm:$0xf]
  %v97 = vld [vmem:[%s1 + $0x138] sm:$0xf]
  %v98 = vld [vmem:[%s1 + $0x13c] sm:$0xf]
  %v99 = vld [vmem:[%s1 + $0x140] sm:$0xf]
  %v100 = vld [vmem:[%s1 + $0x144] sm:$0xf]
  %v101 = vld [vmem:[%s1 + $0x148] sm:$0xf]
  %v102 = vld [vmem:[%s1 + $0x14c] sm:$0xf]
  %v103 = vld [vmem:[%s1 + $0x150] sm:$0xf]
  %v104 = vld [vmem:[%s1 + $0x154] sm:$0xf]
  %v105 = vld [vmem:[%s1 + $0x158] sm:$0xf]
  %v106 = vld [vmem:[%s1 + $0x15c] sm:$0xf]
  %v107 = vld [vmem:[%s1 + $0x160] sm:$0xf]
  %v108 = vld [vmem:[%s1 + $0x164] sm:$0xf]
  %v109 = vld [vmem:[%s1 + $0x168] sm:$0xf]
  %v110 = vld [vmem:[%s1 + $0x16c] sm:$0xf]
  %v111 = vld [vmem:[%s1 + $0x170] sm:$0xf]
  %v112 = vld [vmem:[%s1 + $0x174] sm:$0xf]
  %v113 = vld [vmem:[%s1 + $0x178] sm:$0xf]
  %v114 = vld [vmem:[%s1 + $0x17c] sm:$0xf]
  %v115 = vld [vmem:[%s1 + $0x180] sm:$0xf]
  %v116 = vld [vmem:[%s1 + $0x184] sm:$0xf]
  %v117 = vld [vmem:[%s1 + $0x188] sm:$0xf]
  %v118 = vld [vmem:[%s1 + $0x18c] sm:$0xf]
  %v119 = vld [vmem:[%s1 + $0x190] sm:$0xf]
  %v120 = vld [vmem:[%s1 + $0x194] sm:$0xf]
  %v121 = vld [vmem:[%s1 + $0x198] sm:$0xf]
  %v122 = vld [vmem:[%s1 + $0x19c] sm:$0xf]
  %v123 = vld [vmem:[%s1 + $0x1a0] sm:$0xf]
  %v124 = vld [vmem:[%s1 + $0x1a4] sm:$0xf]
  %v125 = vld [vmem:[%s1 + $0x1a8] sm:$0xf]
  %v126 = vld [vmem:[%s1 + $0x1ac] sm:$0xf]
  %v127 = vld [vmem:[%s1 + $0x1b0] sm:$0xf]
  %v128 = vld [vmem:[%s1 + $0x1b4] sm:$0xf]
  %v129 = vld [vmem:[%s1 + $0x1b8] sm:$0xf]
  %v130 = vld [vmem:[%s1 + $0x1bc] sm:$0xf]
  %v131 = vld [vmem:[%s1 + $0x1c0] sm:$0xf]
  %v132 = vld [vmem:[%s1 + $0x1c4] sm:$0xf]
  %v133 = vld [vmem:[%s1 + $0x1c8] sm:$0xf]
  %v134 = vld [vmem:[%s1 + $0x1cc] sm:$0xf]
  %v135 = vld [vmem:[%s1 + $0x1d0] sm:$0xf]
  %v136 = vld [vmem:[%s1 + $0x1d4] sm:$0xf]
  %v137 = vld [vmem:[%s1 + $0x1d8] sm:$0xf]
  %v138 = vld [vmem:[%s1 + $0x1dc] sm:$0xf]
  %v139 = vld [vmem:[%s1 + $0x1e0] sm:$0xf]
  %v140 = vld [vmem:[%s1 + $0x1e4] sm:$0xf]
  %v141 = vld [vmem:[%s1 + $0x1e8] sm:$0xf]
  %v142 = vld [vmem:[%s1 + $0x1ec] sm:$0xf]
  %v143 = vld [vmem:[%s1 + $0x1f0] sm:$0xf]
  %v144 = vld [vmem:[%s1 + $0x1f4] sm:$0xf]
  %v145 = vld [vmem:[%s1 + $0x1f8] sm:$0xf]
  %v146 = vld [vmem:[%s1 + $0x1fc] sm:$0xf]
  %v147 = vld [vmem:[%s2] sm:$0x1]
  %v149 = vlaneseq
  %v150 = vshrl.u32 %v149, 7
  %v151 = vsub.s32 0, %v150
  %v152 = vrot.slane %v147, %v151
  %v158 = vunpack.c.l.b16 %v15
  %v159 = vunpack.c.h.b16 %v15
  %v160 = vunpack.c.l.b16 %v16
  %v161 = vunpack.c.h.b16 %v16
  %v162 = vunpack.c.l.b16 %v17
  %v163 = vunpack.c.h.b16 %v17
  %v164 = vunpack.c.l.b16 %v18
  %v165 = vunpack.c.h.b16 %v18
  %v166 = vpack.c.b16 %v158, %v158
  %v167 = vpack.c.b16 %v159, %v159
  %v168 = vpack.c.b16 %v160, %v160
  %v169 = vpack.c.b16 %v161, %v161
  %v170 = vpack.c.b16 %v162, %v162
  %v171 = vpack.c.b16 %v163, %v163
  %v172 = vpack.c.b16 %v164, %v164
  %v173 = vpack.c.b16 %v165, %v165
  %v310 = vunpack.c.l.b16 %v19
  %v311 = vunpack.c.l.b16 %v20
  %v312 = vunpack.c.l.b16 %v21
  %v313 = vunpack.c.l.b16 %v22
  %v314 = vunpack.c.l.b16 %v23
  %v315 = vunpack.c.l.b16 %v24
  %v316 = vunpack.c.l.b16 %v25
  %v317 = vunpack.c.l.b16 %v26
  %v318 = vunpack.c.l.b16 %v27
  %v319 = vunpack.c.l.b16 %v28
  %v320 = vunpack.c.l.b16 %v29
  %v321 = vunpack.c.l.b16 %v30
  %v322 = vunpack.c.l.b16 %v31
  %v323 = vunpack.c.l.b16 %v32
  %v324 = vunpack.c.l.b16 %v33
  %v325 = vunpack.c.l.b16 %v34
  %v326 = vunpack.c.l.b16 %v35
  %v327 = vunpack.c.l.b16 %v36
  %v328 = vunpack.c.l.b16 %v37
  %v329 = vunpack.c.l.b16 %v38
  %v330 = vunpack.c.l.b16 %v39
  %v331 = vunpack.c.l.b16 %v40
  %v332 = vunpack.c.l.b16 %v41
  %v333 = vunpack.c.l.b16 %v42
  %v334 = vunpack.c.l.b16 %v43
  %v335 = vunpack.c.l.b16 %v44
  %v336 = vunpack.c.l.b16 %v45
  %v337 = vunpack.c.l.b16 %v46
  %v338 = vunpack.c.l.b16 %v47
  %v339 = vunpack.c.l.b16 %v48
  %v340 = vunpack.c.l.b16 %v49
  %v341 = vunpack.c.l.b16 %v50
  %v342 = vunpack.c.l.b16 %v51
  %v343 = vunpack.c.l.b16 %v52
  %v344 = vunpack.c.l.b16 %v53
  %v345 = vunpack.c.l.b16 %v54
  %v346 = vunpack.c.l.b16 %v55
  %v347 = vunpack.c.l.b16 %v56
  %v348 = vunpack.c.l.b16 %v57
  %v349 = vunpack.c.l.b16 %v58
  %v350 = vunpack.c.l.b16 %v59
  %v351 = vunpack.c.l.b16 %v60
  %v352 = vunpack.c.l.b16 %v61
  %v353 = vunpack.c.l.b16 %v62
  %v354 = vunpack.c.l.b16 %v63
  %v355 = vunpack.c.l.b16 %v64
  %v356 = vunpack.c.l.b16 %v65
  %v357 = vunpack.c.l.b16 %v66
  %v358 = vunpack.c.l.b16 %v67
  %v359 = vunpack.c.l.b16 %v68
  %v360 = vunpack.c.l.b16 %v69
  %v361 = vunpack.c.l.b16 %v70
  %v362 = vunpack.c.l.b16 %v71
  %v363 = vunpack.c.l.b16 %v72
  %v364 = vunpack.c.l.b16 %v73
  %v365 = vunpack.c.l.b16 %v74
  %v366 = vunpack.c.l.b16 %v75
  %v367 = vunpack.c.l.b16 %v76
  %v368 = vunpack.c.l.b16 %v77
  %v369 = vunpack.c.l.b16 %v78
  %v370 = vunpack.c.l.b16 %v79
  %v371 = vunpack.c.l.b16 %v80
  %v372 = vunpack.c.l.b16 %v81
  %v373 = vunpack.c.l.b16 %v82
  %v374 = vunpack.c.l.b16 %v83
  %v375 = vunpack.c.l.b16 %v84
  %v376 = vunpack.c.l.b16 %v85
  %v377 = vunpack.c.l.b16 %v86
  %v378 = vunpack.c.l.b16 %v87
  %v379 = vunpack.c.l.b16 %v88
  %v380 = vunpack.c.l.b16 %v89
  %v381 = vunpack.c.l.b16 %v90
  %v382 = vunpack.c.l.b16 %v91
  %v383 = vunpack.c.l.b16 %v92
  %v384 = vunpack.c.l.b16 %v93
  %v385 = vunpack.c.l.b16 %v94
  %v386 = vunpack.c.l.b16 %v95
  %v387 = vunpack.c.l.b16 %v96
  %v388 = vunpack.c.l.b16 %v97
  %v389 = vunpack.c.l.b16 %v98
  %v390 = vunpack.c.l.b16 %v99
  %v391 = vunpack.c.l.b16 %v100
  %v392 = vunpack.c.l.b16 %v101
  %v393 = vunpack.c.l.b16 %v102
  %v394 = vunpack.c.l.b16 %v103
  %v395 = vunpack.c.l.b16 %v104
  %v396 = vunpack.c.l.b16 %v105
  %v397 = vunpack.c.l.b16 %v106
  %v398 = vunpack.c.l.b16 %v107
  %v399 = vunpack.c.l.b16 %v108
  %v400 = vunpack.c.l.b16 %v109
  %v401 = vunpack.c.l.b16 %v110
  %v402 = vunpack.c.l.b16 %v111
  %v403 = vunpack.c.l.b16 %v112
  %v404 = vunpack.c.l.b16 %v113
  %v405 = vunpack.c.l.b16 %v114
  %v406 = vunpack.c.l.b16 %v115
  %v407 = vunpack.c.l.b16 %v116
  %v408 = vunpack.c.l.b16 %v117
  %v409 = vunpack.c.l.b16 %v118
  %v410 = vunpack.c.l.b16 %v119
  %v411 = vunpack.c.l.b16 %v120
  %v412 = vunpack.c.l.b16 %v121
  %v413 = vunpack.c.l.b16 %v122
  %v414 = vunpack.c.l.b16 %v123
  %v415 = vunpack.c.l.b16 %v124
  %v416 = vunpack.c.l.b16 %v125
  %v417 = vunpack.c.l.b16 %v126
  %v418 = vunpack.c.l.b16 %v127
  %v419 = vunpack.c.l.b16 %v128
  %v420 = vunpack.c.l.b16 %v129
  %v421 = vunpack.c.l.b16 %v130
  %v422 = vunpack.c.l.b16 %v131
  %v423 = vunpack.c.l.b16 %v132
  %v424 = vunpack.c.l.b16 %v133
  %v425 = vunpack.c.l.b16 %v134
  %v426 = vunpack.c.l.b16 %v135
  %v427 = vunpack.c.l.b16 %v136
  %v428 = vunpack.c.l.b16 %v137
  %v429 = vunpack.c.l.b16 %v138
  %v430 = vunpack.c.l.b16 %v139
  %v431 = vunpack.c.l.b16 %v140
  %v432 = vunpack.c.l.b16 %v141
  %v433 = vunpack.c.l.b16 %v142
  %v434 = vunpack.c.l.b16 %v143
  %v435 = vunpack.c.l.b16 %v144
  %v436 = vunpack.c.l.b16 %v145
  %v437 = vunpack.c.l.b16 %v146
  %v438 = vpack.c.b16 %v311, %v310
  %v439 = vpack.c.b16 %v313, %v312
  %v440 = vpack.c.b16 %v315, %v314
  %v441 = vpack.c.b16 %v317, %v316
  %v442 = vpack.c.b16 %v319, %v318
  %v443 = vpack.c.b16 %v321, %v320
  %v444 = vpack.c.b16 %v323, %v322
  %v445 = vpack.c.b16 %v325, %v324
  %v446 = vpack.c.b16 %v327, %v326
  %v447 = vpack.c.b16 %v329, %v328
  %v448 = vpack.c.b16 %v331, %v330
  %v449 = vpack.c.b16 %v333, %v332
  %v450 = vpack.c.b16 %v335, %v334
  %v451 = vpack.c.b16 %v337, %v336
  %v452 = vpack.c.b16 %v339, %v338
  %v453 = vpack.c.b16 %v341, %v340
  %v454 = vpack.c.b16 %v343, %v342
  %v455 = vpack.c.b16 %v345, %v344
  %v456 = vpack.c.b16 %v347, %v346
  %v457 = vpack.c.b16 %v349, %v348
  %v458 = vpack.c.b16 %v351, %v350
  %v459 = vpack.c.b16 %v353, %v352
  %v460 = vpack.c.b16 %v355, %v354
  %v461 = vpack.c.b16 %v357, %v356
  %v462 = vpack.c.b16 %v359, %v358
  %v463 = vpack.c.b16 %v361, %v360
  %v464 = vpack.c.b16 %v363, %v362
  %v465 = vpack.c.b16 %v365, %v364
  %v466 = vpack.c.b16 %v367, %v366
  %v467 = vpack.c.b16 %v369, %v368
  %v468 = vpack.c.b16 %v371, %v370
  %v469 = vpack.c.b16 %v373, %v372
  %v470 = vpack.c.b16 %v375, %v374
  %v471 = vpack.c.b16 %v377, %v376
  %v472 = vpack.c.b16 %v379, %v378
  %v473 = vpack.c.b16 %v381, %v380
  %v474 = vpack.c.b16 %v383, %v382
  %v475 = vpack.c.b16 %v385, %v384
  %v476 = vpack.c.b16 %v387, %v386
  %v477 = vpack.c.b16 %v389, %v388
  %v478 = vpack.c.b16 %v391, %v390
  %v479 = vpack.c.b16 %v393, %v392
  %v480 = vpack.c.b16 %v395, %v394
  %v481 = vpack.c.b16 %v397, %v396
  %v482 = vpack.c.b16 %v399, %v398
  %v483 = vpack.c.b16 %v401, %v400
  %v484 = vpack.c.b16 %v403, %v402
  %v485 = vpack.c.b16 %v405, %v404
  %v486 = vpack.c.b16 %v407, %v406
  %v487 = vpack.c.b16 %v409, %v408
  %v488 = vpack.c.b16 %v411, %v410
  %v489 = vpack.c.b16 %v413, %v412
  %v490 = vpack.c.b16 %v415, %v414
  %v491 = vpack.c.b16 %v417, %v416
  %v492 = vpack.c.b16 %v419, %v418
  %v493 = vpack.c.b16 %v421, %v420
  %v494 = vpack.c.b16 %v423, %v422
  %v495 = vpack.c.b16 %v425, %v424
  %v496 = vpack.c.b16 %v427, %v426
  %v497 = vpack.c.b16 %v429, %v428
  %v498 = vpack.c.b16 %v431, %v430
  %v499 = vpack.c.b16 %v433, %v432
  %v500 = vpack.c.b16 %v435, %v434
  %v501 = vpack.c.b16 %v437, %v436
  %566 = vmatprep.subr.bf16.mxu0 0
  %567 = vmatpush1.bf16.msra.mxu0 %v438
  %568 = vmatprep.subr.bf16.mxu0 0
  %569 = vmatpush1.bf16.msra.mxu0 %v439
  %570 = vmatprep.subr.bf16.mxu0 0
  %571 = vmatpush1.bf16.msra.mxu0 %v440
  %572 = vmatprep.subr.bf16.mxu0 0
  %573 = vmatpush1.bf16.msra.mxu0 %v441
  %574 = vmatprep.subr.bf16.mxu0 0
  %575 = vmatpush1.bf16.msra.mxu0 %v442
  %576 = vmatprep.subr.bf16.mxu0 0
  %577 = vmatpush1.bf16.msra.mxu0 %v443
  %578 = vmatprep.subr.bf16.mxu0 0
  %579 = vmatpush1.bf16.msra.mxu0 %v444
  %580 = vmatprep.subr.bf16.mxu0 0
  %581 = vmatpush1.bf16.msra.mxu0 %v445
  %582 = vmatprep.subr.bf16.mxu0 0
  %583 = vmatpush1.bf16.msra.mxu0 %v446
  %584 = vmatprep.subr.bf16.mxu0 0
  %585 = vmatpush1.bf16.msra.mxu0 %v447
  %586 = vmatprep.subr.bf16.mxu0 0
  %587 = vmatpush1.bf16.msra.mxu0 %v448
  %588 = vmatprep.subr.bf16.mxu0 0
  %589 = vmatpush1.bf16.msra.mxu0 %v449
  %590 = vmatprep.subr.bf16.mxu0 0
  %591 = vmatpush1.bf16.msra.mxu0 %v450
  %592 = vmatprep.subr.bf16.mxu0 0
  %593 = vmatpush1.bf16.msra.mxu0 %v451
  %594 = vmatprep.subr.bf16.mxu0 0
  %595 = vmatpush1.bf16.msra.mxu0 %v452
  %596 = vmatprep.subr.bf16.mxu0 0
  %597 = vmatpush1.bf16.msra.mxu0 %v453
  %598 = vmatprep.mubr.bf16.mxu0 %v167
  %599 = vmatmul.mubr.bf16.gmra.mrb[0].mxu0 %v166
  %v600 = vpop.f32.mrb[0].mxu0
  %v601 = vadd.f32 %v152, %v600
  %v602 = vpop.f32.mrb[0].mxu0
  %v603 = vpop.f32.mrb[0].mxu0
  %v604 = vpop.f32.mrb[0].mxu0
  %605 = vdwg.mxu0
  %606 = vmatprep.subr.bf16.mxu0 0
  %607 = vmatpush1.bf16.msra.mxu0 %v454
  %608 = vmatprep.subr.bf16.mxu0 0
  %609 = vmatpush1.bf16.msra.mxu0 %v455
  %610 = vmatprep.subr.bf16.mxu0 0
  %611 = vmatpush1.bf16.msra.mxu0 %v456
  %612 = vmatprep.subr.bf16.mxu0 0
  %613 = vmatpush1.bf16.msra.mxu0 %v457
  %614 = vmatprep.subr.bf16.mxu0 0
  %615 = vmatpush1.bf16.msra.mxu0 %v458
  %616 = vmatprep.subr.bf16.mxu0 0
  %617 = vmatpush1.bf16.msra.mxu0 %v459
  %618 = vmatprep.subr.bf16.mxu0 0
  %619 = vmatpush1.bf16.msra.mxu0 %v460
  %620 = vmatprep.subr.bf16.mxu0 0
  %621 = vmatpush1.bf16.msra.mxu0 %v461
  %622 = vmatprep.subr.bf16.mxu0 0
  %623 = vmatpush1.bf16.msra.mxu0 %v462
  %624 = vmatprep.subr.bf16.mxu0 0
  %625 = vmatpush1.bf16.msra.mxu0 %v463
  %626 = vmatprep.subr.bf16.mxu0 0
  %627 = vmatpush1.bf16.msra.mxu0 %v464
  %628 = vmatprep.subr.bf16.mxu0 0
  %629 = vmatpush1.bf16.msra.mxu0 %v465
  %630 = vmatprep.subr.bf16.mxu0 0
  %631 = vmatpush1.bf16.msra.mxu0 %v466
  %632 = vmatprep.subr.bf16.mxu0 0
  %633 = vmatpush1.bf16.msra.mxu0 %v467
  %634 = vmatprep.subr.bf16.mxu0 0
  %635 = vmatpush1.bf16.msra.mxu0 %v468
  %636 = vmatprep.subr.bf16.mxu0 0
  %637 = vmatpush1.bf16.msra.mxu0 %v469
  %638 = vmatprep.mubr.bf16.mxu0 %v169
  %639 = vmatmul.mubr.bf16.gmra.mrb[0].mxu0 %v168
  %v640 = vpop.f32.mrb[0].mxu0
  %v641 = vadd.f32 %v601, %v640
  %v642 = vpop.f32.mrb[0].mxu0
  %v643 = vpop.f32.mrb[0].mxu0
  %v644 = vpop.f32.mrb[0].mxu0
  %645 = vdwg.mxu0
  %646 = vmatprep.subr.bf16.mxu0 0
  %647 = vmatpush1.bf16.msra.mxu0 %v470
  %648 = vmatprep.subr.bf16.mxu0 0
  %649 = vmatpush1.bf16.msra.mxu0 %v471
  %650 = vmatprep.subr.bf16.mxu0 0
  %651 = vmatpush1.bf16.msra.mxu0 %v472
  %652 = vmatprep.subr.bf16.mxu0 0
  %653 = vmatpush1.bf16.msra.mxu0 %v473
  %654 = vmatprep.subr.bf16.mxu0 0
  %655 = vmatpush1.bf16.msra.mxu0 %v474
  %656 = vmatprep.subr.bf16.mxu0 0
  %657 = vmatpush1.bf16.msra.mxu0 %v475
  %658 = vmatprep.subr.bf16.mxu0 0
  %659 = vmatpush1.bf16.msra.mxu0 %v476
  %660 = vmatprep.subr.bf16.mxu0 0
  %661 = vmatpush1.bf16.msra.mxu0 %v477
  %662 = vmatprep.subr.bf16.mxu0 0
  %663 = vmatpush1.bf16.msra.mxu0 %v478
  %664 = vmatprep.subr.bf16.mxu0 0
  %665 = vmatpush1.bf16.msra.mxu0 %v479
  %666 = vmatprep.subr.bf16.mxu0 0
  %667 = vmatpush1.bf16.msra.mxu0 %v480
  %668 = vmatprep.subr.bf16.mxu0 0
  %669 = vmatpush1.bf16.msra.mxu0 %v481
  %670 = vmatprep.subr.bf16.mxu0 0
  %671 = vmatpush1.bf16.msra.mxu0 %v482
  %672 = vmatprep.subr.bf16.mxu0 0
  %673 = vmatpush1.bf16.msra.mxu0 %v483
  %674 = vmatprep.subr.bf16.mxu0 0
  %675 = vmatpush1.bf16.msra.mxu0 %v484
  %676 = vmatprep.subr.bf16.mxu0 0
  %677 = vmatpush1.bf16.msra.mxu0 %v485
  %678 = vmatprep.mubr.bf16.mxu0 %v171
  %679 = vmatmul.mubr.bf16.gmra.mrb[0].mxu0 %v170
  %v680 = vpop.f32.mrb[0].mxu0
  %v681 = vadd.f32 %v641, %v680
  %v682 = vpop.f32.mrb[0].mxu0
  %v683 = vpop.f32.mrb[0].mxu0
  %v684 = vpop.f32.mrb[0].mxu0
  %685 = vdwg.mxu0
  %686 = vmatprep.subr.bf16.mxu0 0
  %687 = vmatpush1.bf16.msra.mxu0 %v486
  %688 = vmatprep.subr.bf16.mxu0 0
  %689 = vmatpush1.bf16.msra.mxu0 %v487
  %690 = vmatprep.subr.bf16.mxu0 0
  %691 = vmatpush1.bf16.msra.mxu0 %v488
  %692 = vmatprep.subr.bf16.mxu0 0
  %693 = vmatpush1.bf16.msra.mxu0 %v489
  %694 = vmatprep.subr.bf16.mxu0 0
  %695 = vmatpush1.bf16.msra.mxu0 %v490
  %696 = vmatprep.subr.bf16.mxu0 0
  %697 = vmatpush1.bf16.msra.mxu0 %v491
  %698 = vmatprep.subr.bf16.mxu0 0
  %699 = vmatpush1.bf16.msra.mxu0 %v492
  %700 = vmatprep.subr.bf16.mxu0 0
  %701 = vmatpush1.bf16.msra.mxu0 %v493
  %702 = vmatprep.subr.bf16.mxu0 0
  %703 = vmatpush1.bf16.msra.mxu0 %v494
  %704 = vmatprep.subr.bf16.mxu0 0
  %705 = vmatpush1.bf16.msra.mxu0 %v495
  %706 = vmatprep.subr.bf16.mxu0 0
  %707 = vmatpush1.bf16.msra.mxu0 %v496
  %708 = vmatprep.subr.bf16.mxu0 0
  %709 = vmatpush1.bf16.msra.mxu0 %v497
  %710 = vmatprep.subr.bf16.mxu0 0
  %711 = vmatpush1.bf16.msra.mxu0 %v498
  %712 = vmatprep.subr.bf16.mxu0 0
  %713 = vmatpush1.bf16.msra.mxu0 %v499
  %714 = vmatprep.subr.bf16.mxu0 0
  %715 = vmatpush1.bf16.msra.mxu0 %v500
  %716 = vmatprep.subr.bf16.mxu0 0
  %717 = vmatpush1.bf16.msra.mxu0 %v501
  %718 = vmatprep.mubr.bf16.mxu0 %v173
  %719 = vmatmul.mubr.bf16.gmra.mrb[0].mxu0 %v172
  %v720 = vpop.f32.mrb[0].mxu0
  %v721 = vadd.f32 %v681, %v720
  %v722 = vpop.f32.mrb[0].mxu0
  %v723 = vpop.f32.mrb[0].mxu0
  %v724 = vpop.f32.mrb[0].mxu0
  %725 = vdwg.mxu0
  %726 = vst [vmem:[%s3] sm:$0xff] %v721
  // Predicated region
  $region14: #{_lambda_.15} parent=0 // pred_check
    _
  $region15: #{_lambda_.15} parent=0 // pred_check_branch
    %728 = sbr.rel (0) target = $region17
  $region16: #{_lambda_.15} parent=0 // pred_region
    _
  $region17: #{_lambda_.15} parent=0 // pred_fallthru
    _
  // Predicated region
  $region18: #{_lambda_.15} parent=0 // pred_check
    _
  $region19: #{_lambda_.15} parent=0 // pred_check_branch
    %730 = sbr.rel (0) target = $region21
  $region20: #{_lambda_.15} parent=0 // pred_region
    _
  $region21: #{_lambda_.15} parent=0 // pred_fallthru
    _

</llo_original>
